<compile_context>
chip_gen: v6e
topology: v6e:2x2x1
jax: 0.10.0
libtpu: 0.0.40
codegen_flags: <defaults>
</compile_context>

<pallas_src>
import jax
import jax.numpy as jnp
from jax.experimental import pallas as pl
from jax.experimental.pallas import tpu as pltpu

SAMPLE_RATE = 16000
FRAME_SHIFT = 20                                   # ms
DOWNSAMPLE = SAMPLE_RATE * FRAME_SHIFT // 1000     # 320 samples / frame
HIDDEN = 256                                       # synthetic upstream dim (2x128 lanes -> fills 256-wide MXU)
FFN = 4 * HIDDEN                                   # 1024
NUM_LAYERS = 3                                     # -> NUM_LAYERS + 1 hidden states
TILE_M_MAX = 2048                                  # token-tile rows (VMEM-budgeted for v7x)


def _round_up(x, m):
    return (x + m - 1) // m * m


# ----------------------------- fused Pallas kernel -----------------------------

def _make_fused_kernel(n_layers_run: int, weighted: bool):
    """Build a kernel specialized (at trace time) on how many transformer-ish
    blocks to run and whether the featurizer weighted-sum is needed."""

    def kernel(
            fw_ref,        # SMEM (L+1,)                 f32  featurizer weights (softmaxed; unused if not weighted)
            frames_ref,    # VMEM (tile_m, DOWNSAMPLE)   bf16
            pw_ref,        # VMEM (DOWNSAMPLE, HIDDEN)   bf16
            pb_ref,        # VMEM (1, HIDDEN)            f32
            w1_ref,        # VMEM (L_eff, HIDDEN, FFN)   bf16
            b1_ref,        # VMEM (L_eff, 1, FFN)        f32
            w2_ref,        # VMEM (L_eff, FFN, HIDDEN)   bf16
            b2_ref,        # VMEM (L_eff, 1, HIDDEN)     f32
            g_ref,         # VMEM (L_eff, 1, HIDDEN)     f32
            bt_ref,        # VMEM (L_eff, 1, HIDDEN)     f32
            o_ref):        # VMEM (tile_m, HIDDEN)       bf16
        # hidden state 0: frame projection (bf16 MXU operands, f32 accumulation)
        h = jnp.dot(frames_ref[...], pw_ref[...],
                    preferred_element_type=jnp.float32) + pb_ref[...]
        acc = fw_ref[0] * h if weighted else None   # incremental weighted sum

        for l in range(n_layers_run):               # static unroll, static param indexing
            u = jnp.dot(h.astype(jnp.bfloat16), w1_ref[l],
                        preferred_element_type=jnp.float32) + b1_ref[l]
            # TODO(synk): torch.nn.GELU defaults to exact erf GELU; tanh
            # approximation kept for guaranteed Mosaic lowering.
            u = jax.nn.gelu(u)
            v = jnp.dot(u.astype(jnp.bfloat16), w2_ref[l],
                        preferred_element_type=jnp.float32) + b2_ref[l]
            x = h + v
            mean = jnp.mean(x, axis=-1, keepdims=True)
            var = jnp.mean(jnp.square(x - mean), axis=-1, keepdims=True)
            h = (x - mean) * jax.lax.rsqrt(var + 1e-5) * g_ref[l] + bt_ref[l]
            if weighted:
                acc = acc + fw_ref[l + 1] * h

        o_ref[...] = (acc if weighted else h).astype(o_ref.dtype)

    return kernel


# --------------------------- parameter creation ----------------------------

def init_params(key):
    ks = jax.random.split(key, 2 + 4 * NUM_LAYERS)
    proj_w = jax.random.normal(ks[0], (DOWNSAMPLE, HIDDEN), jnp.float32) * 0.02
    proj_b = jax.random.normal(ks[1], (1, HIDDEN), jnp.float32) * 0.02

    w1, b1, w2, b2, g, beta = [], [], [], [], [], []
    for i in range(NUM_LAYERS):
        k0, k1, k2, k3 = ks[2 + 4 * i: 6 + 4 * i]
        w1.append(jax.random.normal(k0, (HIDDEN, FFN), jnp.float32) * 0.02)
        b1.append(jax.random.normal(k1, (1, FFN), jnp.float32) * 0.02)
        w2.append(jax.random.normal(k2, (FFN, HIDDEN), jnp.float32) * 0.02)
        b2.append(jax.random.normal(k3, (1, HIDDEN), jnp.float32) * 0.02)
        g.append(jnp.ones((1, HIDDEN), jnp.float32))
        beta.append(jnp.zeros((1, HIDDEN), jnp.float32))

    return {
        # MXU operands stored bf16 (HBM-boundary cast); everything else f32.
        "proj_w": proj_w.astype(jnp.bfloat16),
        "proj_b": proj_b,
        "w1": jnp.stack(w1).astype(jnp.bfloat16),
        "b1": jnp.stack(b1),
        "w2": jnp.stack(w2).astype(jnp.bfloat16),
        "b2": jnp.stack(b2),
        "g": jnp.stack(g),
        "beta": jnp.stack(beta),
        # s3prl Featurizer initializes layer weights to zeros (uniform softmax)
        "featurizer_w": jnp.zeros((NUM_LAYERS + 1,), jnp.float32),
    }


# ------------------------------ forward pass -------------------------------

def s3prl_frontend_forward(params, wav, wav_lens,
                           multilayer_feature=True, layer=-1):
    """Mirrors S3prlFrontend.forward: returns (feats, feats_lens)."""
    B, S = wav.shape
    T = S // DOWNSAMPLE
    M = B * T
    n_states = NUM_LAYERS + 1

    # -------- static specialization of the layer-selection / featurizer path
    if layer != -1:
        # The reference module asserts multilayer_feature is False in __init__
        # when a layer is specified, and returns feats[layer] directly.
        if multilayer_feature:
            raise ValueError("multilayer_feature must be False if layer is specified")
        if not (0 <= layer < n_states):
            raise ValueError(f"layer must be in [0, {n_states - 1}], got {layer}")
        n_layers_run, weighted = layer, False
    elif multilayer_feature:
        n_layers_run, weighted = NUM_LAYERS, True
    else:
        # featurizer over feats[-1:] == last hidden state
        n_layers_run, weighted = NUM_LAYERS, False
    l_eff = max(n_layers_run, 1)   # keep non-empty leading dim for weight blocks

    # -------- token tiling: >= 2 grid tiles (v7x megacore), rows multiple of 8
    tile_m = min(TILE_M_MAX, _round_up(max(pl.cdiv(M, 2), 8), 8))
    m_pad = _round_up(M, tile_m)

    # waveform -> frames; bf16 at the HBM boundary, NO K-padding (320 = full dim).
    # TODO(synk): real S3PRL frontend keeps the waveform f32; bf16 frames trade
    # a small numeric deviation for half the dominant input DMA.
    frames = wav[:, : T * DOWNSAMPLE].reshape(M, DOWNSAMPLE).astype(jnp.bfloat16)
    if m_pad > M:
        frames = jnp.pad(frames, ((0, m_pad - M), (0, 0)))

    # Featurizer layer weights (softmaxed wrapper-side); dummy when unused.
    if weighted:
        fw = jax.nn.softmax(params["featurizer_w"])
    else:
        fw = jnp.zeros((n_states,), jnp.float32)

    # Only DMA the layer weights that will actually be used.
    w1 = params["w1"][:l_eff]
    b1 = params["b1"][:l_eff]
    w2 = params["w2"][:l_eff]
    b2 = params["b2"][:l_eff]
    g = params["g"][:l_eff]
    beta = params["beta"][:l_eff]

    grid = (m_pad // tile_m,)
    tok_map = lambda i: (i, 0)
    const2 = lambda i: (0, 0)
    const3 = lambda i: (0, 0, 0)

    # Advisory cost estimate so XLA schedules the fused call sensibly.
    flops = m_pad * (2 * DOWNSAMPLE * HIDDEN
                     + n_layers_run * (4 * HIDDEN * FFN + 16 * HIDDEN + 8 * FFN))
    transcendentals = m_pad * n_layers_run * (FFN + 2 * HIDDEN)
    bytes_accessed = (frames.size * 2 + m_pad * HIDDEN * 2
                      + params["proj_w"].size * 2 + params["proj_b"].size * 4
                      + w1.size * 2 + w2.size * 2
                      + (b1.size + b2.size + g.size + beta.size) * 4)

    out = pl.pallas_call(
        _make_fused_kernel(n_layers_run, weighted),
        grid=grid,
        in_specs=[
            pl.BlockSpec(memory_space=pltpu.MemorySpace.SMEM),      # featurizer w
            pl.BlockSpec((tile_m, DOWNSAMPLE), tok_map),            # frames (320 = full dim)
            pl.BlockSpec((DOWNSAMPLE, HIDDEN), const2),             # proj_w
            pl.BlockSpec((1, HIDDEN), const2),                      # proj_b
            pl.BlockSpec((l_eff, HIDDEN, FFN), const3),             # w1
            pl.BlockSpec((l_eff, 1, FFN), const3),                  # b1
            pl.BlockSpec((l_eff, FFN, HIDDEN), const3),             # w2
            pl.BlockSpec((l_eff, 1, HIDDEN), const3),               # b2
            pl.BlockSpec((l_eff, 1, HIDDEN), const3),               # gamma
            pl.BlockSpec((l_eff, 1, HIDDEN), const3),               # beta
        ],
        out_specs=pl.BlockSpec((tile_m, HIDDEN), tok_map),
        out_shape=jax.ShapeDtypeStruct((m_pad, HIDDEN), jnp.bfloat16),
        compiler_params=pltpu.CompilerParams(
            dimension_semantics=("parallel",),
            vmem_limit_bytes=48 * 1024 * 1024),
        cost_estimate=pl.CostEstimate(flops=flops,
                                      transcendentals=transcendentals,
                                      bytes_accessed=bytes_accessed),
    )(fw, frames, params["proj_w"], params["proj_b"],
      w1, b1, w2, b2, g, beta)

    feats = out[:M].reshape(B, T, HIDDEN)
    # TODO(synk): real upstream applies receptive-field/edge handling to lens;
    # simple floor-division matches the synthetic non-overlapping framing.
    feats_lens = (wav_lens // DOWNSAMPLE).astype(jnp.int32)
    return feats, feats_lens


# ---------------------------------- main -----------------------------------

if __name__ == "__main__":
    key = jax.random.PRNGKey(0)
    pkey, wkey = jax.random.split(key)
    params = init_params(pkey)

    B = 2
    T = 8
    S = T * DOWNSAMPLE                               # 2560 samples
    wav = jax.random.normal(wkey, (B, S), jnp.float32)
    wav_lens = jnp.array([S, S - DOWNSAMPLE], jnp.int32)

    # multilayer featurizer path (default)
    feats, feats_lens = s3prl_frontend_forward(params, wav, wav_lens,
                                               multilayer_feature=True,
                                               layer=-1)
    jax.block_until_ready((feats, feats_lens))
    assert feats.shape == (B, T, HIDDEN), feats.shape
    assert feats_lens.shape == (B,), feats_lens.shape
    assert bool(jnp.all(jnp.isfinite(feats.astype(jnp.float32))))

    # specialized single-layer selection path (layer=1 -> only 1 block runs)
    feats1, feats1_lens = s3prl_frontend_forward(params, wav, wav_lens,
                                                 multilayer_feature=False,
                                                 layer=1)
    jax.block_until_ready((feats1, feats1_lens))
    assert feats1.shape == (B, T, HIDDEN), feats1.shape
    assert bool(jnp.all(jnp.isfinite(feats1.astype(jnp.float32))))

    # TODO(synk): real pretrained S3PRL upstream (conv feature extractor +
    # full self-attention stack + checkpoint weights) is replaced by a
    # deterministic synthetic upstream with the same downsample/featurizer
    # semantics.
    print("KERNEL_OK")
</pallas_src>

<mosaic_0001>
module attributes {stable_mosaic.version = 11 : i64} {
  func.func @kernel(%arg0: i32, %arg1: memref<4xf32, #tpu.memory_space<smem>>, %arg2: memref<8x320xbf16, #tpu.memory_space<vmem>>, %arg3: memref<320x256xbf16, #tpu.memory_space<vmem>>, %arg4: memref<1x256xf32, #tpu.memory_space<vmem>>, %arg5: memref<3x256x1024xbf16, #tpu.memory_space<vmem>>, %arg6: memref<3x1x1024xf32, #tpu.memory_space<vmem>>, %arg7: memref<3x1024x256xbf16, #tpu.memory_space<vmem>>, %arg8: memref<3x1x256xf32, #tpu.memory_space<vmem>>, %arg9: memref<3x1x256xf32, #tpu.memory_space<vmem>>, %arg10: memref<3x1x256xf32, #tpu.memory_space<vmem>>, %arg11: memref<8x256xbf16, #tpu.memory_space<vmem>>) attributes {dimension_semantics = [#tpu.dimension_semantics<parallel>], iteration_bounds = array<i64: 2>, scalar_prefetch = 0 : i64, scratch_operands = 0 : i64, tpu.core_type = #tpu.core_type<tc>, window_params = [{transform_indices = @transform_0, window_bounds = array<i64: 4>}, {transform_indices = @transform_1, window_bounds = array<i64: 8, 320>}, {pipeline_mode = #tpu.pipeline_mode<synchronous>, transform_indices = @transform_2, window_bounds = array<i64: 320, 256>}, {pipeline_mode = #tpu.pipeline_mode<synchronous>, transform_indices = @transform_3, window_bounds = array<i64: 1, 256>}, {pipeline_mode = #tpu.pipeline_mode<synchronous>, transform_indices = @transform_4, window_bounds = array<i64: 3, 256, 1024>}, {pipeline_mode = #tpu.pipeline_mode<synchronous>, transform_indices = @transform_5, window_bounds = array<i64: 3, 1, 1024>}, {pipeline_mode = #tpu.pipeline_mode<synchronous>, transform_indices = @transform_6, window_bounds = array<i64: 3, 1024, 256>}, {pipeline_mode = #tpu.pipeline_mode<synchronous>, transform_indices = @transform_7, window_bounds = array<i64: 3, 1, 256>}, {pipeline_mode = #tpu.pipeline_mode<synchronous>, transform_indices = @transform_8, window_bounds = array<i64: 3, 1, 256>}, {pipeline_mode = #tpu.pipeline_mode<synchronous>, transform_indices = @transform_9, window_bounds = array<i64: 3, 1, 256>}, {transform_indices = @transform_10, window_bounds = array<i64: 8, 256>}]} {
    %c0 = arith.constant 0 : index
    %c0_0 = arith.constant 0 : index
    %0 = vector.load %arg2[%c0, %c0_0] : memref<8x320xbf16, #tpu.memory_space<vmem>>, vector<8x320xbf16>
    %c0_1 = arith.constant 0 : index
    %c0_2 = arith.constant 0 : index
    %1 = vector.load %arg3[%c0_1, %c0_2] : memref<320x256xbf16, #tpu.memory_space<vmem>>, vector<320x256xbf16>
    %cst = arith.constant dense<0.000000e+00> : vector<8x256xf32>
    %2 = tpu.matmul %0, %1, %cst {dimension_numbers = #tpu.dot_dimension_numbers<[1], [0], [0], [1], [0, 0, 1, 1], [], []>} : vector<8x320xbf16>, vector<320x256xbf16>, vector<8x256xf32> -> vector<8x256xf32>
    %c0_3 = arith.constant 0 : index
    %c0_4 = arith.constant 0 : index
    %3 = vector.load %arg4[%c0_3, %c0_4] : memref<1x256xf32, #tpu.memory_space<vmem>>, vector<1x256xf32>
    %4 = vector.broadcast %3 : vector<1x256xf32> to vector<8x256xf32>
    %5 = arith.addf %2, %4 : vector<8x256xf32>
    %c0_5 = arith.constant 0 : index
    %6 = memref.load %arg1[%c0_5] : memref<4xf32, #tpu.memory_space<smem>>
    %7 = vector.broadcast %6 : f32 to vector<8x256xf32>
    %8 = arith.mulf %7, %5 : vector<8x256xf32>
    %9 = arith.truncf %5 : vector<8x256xf32> to vector<8x256xbf16>
    %c0_6 = arith.constant 0 : index
    %c0_7 = arith.constant 0 : index
    %c0_8 = arith.constant 0 : index
    %10 = vector.load %arg5[%c0_6, %c0_7, %c0_8] : memref<3x256x1024xbf16, #tpu.memory_space<vmem>>, vector<1x256x1024xbf16>
    %11 = vector.shape_cast %10 : vector<1x256x1024xbf16> to vector<256x1024xbf16>
    %cst_9 = arith.constant dense<0.000000e+00> : vector<8x1024xf32>
    %12 = tpu.matmul %9, %11, %cst_9 {dimension_numbers = #tpu.dot_dimension_numbers<[1], [0], [0], [1], [0, 0, 1, 1], [], []>} : vector<8x256xbf16>, vector<256x1024xbf16>, vector<8x1024xf32> -> vector<8x1024xf32>
    %c0_10 = arith.constant 0 : index
    %c0_11 = arith.constant 0 : index
    %c0_12 = arith.constant 0 : index
    %13 = vector.load %arg6[%c0_10, %c0_11, %c0_12] : memref<3x1x1024xf32, #tpu.memory_space<vmem>>, vector<1x1x1024xf32>
    %14 = vector.shape_cast %13 : vector<1x1x1024xf32> to vector<1x1024xf32>
    %15 = vector.broadcast %14 : vector<1x1024xf32> to vector<8x1024xf32>
    %16 = arith.addf %12, %15 : vector<8x1024xf32>
    %17 = arith.mulf %16, %16 : vector<8x1024xf32>
    %18 = arith.mulf %16, %17 : vector<8x1024xf32>
    %cst_13 = arith.constant 4.471500e-02 : f32
    %19 = vector.broadcast %cst_13 : f32 to vector<8x1024xf32>
    %20 = arith.mulf %19, %18 : vector<8x1024xf32>
    %21 = arith.addf %16, %20 : vector<8x1024xf32>
    %cst_14 = arith.constant 0.797884583 : f32
    %22 = vector.broadcast %cst_14 : f32 to vector<8x1024xf32>
    %23 = arith.mulf %22, %21 : vector<8x1024xf32>
    %24 = math.tanh %23 : vector<8x1024xf32>
    %cst_15 = arith.constant 1.000000e+00 : f32
    %25 = vector.broadcast %cst_15 : f32 to vector<8x1024xf32>
    %26 = arith.addf %25, %24 : vector<8x1024xf32>
    %cst_16 = arith.constant 5.000000e-01 : f32
    %27 = vector.broadcast %cst_16 : f32 to vector<8x1024xf32>
    %28 = arith.mulf %27, %26 : vector<8x1024xf32>
    %29 = arith.mulf %16, %28 : vector<8x1024xf32>
    %30 = arith.truncf %29 : vector<8x1024xf32> to vector<8x1024xbf16>
    %c0_17 = arith.constant 0 : index
    %c0_18 = arith.constant 0 : index
    %c0_19 = arith.constant 0 : index
    %31 = vector.load %arg7[%c0_17, %c0_18, %c0_19] : memref<3x1024x256xbf16, #tpu.memory_space<vmem>>, vector<1x1024x256xbf16>
    %32 = vector.shape_cast %31 : vector<1x1024x256xbf16> to vector<1024x256xbf16>
    %cst_20 = arith.constant dense<0.000000e+00> : vector<8x256xf32>
    %33 = tpu.matmul %30, %32, %cst_20 {dimension_numbers = #tpu.dot_dimension_numbers<[1], [0], [0], [1], [0, 0, 1, 1], [], []>} : vector<8x1024xbf16>, vector<1024x256xbf16>, vector<8x256xf32> -> vector<8x256xf32>
    %c0_21 = arith.constant 0 : index
    %c0_22 = arith.constant 0 : index
    %c0_23 = arith.constant 0 : index
    %34 = vector.load %arg8[%c0_21, %c0_22, %c0_23] : memref<3x1x256xf32, #tpu.memory_space<vmem>>, vector<1x1x256xf32>
    %35 = vector.shape_cast %34 : vector<1x1x256xf32> to vector<1x256xf32>
    %36 = vector.broadcast %35 : vector<1x256xf32> to vector<8x256xf32>
    %37 = arith.addf %33, %36 : vector<8x256xf32>
    %38 = arith.addf %5, %37 : vector<8x256xf32>
    %cst_24 = arith.constant dense<0.000000e+00> : vector<8xf32>
    %39 = vector.multi_reduction <add>, %38, %cst_24 [1] : vector<8x256xf32> to vector<8xf32>
    %40 = vector.shape_cast %39 : vector<8xf32> to vector<8x1xf32>
    %cst_25 = arith.constant 2.560000e+02 : f32
    %41 = vector.broadcast %cst_25 : f32 to vector<8x1xf32>
    %42 = arith.divf %40, %41 : vector<8x1xf32>
    %43 = vector.broadcast %42 : vector<8x1xf32> to vector<8x256xf32>
    %44 = arith.subf %38, %43 : vector<8x256xf32>
    %45 = arith.mulf %44, %44 : vector<8x256xf32>
    %cst_26 = arith.constant dense<0.000000e+00> : vector<8xf32>
    %46 = vector.multi_reduction <add>, %45, %cst_26 [1] : vector<8x256xf32> to vector<8xf32>
    %47 = vector.shape_cast %46 : vector<8xf32> to vector<8x1xf32>
    %cst_27 = arith.constant 2.560000e+02 : f32
    %48 = vector.broadcast %cst_27 : f32 to vector<8x1xf32>
    %49 = arith.divf %47, %48 : vector<8x1xf32>
    %50 = vector.broadcast %42 : vector<8x1xf32> to vector<8x256xf32>
    %51 = arith.subf %38, %50 : vector<8x256xf32>
    %cst_28 = arith.constant 9.99999974E-6 : f32
    %52 = vector.broadcast %cst_28 : f32 to vector<8x1xf32>
    %53 = arith.addf %49, %52 : vector<8x1xf32>
    %54 = math.rsqrt %53 : vector<8x1xf32>
    %55 = vector.broadcast %54 : vector<8x1xf32> to vector<8x256xf32>
    %56 = arith.mulf %51, %55 : vector<8x256xf32>
    %c0_29 = arith.constant 0 : index
    %c0_30 = arith.constant 0 : index
    %c0_31 = arith.constant 0 : index
    %57 = vector.load %arg9[%c0_29, %c0_30, %c0_31] : memref<3x1x256xf32, #tpu.memory_space<vmem>>, vector<1x1x256xf32>
    %58 = vector.shape_cast %57 : vector<1x1x256xf32> to vector<1x256xf32>
    %59 = vector.broadcast %58 : vector<1x256xf32> to vector<8x256xf32>
    %60 = arith.mulf %56, %59 : vector<8x256xf32>
    %c0_32 = arith.constant 0 : index
    %c0_33 = arith.constant 0 : index
    %c0_34 = arith.constant 0 : index
    %61 = vector.load %arg10[%c0_32, %c0_33, %c0_34] : memref<3x1x256xf32, #tpu.memory_space<vmem>>, vector<1x1x256xf32>
    %62 = vector.shape_cast %61 : vector<1x1x256xf32> to vector<1x256xf32>
    %63 = vector.broadcast %62 : vector<1x256xf32> to vector<8x256xf32>
    %64 = arith.addf %60, %63 : vector<8x256xf32>
    %c1 = arith.constant 1 : index
    %65 = memref.load %arg1[%c1] : memref<4xf32, #tpu.memory_space<smem>>
    %66 = vector.broadcast %65 : f32 to vector<8x256xf32>
    %67 = arith.mulf %66, %64 : vector<8x256xf32>
    %68 = arith.addf %8, %67 : vector<8x256xf32>
    %69 = arith.truncf %64 : vector<8x256xf32> to vector<8x256xbf16>
    %c1_35 = arith.constant 1 : index
    %c0_36 = arith.constant 0 : index
    %c0_37 = arith.constant 0 : index
    %70 = vector.load %arg5[%c1_35, %c0_36, %c0_37] : memref<3x256x1024xbf16, #tpu.memory_space<vmem>>, vector<1x256x1024xbf16>
    %71 = vector.shape_cast %70 : vector<1x256x1024xbf16> to vector<256x1024xbf16>
    %cst_38 = arith.constant dense<0.000000e+00> : vector<8x1024xf32>
    %72 = tpu.matmul %69, %71, %cst_38 {dimension_numbers = #tpu.dot_dimension_numbers<[1], [0], [0], [1], [0, 0, 1, 1], [], []>} : vector<8x256xbf16>, vector<256x1024xbf16>, vector<8x1024xf32> -> vector<8x1024xf32>
    %c1_39 = arith.constant 1 : index
    %c0_40 = arith.constant 0 : index
    %c0_41 = arith.constant 0 : index
    %73 = vector.load %arg6[%c1_39, %c0_40, %c0_41] : memref<3x1x1024xf32, #tpu.memory_space<vmem>>, vector<1x1x1024xf32>
    %74 = vector.shape_cast %73 : vector<1x1x1024xf32> to vector<1x1024xf32>
    %75 = vector.broadcast %74 : vector<1x1024xf32> to vector<8x1024xf32>
    %76 = arith.addf %72, %75 : vector<8x1024xf32>
    %77 = arith.mulf %76, %76 : vector<8x1024xf32>
    %78 = arith.mulf %76, %77 : vector<8x1024xf32>
    %cst_42 = arith.constant 4.471500e-02 : f32
    %79 = vector.broadcast %cst_42 : f32 to vector<8x1024xf32>
    %80 = arith.mulf %79, %78 : vector<8x1024xf32>
    %81 = arith.addf %76, %80 : vector<8x1024xf32>
    %cst_43 = arith.constant 0.797884583 : f32
    %82 = vector.broadcast %cst_43 : f32 to vector<8x1024xf32>
    %83 = arith.mulf %82, %81 : vector<8x1024xf32>
    %84 = math.tanh %83 : vector<8x1024xf32>
    %cst_44 = arith.constant 1.000000e+00 : f32
    %85 = vector.broadcast %cst_44 : f32 to vector<8x1024xf32>
    %86 = arith.addf %85, %84 : vector<8x1024xf32>
    %cst_45 = arith.constant 5.000000e-01 : f32
    %87 = vector.broadcast %cst_45 : f32 to vector<8x1024xf32>
    %88 = arith.mulf %87, %86 : vector<8x1024xf32>
    %89 = arith.mulf %76, %88 : vector<8x1024xf32>
    %90 = arith.truncf %89 : vector<8x1024xf32> to vector<8x1024xbf16>
    %c1_46 = arith.constant 1 : index
    %c0_47 = arith.constant 0 : index
    %c0_48 = arith.constant 0 : index
    %91 = vector.load %arg7[%c1_46, %c0_47, %c0_48] : memref<3x1024x256xbf16, #tpu.memory_space<vmem>>, vector<1x1024x256xbf16>
    %92 = vector.shape_cast %91 : vector<1x1024x256xbf16> to vector<1024x256xbf16>
    %cst_49 = arith.constant dense<0.000000e+00> : vector<8x256xf32>
    %93 = tpu.matmul %90, %92, %cst_49 {dimension_numbers = #tpu.dot_dimension_numbers<[1], [0], [0], [1], [0, 0, 1, 1], [], []>} : vector<8x1024xbf16>, vector<1024x256xbf16>, vector<8x256xf32> -> vector<8x256xf32>
    %c1_50 = arith.constant 1 : index
    %c0_51 = arith.constant 0 : index
    %c0_52 = arith.constant 0 : index
    %94 = vector.load %arg8[%c1_50, %c0_51, %c0_52] : memref<3x1x256xf32, #tpu.memory_space<vmem>>, vector<1x1x256xf32>
    %95 = vector.shape_cast %94 : vector<1x1x256xf32> to vector<1x256xf32>
    %96 = vector.broadcast %95 : vector<1x256xf32> to vector<8x256xf32>
    %97 = arith.addf %93, %96 : vector<8x256xf32>
    %98 = arith.addf %64, %97 : vector<8x256xf32>
    %cst_53 = arith.constant dense<0.000000e+00> : vector<8xf32>
    %99 = vector.multi_reduction <add>, %98, %cst_53 [1] : vector<8x256xf32> to vector<8xf32>
    %100 = vector.shape_cast %99 : vector<8xf32> to vector<8x1xf32>
    %cst_54 = arith.constant 2.560000e+02 : f32
    %101 = vector.broadcast %cst_54 : f32 to vector<8x1xf32>
    %102 = arith.divf %100, %101 : vector<8x1xf32>
    %103 = vector.broadcast %102 : vector<8x1xf32> to vector<8x256xf32>
    %104 = arith.subf %98, %103 : vector<8x256xf32>
    %105 = arith.mulf %104, %104 : vector<8x256xf32>
    %cst_55 = arith.constant dense<0.000000e+00> : vector<8xf32>
    %106 = vector.multi_reduction <add>, %105, %cst_55 [1] : vector<8x256xf32> to vector<8xf32>
    %107 = vector.shape_cast %106 : vector<8xf32> to vector<8x1xf32>
    %cst_56 = arith.constant 2.560000e+02 : f32
    %108 = vector.broadcast %cst_56 : f32 to vector<8x1xf32>
    %109 = arith.divf %107, %108 : vector<8x1xf32>
    %110 = vector.broadcast %102 : vector<8x1xf32> to vector<8x256xf32>
    %111 = arith.subf %98, %110 : vector<8x256xf32>
    %cst_57 = arith.constant 9.99999974E-6 : f32
    %112 = vector.broadcast %cst_57 : f32 to vector<8x1xf32>
    %113 = arith.addf %109, %112 : vector<8x1xf32>
    %114 = math.rsqrt %113 : vector<8x1xf32>
    %115 = vector.broadcast %114 : vector<8x1xf32> to vector<8x256xf32>
    %116 = arith.mulf %111, %115 : vector<8x256xf32>
    %c1_58 = arith.constant 1 : index
    %c0_59 = arith.constant 0 : index
    %c0_60 = arith.constant 0 : index
    %117 = vector.load %arg9[%c1_58, %c0_59, %c0_60] : memref<3x1x256xf32, #tpu.memory_space<vmem>>, vector<1x1x256xf32>
    %118 = vector.shape_cast %117 : vector<1x1x256xf32> to vector<1x256xf32>
    %119 = vector.broadcast %118 : vector<1x256xf32> to vector<8x256xf32>
    %120 = arith.mulf %116, %119 : vector<8x256xf32>
    %c1_61 = arith.constant 1 : index
    %c0_62 = arith.constant 0 : index
    %c0_63 = arith.constant 0 : index
    %121 = vector.load %arg10[%c1_61, %c0_62, %c0_63] : memref<3x1x256xf32, #tpu.memory_space<vmem>>, vector<1x1x256xf32>
    %122 = vector.shape_cast %121 : vector<1x1x256xf32> to vector<1x256xf32>
    %123 = vector.broadcast %122 : vector<1x256xf32> to vector<8x256xf32>
    %124 = arith.addf %120, %123 : vector<8x256xf32>
    %c2 = arith.constant 2 : index
    %125 = memref.load %arg1[%c2] : memref<4xf32, #tpu.memory_space<smem>>
    %126 = vector.broadcast %125 : f32 to vector<8x256xf32>
    %127 = arith.mulf %126, %124 : vector<8x256xf32>
    %128 = arith.addf %68, %127 : vector<8x256xf32>
    %129 = arith.truncf %124 : vector<8x256xf32> to vector<8x256xbf16>
    %c2_64 = arith.constant 2 : index
    %c0_65 = arith.constant 0 : index
    %c0_66 = arith.constant 0 : index
    %130 = vector.load %arg5[%c2_64, %c0_65, %c0_66] : memref<3x256x1024xbf16, #tpu.memory_space<vmem>>, vector<1x256x1024xbf16>
    %131 = vector.shape_cast %130 : vector<1x256x1024xbf16> to vector<256x1024xbf16>
    %cst_67 = arith.constant dense<0.000000e+00> : vector<8x1024xf32>
    %132 = tpu.matmul %129, %131, %cst_67 {dimension_numbers = #tpu.dot_dimension_numbers<[1], [0], [0], [1], [0, 0, 1, 1], [], []>} : vector<8x256xbf16>, vector<256x1024xbf16>, vector<8x1024xf32> -> vector<8x1024xf32>
    %c2_68 = arith.constant 2 : index
    %c0_69 = arith.constant 0 : index
    %c0_70 = arith.constant 0 : index
    %133 = vector.load %arg6[%c2_68, %c0_69, %c0_70] : memref<3x1x1024xf32, #tpu.memory_space<vmem>>, vector<1x1x1024xf32>
    %134 = vector.shape_cast %133 : vector<1x1x1024xf32> to vector<1x1024xf32>
    %135 = vector.broadcast %134 : vector<1x1024xf32> to vector<8x1024xf32>
    %136 = arith.addf %132, %135 : vector<8x1024xf32>
    %137 = arith.mulf %136, %136 : vector<8x1024xf32>
    %138 = arith.mulf %136, %137 : vector<8x1024xf32>
    %cst_71 = arith.constant 4.471500e-02 : f32
    %139 = vector.broadcast %cst_71 : f32 to vector<8x1024xf32>
    %140 = arith.mulf %139, %138 : vector<8x1024xf32>
    %141 = arith.addf %136, %140 : vector<8x1024xf32>
    %cst_72 = arith.constant 0.797884583 : f32
    %142 = vector.broadcast %cst_72 : f32 to vector<8x1024xf32>
    %143 = arith.mulf %142, %141 : vector<8x1024xf32>
    %144 = math.tanh %143 : vector<8x1024xf32>
    %cst_73 = arith.constant 1.000000e+00 : f32
    %145 = vector.broadcast %cst_73 : f32 to vector<8x1024xf32>
    %146 = arith.addf %145, %144 : vector<8x1024xf32>
    %cst_74 = arith.constant 5.000000e-01 : f32
    %147 = vector.broadcast %cst_74 : f32 to vector<8x1024xf32>
    %148 = arith.mulf %147, %146 : vector<8x1024xf32>
    %149 = arith.mulf %136, %148 : vector<8x1024xf32>
    %150 = arith.truncf %149 : vector<8x1024xf32> to vector<8x1024xbf16>
    %c2_75 = arith.constant 2 : index
    %c0_76 = arith.constant 0 : index
    %c0_77 = arith.constant 0 : index
    %151 = vector.load %arg7[%c2_75, %c0_76, %c0_77] : memref<3x1024x256xbf16, #tpu.memory_space<vmem>>, vector<1x1024x256xbf16>
    %152 = vector.shape_cast %151 : vector<1x1024x256xbf16> to vector<1024x256xbf16>
    %cst_78 = arith.constant dense<0.000000e+00> : vector<8x256xf32>
    %153 = tpu.matmul %150, %152, %cst_78 {dimension_numbers = #tpu.dot_dimension_numbers<[1], [0], [0], [1], [0, 0, 1, 1], [], []>} : vector<8x1024xbf16>, vector<1024x256xbf16>, vector<8x256xf32> -> vector<8x256xf32>
    %c2_79 = arith.constant 2 : index
    %c0_80 = arith.constant 0 : index
    %c0_81 = arith.constant 0 : index
    %154 = vector.load %arg8[%c2_79, %c0_80, %c0_81] : memref<3x1x256xf32, #tpu.memory_space<vmem>>, vector<1x1x256xf32>
    %155 = vector.shape_cast %154 : vector<1x1x256xf32> to vector<1x256xf32>
    %156 = vector.broadcast %155 : vector<1x256xf32> to vector<8x256xf32>
    %157 = arith.addf %153, %156 : vector<8x256xf32>
    %158 = arith.addf %124, %157 : vector<8x256xf32>
    %cst_82 = arith.constant dense<0.000000e+00> : vector<8xf32>
    %159 = vector.multi_reduction <add>, %158, %cst_82 [1] : vector<8x256xf32> to vector<8xf32>
    %160 = vector.shape_cast %159 : vector<8xf32> to vector<8x1xf32>
    %cst_83 = arith.constant 2.560000e+02 : f32
    %161 = vector.broadcast %cst_83 : f32 to vector<8x1xf32>
    %162 = arith.divf %160, %161 : vector<8x1xf32>
    %163 = vector.broadcast %162 : vector<8x1xf32> to vector<8x256xf32>
    %164 = arith.subf %158, %163 : vector<8x256xf32>
    %165 = arith.mulf %164, %164 : vector<8x256xf32>
    %cst_84 = arith.constant dense<0.000000e+00> : vector<8xf32>
    %166 = vector.multi_reduction <add>, %165, %cst_84 [1] : vector<8x256xf32> to vector<8xf32>
    %167 = vector.shape_cast %166 : vector<8xf32> to vector<8x1xf32>
    %cst_85 = arith.constant 2.560000e+02 : f32
    %168 = vector.broadcast %cst_85 : f32 to vector<8x1xf32>
    %169 = arith.divf %167, %168 : vector<8x1xf32>
    %170 = vector.broadcast %162 : vector<8x1xf32> to vector<8x256xf32>
    %171 = arith.subf %158, %170 : vector<8x256xf32>
    %cst_86 = arith.constant 9.99999974E-6 : f32
    %172 = vector.broadcast %cst_86 : f32 to vector<8x1xf32>
    %173 = arith.addf %169, %172 : vector<8x1xf32>
    %174 = math.rsqrt %173 : vector<8x1xf32>
    %175 = vector.broadcast %174 : vector<8x1xf32> to vector<8x256xf32>
    %176 = arith.mulf %171, %175 : vector<8x256xf32>
    %c2_87 = arith.constant 2 : index
    %c0_88 = arith.constant 0 : index
    %c0_89 = arith.constant 0 : index
    %177 = vector.load %arg9[%c2_87, %c0_88, %c0_89] : memref<3x1x256xf32, #tpu.memory_space<vmem>>, vector<1x1x256xf32>
    %178 = vector.shape_cast %177 : vector<1x1x256xf32> to vector<1x256xf32>
    %179 = vector.broadcast %178 : vector<1x256xf32> to vector<8x256xf32>
    %180 = arith.mulf %176, %179 : vector<8x256xf32>
    %c2_90 = arith.constant 2 : index
    %c0_91 = arith.constant 0 : index
    %c0_92 = arith.constant 0 : index
    %181 = vector.load %arg10[%c2_90, %c0_91, %c0_92] : memref<3x1x256xf32, #tpu.memory_space<vmem>>, vector<1x1x256xf32>
    %182 = vector.shape_cast %181 : vector<1x1x256xf32> to vector<1x256xf32>
    %183 = vector.broadcast %182 : vector<1x256xf32> to vector<8x256xf32>
    %184 = arith.addf %180, %183 : vector<8x256xf32>
    %c3 = arith.constant 3 : index
    %185 = memref.load %arg1[%c3] : memref<4xf32, #tpu.memory_space<smem>>
    %186 = vector.broadcast %185 : f32 to vector<8x256xf32>
    %187 = arith.mulf %186, %184 : vector<8x256xf32>
    %188 = arith.addf %128, %187 : vector<8x256xf32>
    %189 = arith.truncf %188 : vector<8x256xf32> to vector<8x256xbf16>
    %c0_93 = arith.constant 0 : index
    %c0_94 = arith.constant 0 : index
    %190 = vector.load %arg11[%c0_93, %c0_94] : memref<8x256xbf16, #tpu.memory_space<vmem>>, vector<8x256xbf16>
    tpu.vector_store %arg11[%c0_93, %c0_94], %189 {strides = array<i32>} : memref<8x256xbf16, #tpu.memory_space<vmem>>, vector<8x256xbf16>,
    return
  }
  func.func @transform_0(%arg0: i32) -> i32 {
    %c0_i32 = arith.constant 0 : i32
    %c0_i32_0 = arith.constant 0 : i32
    return %c0_i32 : i32
  }
  func.func @transform_1(%arg0: i32) -> (i32, i32) {
    %c0_i32 = arith.constant 0 : i32
    %c0_i32_0 = arith.constant 0 : i32
    return %arg0, %c0_i32 : i32, i32
  }
  func.func @transform_2(%arg0: i32) -> (i32, i32) {
    %c0_i32 = arith.constant 0 : i32
    %c0_i32_0 = arith.constant 0 : i32
    %c0_i32_1 = arith.constant 0 : i32
    return %c0_i32, %c0_i32_0 : i32, i32
  }
  func.func @transform_3(%arg0: i32) -> (i32, i32) {
    %c0_i32 = arith.constant 0 : i32
    %c0_i32_0 = arith.constant 0 : i32
    %c0_i32_1 = arith.constant 0 : i32
    return %c0_i32, %c0_i32_0 : i32, i32
  }
  func.func @transform_4(%arg0: i32) -> (i32, i32, i32) {
    %c0_i32 = arith.constant 0 : i32
    %c0_i32_0 = arith.constant 0 : i32
    %c0_i32_1 = arith.constant 0 : i32
    %c0_i32_2 = arith.constant 0 : i32
    return %c0_i32, %c0_i32_0, %c0_i32_1 : i32, i32, i32
  }
  func.func @transform_5(%arg0: i32) -> (i32, i32, i32) {
    %c0_i32 = arith.constant 0 : i32
    %c0_i32_0 = arith.constant 0 : i32
    %c0_i32_1 = arith.constant 0 : i32
    %c0_i32_2 = arith.constant 0 : i32
    return %c0_i32, %c0_i32_0, %c0_i32_1 : i32, i32, i32
  }
  func.func @transform_6(%arg0: i32) -> (i32, i32, i32) {
    %c0_i32 = arith.constant 0 : i32
    %c0_i32_0 = arith.constant 0 : i32
    %c0_i32_1 = arith.constant 0 : i32
    %c0_i32_2 = arith.constant 0 : i32
    return %c0_i32, %c0_i32_0, %c0_i32_1 : i32, i32, i32
  }
  func.func @transform_7(%arg0: i32) -> (i32, i32, i32) {
    %c0_i32 = arith.constant 0 : i32
    %c0_i32_0 = arith.constant 0 : i32
    %c0_i32_1 = arith.constant 0 : i32
    %c0_i32_2 = arith.constant 0 : i32
    return %c0_i32, %c0_i32_0, %c0_i32_1 : i32, i32, i32
  }
  func.func @transform_8(%arg0: i32) -> (i32, i32, i32) {
    %c0_i32 = arith.constant 0 : i32
    %c0_i32_0 = arith.constant 0 : i32
    %c0_i32_1 = arith.constant 0 : i32
    %c0_i32_2 = arith.constant 0 : i32
    return %c0_i32, %c0_i32_0, %c0_i32_1 : i32, i32, i32
  }
  func.func @transform_9(%arg0: i32) -> (i32, i32, i32) {
    %c0_i32 = arith.constant 0 : i32
    %c0_i32_0 = arith.constant 0 : i32
    %c0_i32_1 = arith.constant 0 : i32
    %c0_i32_2 = arith.constant 0 : i32
    return %c0_i32, %c0_i32_0, %c0_i32_1 : i32, i32, i32
  }
  func.func @transform_10(%arg0: i32) -> (i32, i32) {
    %c0_i32 = arith.constant 0 : i32
    %c0_i32_0 = arith.constant 0 : i32
    return %arg0, %c0_i32 : i32, i32
  }
}

</mosaic_0001>

<llo_original>
// kernel: tpu_custom_call.1
$region0: #{tpu_custom_call.1}
  #allocation0 [shape = 'u32[]', space=smem, size = 0x4, offset = 0x4, fixed_abs, tag = 'smem constant byte address 0x4 - core index']
  #allocation1 [shape = 'u32[144,128]{1,0:T(1,128)}', space=vmem, size = 0x12000, scoped, tag = 'internal scratch']
  %s0 = inlined_call_operand.hbm [shape: f32[4], index: 0, kind: input, shape index: {}]
  %s1 = inlined_call_operand.hbm [shape: bf16[16,320], index: 1, kind: input, shape index: {}]
  %s2 = inlined_call_operand.hbm [shape: bf16[320,256], index: 2, kind: input, shape index: {}]
  %s3 = inlined_call_operand.hbm [shape: f32[1,256], index: 3, kind: input, shape index: {}]
  %s4 = inlined_call_operand.hbm [shape: bf16[3,256,1024], index: 4, kind: input, shape index: {}]
  %s5 = inlined_call_operand.hbm [shape: f32[3,1,1024], index: 5, kind: input, shape index: {}]
  %s6 = inlined_call_operand.hbm [shape: bf16[3,1024,256], index: 6, kind: input, shape index: {}]
  %s7 = inlined_call_operand.hbm [shape: f32[3,1,256], index: 7, kind: input, shape index: {}]
  %s8 = inlined_call_operand.hbm [shape: f32[3,1,256], index: 8, kind: input, shape index: {}]
  %s9 = inlined_call_operand.hbm [shape: f32[3,1,256], index: 9, kind: input, shape index: {}]
  %s10 = inlined_call_operand.hbm [shape: bf16[16,256], index: 10, kind: output, shape index: {}]
  %s11 = sld [smem:[#allocation0]]
  $region113: #{tpu_custom_call.1} parent=0
    _
  %s13 = ssub.s32 1, %s11
  %s14 = scalar_select 0, %s13, %s11
  $region1: #{tpu_custom_call.1} parent=0
    #allocation2 [shape = 'u8[512]{0}', space=smem, size = 0x200, scoped, tag = 'input window, operand 0, single buffered']
    #allocation3 [shape = 's32[2]{0}', space=sflag, size = 0x8, scoped, tag = 'scoped memory for tpu_custom_call.1']
    #allocation4 [shape = 's32[2]{0}', space=sflag, size = 0x8, scoped, tag = 'scoped memory for tpu_custom_call.1']
    #allocation5 [shape = 's32[2]{0}', space=sflag, size = 0x8, scoped, tag = 'scoped memory for tpu_custom_call.1']
    #allocation6 [shape = 'u8[12288]{0}', space=vmem, size = 0x3000, scoped, tag = 'input window, operand 1']
    #allocation7 [shape = 'u8[163840]{0}', space=vmem, size = 0x28000, scoped, tag = 'input window, operand 2, single buffered']
    #allocation8 [shape = 's32[1]{0}', space=sflag, size = 0x4, scoped, tag = 'scoped memory for tpu_custom_call.1']
    #allocation9 [shape = 'u8[1024]{0}', space=vmem, size = 0x400, scoped, tag = 'input window, operand 3, single buffered']
    #allocation10 [shape = 'u8[1572864]{0}', space=vmem, size = 0x180000, scoped, tag = 'input window, operand 4, single buffered']
    #allocation11 [shape = 's32[1]{0}', space=sflag, size = 0x4, scoped, tag = 'scoped memory for tpu_custom_call.1']
    #allocation12 [shape = 'u8[12288]{0}', space=vmem, size = 0x3000, scoped, tag = 'input window, operand 5, single buffered']
    #allocation13 [shape = 'u8[1572864]{0}', space=vmem, size = 0x180000, scoped, tag = 'input window, operand 6, single buffered']
    #allocation14 [shape = 's32[1]{0}', space=sflag, size = 0x4, scoped, tag = 'scoped memory for tpu_custom_call.1']
    #allocation15 [shape = 'u8[3072]{0}', space=vmem, size = 0xc00, scoped, tag = 'input window, operand 7, single buffered']
    #allocation16 [shape = 'u8[3072]{0}', space=vmem, size = 0xc00, scoped, tag = 'input window, operand 8, single buffered']
    #allocation17 [shape = 's32[1]{0}', space=sflag, size = 0x4, scoped, tag = 'scoped memory for tpu_custom_call.1']
    #allocation18 [shape = 'u8[3072]{0}', space=vmem, size = 0xc00, scoped, tag = 'input window, operand 9, single buffered']
    #allocation19 [shape = 'u8[8192]{0}', space=vmem, size = 0x2000, scoped, tag = 'output window, operand 0']
    %15 = vsyncpa [#allocation5], 0
    %16 = vsyncpa [#allocation3], 0
    %s17 = scalar_lea.sflag [#allocation3], 1
    %18 = vsyncpa %s17, 0
    %19 = vsyncpa [#allocation8], 0
    %20 = vsyncpa [#allocation11], 0
    %21 = vsyncpa [#allocation14], 0
    %22 = vsyncpa [#allocation17], 0
    %23 = vsyncpa [#allocation4], 0
    %s24 = scalar_lea.sflag [#allocation4], 1
    %25 = vsyncpa %s24, 0
    loop: start=0, step=1, limit=4
    $region2: #{tpu_custom_call.1} parent=1 // loop_pre_header
      _
    $region3: #{tpu_custom_call.1} parent=1 // loop_header
      %s27 = sphi 0, %s31
      %p28 = scmp.ge.s32.totalorder %s27, 4
      %s35 = sphi 0, %s35
      %s37 = sphi 0, %s35
      %s38 = sphi 0, %s37
      %s52 = sphi 0, %s38
      %s58 = sphi 0, %s60
      %s61 = sphi 0, %s58
      %s62 = sphi 0, %s61
      %s78 = sphi 0, %s62
      %s82 = sphi 0, %s82
      %s84 = sphi 0, %s82
      %s85 = sphi 0, %s84
      %s99 = sphi 0, %s85
      %s103 = sphi 0, %s103
      %s105 = sphi 0, %s103
      %s106 = sphi 0, %s105
      %s120 = sphi 0, %s106
      %s124 = sphi 0, %s124
      %s126 = sphi 0, %s124
      %s127 = sphi 0, %s126
      %s141 = sphi 0, %s127
      %s145 = sphi 0, %s145
      %s147 = sphi 0, %s145
      %s148 = sphi 0, %s147
      %s162 = sphi 0, %s148
      %s166 = sphi 0, %s166
      %s168 = sphi 0, %s166
      %s169 = sphi 0, %s168
      %s183 = sphi 0, %s169
      %s187 = sphi 0, %s187
      %s189 = sphi 0, %s187
      %s190 = sphi 0, %s189
      %s204 = sphi 0, %s190
      %s208 = sphi 0, %s208
      %s210 = sphi 0, %s208
      %s211 = sphi 0, %s210
      %s225 = sphi 0, %s211
      %s229 = sphi 0, %s229
      %s231 = sphi 0, %s229
      %s232 = sphi 0, %s231
      %s246 = sphi 0, %s232
      %s252 = sphi 0, %s254
      %s255 = sphi 0, %s252
      %s256 = sphi 0, %s255
      %s272 = sphi 0, %s256
    $region4: #{tpu_custom_call.1} parent=1 // loop_header_branch
      %30 = sbr.rel (%p28) target = $region8
    $region5: #{tpu_custom_call.1} parent=1 // loop_body
      %s32 = ssub.s32 %s27, 1
      %s33 = ssub.s32 %s27, 2
      %s34 = sadd.s32 %s27, 1
      %s36 = sadd.s32 %s35, 1
      %p39 = scmp.eq.s32.totalorder %s27, 1
      %p40 = scmp.ne.s32.totalorder %s35, %s37
      %p41 = scmp.eq.s32.totalorder %s27, 0
      %p42 = por %p40, %p41
      %p43 = scmp.ne.s32.totalorder %s35, %s37
      %p44 = scmp.eq.s32.totalorder %s32, 1
      %p45 = por %p43, %p44
      %p46 = scmp.ne.s32.totalorder %s37, %s38
      %p47 = scmp.eq.s32.totalorder %s32, 0
      %p48 = por %p46, %p47
      %p49 = scmp.ne.s32.totalorder %s37, %s38
      %p50 = scmp.eq.s32.totalorder %s33, 1
      %p51 = por %p49, %p50
      %p53 = scmp.ne.s32.totalorder %s38, %s52
      %p54 = scmp.eq.s32.totalorder %s33, 0
      %p55 = por %p53, %p54
      %s56 = ssub.s32 %s27, %s34
      %p57 = scmp.eq.s32.totalorder %s56, 0
      %s59 = sadd.s32 %s58, 1
      %s60 = scalar_select %p57, %s58, %s59
      %p63 = pneg %p57
      %p64 = scmp.eq.s32.totalorder %s27, 1
      %p65 = por %p63, %p64
      %p66 = scmp.ne.s32.totalorder %s58, %s61
      %p67 = scmp.eq.s32.totalorder %s27, 0
      %p68 = por %p66, %p67
      %p69 = scmp.ne.s32.totalorder %s58, %s61
      %p70 = scmp.eq.s32.totalorder %s32, 1
      %p71 = por %p69, %p70
      %p72 = scmp.ne.s32.totalorder %s61, %s62
      %p73 = scmp.eq.s32.totalorder %s32, 0
      %p74 = por %p72, %p73
      %p75 = scmp.ne.s32.totalorder %s61, %s62
      %p76 = scmp.eq.s32.totalorder %s33, 1
      %p77 = por %p75, %p76
      %p79 = scmp.ne.s32.totalorder %s62, %s78
      %p80 = scmp.eq.s32.totalorder %s33, 0
      %p81 = por %p79, %p80
      %s83 = sadd.s32 %s82, 1
      %p86 = scmp.eq.s32.totalorder %s27, 1
      %p87 = scmp.ne.s32.totalorder %s82, %s84
      %p88 = scmp.eq.s32.totalorder %s27, 0
      %p89 = por %p87, %p88
      %p90 = scmp.ne.s32.totalorder %s82, %s84
      %p91 = scmp.eq.s32.totalorder %s32, 1
      %p92 = por %p90, %p91
      %p93 = scmp.ne.s32.totalorder %s84, %s85
      %p94 = scmp.eq.s32.totalorder %s32, 0
      %p95 = por %p93, %p94
      %p96 = scmp.ne.s32.totalorder %s84, %s85
      %p97 = scmp.eq.s32.totalorder %s33, 1
      %p98 = por %p96, %p97
      %p100 = scmp.ne.s32.totalorder %s85, %s99
      %p101 = scmp.eq.s32.totalorder %s33, 0
      %p102 = por %p100, %p101
      %s104 = sadd.s32 %s103, 1
      %p107 = scmp.eq.s32.totalorder %s27, 1
      %p108 = scmp.ne.s32.totalorder %s103, %s105
      %p109 = scmp.eq.s32.totalorder %s27, 0
      %p110 = por %p108, %p109
      %p111 = scmp.ne.s32.totalorder %s103, %s105
      %p112 = scmp.eq.s32.totalorder %s32, 1
      %p113 = por %p111, %p112
      %p114 = scmp.ne.s32.totalorder %s105, %s106
      %p115 = scmp.eq.s32.totalorder %s32, 0
      %p116 = por %p114, %p115
      %p117 = scmp.ne.s32.totalorder %s105, %s106
      %p118 = scmp.eq.s32.totalorder %s33, 1
      %p119 = por %p117, %p118
      %p121 = scmp.ne.s32.totalorder %s106, %s120
      %p122 = scmp.eq.s32.totalorder %s33, 0
      %p123 = por %p121, %p122
      %s125 = sadd.s32 %s124, 1
      %p128 = scmp.eq.s32.totalorder %s27, 1
      %p129 = scmp.ne.s32.totalorder %s124, %s126
      %p130 = scmp.eq.s32.totalorder %s27, 0
      %p131 = por %p129, %p130
      %p132 = scmp.ne.s32.totalorder %s124, %s126
      %p133 = scmp.eq.s32.totalorder %s32, 1
      %p134 = por %p132, %p133
      %p135 = scmp.ne.s32.totalorder %s126, %s127
      %p136 = scmp.eq.s32.totalorder %s32, 0
      %p137 = por %p135, %p136
      %p138 = scmp.ne.s32.totalorder %s126, %s127
      %p139 = scmp.eq.s32.totalorder %s33, 1
      %p140 = por %p138, %p139
      %p142 = scmp.ne.s32.totalorder %s127, %s141
      %p143 = scmp.eq.s32.totalorder %s33, 0
      %p144 = por %p142, %p143
      %s146 = sadd.s32 %s145, 1
      %p149 = scmp.eq.s32.totalorder %s27, 1
      %p150 = scmp.ne.s32.totalorder %s145, %s147
      %p151 = scmp.eq.s32.totalorder %s27, 0
      %p152 = por %p150, %p151
      %p153 = scmp.ne.s32.totalorder %s145, %s147
      %p154 = scmp.eq.s32.totalorder %s32, 1
      %p155 = por %p153, %p154
      %p156 = scmp.ne.s32.totalorder %s147, %s148
      %p157 = scmp.eq.s32.totalorder %s32, 0
      %p158 = por %p156, %p157
      %p159 = scmp.ne.s32.totalorder %s147, %s148
      %p160 = scmp.eq.s32.totalorder %s33, 1
      %p161 = por %p159, %p160
      %p163 = scmp.ne.s32.totalorder %s148, %s162
      %p164 = scmp.eq.s32.totalorder %s33, 0
      %p165 = por %p163, %p164
      %s167 = sadd.s32 %s166, 1
      %p170 = scmp.eq.s32.totalorder %s27, 1
      %p171 = scmp.ne.s32.totalorder %s166, %s168
      %p172 = scmp.eq.s32.totalorder %s27, 0
      %p173 = por %p171, %p172
      %p174 = scmp.ne.s32.totalorder %s166, %s168
      %p175 = scmp.eq.s32.totalorder %s32, 1
      %p176 = por %p174, %p175
      %p177 = scmp.ne.s32.totalorder %s168, %s169
      %p178 = scmp.eq.s32.totalorder %s32, 0
      %p179 = por %p177, %p178
      %p180 = scmp.ne.s32.totalorder %s168, %s169
      %p181 = scmp.eq.s32.totalorder %s33, 1
      %p182 = por %p180, %p181
      %p184 = scmp.ne.s32.totalorder %s169, %s183
      %p185 = scmp.eq.s32.totalorder %s33, 0
      %p186 = por %p184, %p185
      %s188 = sadd.s32 %s187, 1
      %p191 = scmp.eq.s32.totalorder %s27, 1
      %p192 = scmp.ne.s32.totalorder %s187, %s189
      %p193 = scmp.eq.s32.totalorder %s27, 0
      %p194 = por %p192, %p193
      %p195 = scmp.ne.s32.totalorder %s187, %s189
      %p196 = scmp.eq.s32.totalorder %s32, 1
      %p197 = por %p195, %p196
      %p198 = scmp.ne.s32.totalorder %s189, %s190
      %p199 = scmp.eq.s32.totalorder %s32, 0
      %p200 = por %p198, %p199
      %p201 = scmp.ne.s32.totalorder %s189, %s190
      %p202 = scmp.eq.s32.totalorder %s33, 1
      %p203 = por %p201, %p202
      %p205 = scmp.ne.s32.totalorder %s190, %s204
      %p206 = scmp.eq.s32.totalorder %s33, 0
      %p207 = por %p205, %p206
      %s209 = sadd.s32 %s208, 1
      %p212 = scmp.eq.s32.totalorder %s27, 1
      %p213 = scmp.ne.s32.totalorder %s208, %s210
      %p214 = scmp.eq.s32.totalorder %s27, 0
      %p215 = por %p213, %p214
      %p216 = scmp.ne.s32.totalorder %s208, %s210
      %p217 = scmp.eq.s32.totalorder %s32, 1
      %p218 = por %p216, %p217
      %p219 = scmp.ne.s32.totalorder %s210, %s211
      %p220 = scmp.eq.s32.totalorder %s32, 0
      %p221 = por %p219, %p220
      %p222 = scmp.ne.s32.totalorder %s210, %s211
      %p223 = scmp.eq.s32.totalorder %s33, 1
      %p224 = por %p222, %p223
      %p226 = scmp.ne.s32.totalorder %s211, %s225
      %p227 = scmp.eq.s32.totalorder %s33, 0
      %p228 = por %p226, %p227
      %s230 = sadd.s32 %s229, 1
      %p233 = scmp.eq.s32.totalorder %s27, 1
      %p234 = scmp.ne.s32.totalorder %s229, %s231
      %p235 = scmp.eq.s32.totalorder %s27, 0
      %p236 = por %p234, %p235
      %p237 = scmp.ne.s32.totalorder %s229, %s231
      %p238 = scmp.eq.s32.totalorder %s32, 1
      %p239 = por %p237, %p238
      %p240 = scmp.ne.s32.totalorder %s231, %s232
      %p241 = scmp.eq.s32.totalorder %s32, 0
      %p242 = por %p240, %p241
      %p243 = scmp.ne.s32.totalorder %s231, %s232
      %p244 = scmp.eq.s32.totalorder %s33, 1
      %p245 = por %p243, %p244
      %p247 = scmp.ne.s32.totalorder %s232, %s246
      %p248 = scmp.eq.s32.totalorder %s33, 0
      %p249 = por %p247, %p248
      %s250 = ssub.s32 %s27, %s34
      %p251 = scmp.eq.s32.totalorder %s250, 0
      %s253 = sadd.s32 %s252, 1
      %s254 = scalar_select %p251, %s252, %s253
      %p257 = pneg %p251
      %p258 = scmp.eq.s32.totalorder %s27, 1
      %p259 = por %p257, %p258
      %p260 = scmp.ne.s32.totalorder %s252, %s255
      %p261 = scmp.eq.s32.totalorder %s27, 0
      %p262 = por %p260, %p261
      %p263 = scmp.ne.s32.totalorder %s252, %s255
      %p264 = scmp.eq.s32.totalorder %s32, 1
      %p265 = por %p263, %p264
      %p266 = scmp.ne.s32.totalorder %s255, %s256
      %p267 = scmp.eq.s32.totalorder %s32, 0
      %p268 = por %p266, %p267
      %p269 = scmp.ne.s32.totalorder %s255, %s256
      %p270 = scmp.eq.s32.totalorder %s33, 1
      %p271 = por %p269, %p270
      %p273 = scmp.ne.s32.totalorder %s256, %s272
      %p274 = scmp.eq.s32.totalorder %s33, 0
      %p275 = por %p273, %p274
      %p276 = scmp.le.s32.totalorder 1, %s27
      %p277 = scmp.lt.s32.totalorder %s27, 3
      %p278 = pnand %p276, %p277
      %p279 = pneg %p278
      // Predicated region
      $region9: #{tpu_custom_call.1} parent=5 // pred_check
        _
      $region10: #{tpu_custom_call.1} parent=5 // pred_check_branch
        %281 = sbr.rel (%p278) target = $region12
      $region11: #{tpu_custom_call.1} parent=5 // pred_region
        %s282 = ssub.s32 %s27, 1
        // Predicated region
        $region13: #{tpu_custom_call.1} parent=11 // pred_check
          %p283 = pneg %p48
        $region14: #{tpu_custom_call.1} parent=11 // pred_check_branch
          %285 = sbr.rel (%p283) target = $region16
        $region15: #{tpu_custom_call.1} parent=11 // pred_region
          %s287 = ssub.s32 16, 16
          %288 = vsyncadd [#allocation5], %s287
          %291 = dma.hbm_to_smem %s0, 16, [#allocation2], [#allocation5]
        $region16: #{tpu_custom_call.1} parent=11 // pred_fallthru
          _
        // Predicated region
        $region17: #{tpu_custom_call.1} parent=11 // pred_check
          %p292 = pneg %p95
        $region18: #{tpu_custom_call.1} parent=11 // pred_check_branch
          %294 = sbr.rel (%p292) target = $region20
        $region19: #{tpu_custom_call.1} parent=11 // pred_region
          %s296 = ssub.s32 5120, 5120
          %297 = vsyncadd [#allocation8], %s296
          %s298 = sshll.u32 [#allocation7], 4
          %s299 = int_to_ptr.vmem [resolvable:$true] %s298
          %304 = dma.hbm_to_vmem [thread:$0]  %s2, 5120, %s299, [#allocation8], 128, 128, 8
        $region20: #{tpu_custom_call.1} parent=11 // pred_fallthru
          _
        // Predicated region
        $region21: #{tpu_custom_call.1} parent=11 // pred_check
          %p305 = pneg %p116
        $region22: #{tpu_custom_call.1} parent=11 // pred_check_branch
          %307 = sbr.rel (%p305) target = $region24
        $region23: #{tpu_custom_call.1} parent=11 // pred_region
          %s309 = ssub.s32 32, 32
          %310 = vsyncadd [#allocation8], %s309
          %s312 = sshll.u32 [#allocation9], 4
          %s313 = int_to_ptr.vmem [resolvable:$true] %s312
          %315 = dma.hbm_to_vmem [thread:$0]  %s3, 32, %s313, [#allocation8]
        $region24: #{tpu_custom_call.1} parent=11 // pred_fallthru
          _
        // Predicated region
        $region25: #{tpu_custom_call.1} parent=11 // pred_check
          %p316 = pneg %p137
        $region26: #{tpu_custom_call.1} parent=11 // pred_check_branch
          %318 = sbr.rel (%p316) target = $region28
        $region27: #{tpu_custom_call.1} parent=11 // pred_region
          %s320 = ssub.s32 49152, 49152
          %321 = vsyncadd [#allocation11], %s320
          %s322 = sshll.u32 [#allocation10], 4
          %s323 = int_to_ptr.vmem [resolvable:$true] %s322
          %328 = dma.hbm_to_vmem [thread:$0]  %s4, 49152, %s323, [#allocation11], 512, 512, 32
        $region28: #{tpu_custom_call.1} parent=11 // pred_fallthru
          _
        // Predicated region
        $region29: #{tpu_custom_call.1} parent=11 // pred_check
          %p329 = pneg %p158
        $region30: #{tpu_custom_call.1} parent=11 // pred_check_branch
          %331 = sbr.rel (%p329) target = $region32
        $region31: #{tpu_custom_call.1} parent=11 // pred_region
          %s333 = ssub.s32 384, 384
          %334 = vsyncadd [#allocation11], %s333
          %s335 = sshll.u32 [#allocation12], 4
          %s336 = int_to_ptr.vmem [resolvable:$true] %s335
          %341 = dma.hbm_to_vmem [thread:$0]  %s5, 384, %s336, [#allocation11], 128, 128, 8
        $region32: #{tpu_custom_call.1} parent=11 // pred_fallthru
          _
        // Predicated region
        $region33: #{tpu_custom_call.1} parent=11 // pred_check
          %p342 = pneg %p179
        $region34: #{tpu_custom_call.1} parent=11 // pred_check_branch
          %344 = sbr.rel (%p342) target = $region36
        $region35: #{tpu_custom_call.1} parent=11 // pred_region
          %s346 = ssub.s32 49152, 49152
          %347 = vsyncadd [#allocation14], %s346
          %s348 = sshll.u32 [#allocation13], 4
          %s349 = int_to_ptr.vmem [resolvable:$true] %s348
          %354 = dma.hbm_to_vmem [thread:$0]  %s6, 49152, %s349, [#allocation14], 128, 128, 8
        $region36: #{tpu_custom_call.1} parent=11 // pred_fallthru
          _
        // Predicated region
        $region37: #{tpu_custom_call.1} parent=11 // pred_check
          %p355 = pneg %p200
        $region38: #{tpu_custom_call.1} parent=11 // pred_check_branch
          %357 = sbr.rel (%p355) target = $region40
        $region39: #{tpu_custom_call.1} parent=11 // pred_region
          %s359 = ssub.s32 96, 96
          %360 = vsyncadd [#allocation14], %s359
          %s361 = sshll.u32 [#allocation15], 4
          %s362 = int_to_ptr.vmem [resolvable:$true] %s361
          %367 = dma.hbm_to_vmem [thread:$0]  %s7, 96, %s362, [#allocation14], 32, 32, 2
        $region40: #{tpu_custom_call.1} parent=11 // pred_fallthru
          _
        // Predicated region
        $region41: #{tpu_custom_call.1} parent=11 // pred_check
          %p368 = pneg %p221
        $region42: #{tpu_custom_call.1} parent=11 // pred_check_branch
          %370 = sbr.rel (%p368) target = $region44
        $region43: #{tpu_custom_call.1} parent=11 // pred_region
          %s372 = ssub.s32 96, 96
          %373 = vsyncadd [#allocation17], %s372
          %s374 = sshll.u32 [#allocation16], 4
          %s375 = int_to_ptr.vmem [resolvable:$true] %s374
          %380 = dma.hbm_to_vmem [thread:$0]  %s8, 96, %s375, [#allocation17], 32, 32, 2
        $region44: #{tpu_custom_call.1} parent=11 // pred_fallthru
          _
        // Predicated region
        $region45: #{tpu_custom_call.1} parent=11 // pred_check
          %p381 = pneg %p242
        $region46: #{tpu_custom_call.1} parent=11 // pred_check_branch
          %383 = sbr.rel (%p381) target = $region48
        $region47: #{tpu_custom_call.1} parent=11 // pred_region
          %s385 = ssub.s32 96, 96
          %386 = vsyncadd [#allocation17], %s385
          %s387 = sshll.u32 [#allocation18], 4
          %s388 = int_to_ptr.vmem [resolvable:$true] %s387
          %393 = dma.hbm_to_vmem [thread:$0]  %s9, 96, %s388, [#allocation17], 32, 32, 2
        $region48: #{tpu_custom_call.1} parent=11 // pred_fallthru
          _
      $region12: #{tpu_custom_call.1} parent=5 // pred_fallthru
        _
      %p394 = scmp.lt.s32.totalorder %s27, 2
      // Predicated region
      $region49: #{tpu_custom_call.1} parent=5 // pred_check
        %p395 = pneg %p394
      $region50: #{tpu_custom_call.1} parent=5 // pred_check_branch
        %397 = sbr.rel (%p395) target = $region52
      $region51: #{tpu_custom_call.1} parent=5 // pred_region
        // Predicated region
        $region53: #{tpu_custom_call.1} parent=51 // pred_check
          %p398 = pneg %p68
        $region54: #{tpu_custom_call.1} parent=51 // pred_check_branch
          %400 = sbr.rel (%p398) target = $region56
        $region55: #{tpu_custom_call.1} parent=51 // pred_region
          %s401 = sand.u32 %s58, 1
          %s402 = scalar_lea.sflag [#allocation3], %s401
          %s403 = sand.u32 %s58, 1
          %s404 = smul.addr %s403, 12
          %s405 = scalar_lea.vmem [#allocation6], %s404
          %s407 = ssub.s32 192, 192
          %408 = vsyncadd %s402, %s407
          %s409 = smul.addr %s27, 3
          %s410 = smul.addr %s409, 64
          %s411 = scalar_lea.hbm %s1, %s410
          %s413 = sshll.u32 %s405, 4
          %s414 = int_to_ptr.vmem [resolvable:$true] %s413
          %416 = dma.hbm_to_vmem [thread:$0]  %s411, 192, %s414, %s402
        $region56: #{tpu_custom_call.1} parent=51 // pred_fallthru
          _
      $region52: #{tpu_custom_call.1} parent=5 // pred_fallthru
        _
      %p417 = scmp.le.s32.totalorder 1, %s27
      %p418 = scmp.lt.s32.totalorder %s27, 3
      %p419 = pnand %p417, %p418
      %p420 = pneg %p419
      // Predicated region
      $region57: #{tpu_custom_call.1} parent=5 // pred_check
        _
      $region58: #{tpu_custom_call.1} parent=5 // pred_check_branch
        %422 = sbr.rel (%p419) target = $region60
      $region59: #{tpu_custom_call.1} parent=5 // pred_region
        %s423 = ssub.s32 %s27, 1
        // Predicated region
        $region61: #{tpu_custom_call.1} parent=59 // pred_check
          %p424 = pneg %p48
        $region62: #{tpu_custom_call.1} parent=59 // pred_check_branch
          %426 = sbr.rel (%p424) target = $region64
        $region63: #{tpu_custom_call.1} parent=59 // pred_region
          %427 = dma.done [#allocation5], 16
        $region64: #{tpu_custom_call.1} parent=59 // pred_fallthru
          _
        %s428 = sand.u32 %s61, 1
        %s429 = scalar_lea.sflag [#allocation3], %s428
        %s430 = sand.u32 %s61, 1
        %s431 = smul.addr %s430, 12
        %s432 = scalar_lea.vmem [#allocation6], %s431
        // Predicated region
        $region65: #{tpu_custom_call.1} parent=59 // pred_check
          %p433 = pneg %p74
        $region66: #{tpu_custom_call.1} parent=59 // pred_check_branch
          %435 = sbr.rel (%p433) target = $region68
        $region67: #{tpu_custom_call.1} parent=59 // pred_region
          %436 = dma.done %s429, 192
        $region68: #{tpu_custom_call.1} parent=59 // pred_fallthru
          _
        // Predicated region
        $region69: #{tpu_custom_call.1} parent=59 // pred_check
          %p437 = pneg %p95
        $region70: #{tpu_custom_call.1} parent=59 // pred_check_branch
          %439 = sbr.rel (%p437) target = $region72
        $region71: #{tpu_custom_call.1} parent=59 // pred_region
          %440 = dma.done [#allocation8], 5120
        $region72: #{tpu_custom_call.1} parent=59 // pred_fallthru
          _
        // Predicated region
        $region73: #{tpu_custom_call.1} parent=59 // pred_check
          %p441 = pneg %p116
        $region74: #{tpu_custom_call.1} parent=59 // pred_check_branch
          %443 = sbr.rel (%p441) target = $region76
        $region75: #{tpu_custom_call.1} parent=59 // pred_region
          %444 = dma.done [#allocation8], 32
        $region76: #{tpu_custom_call.1} parent=59 // pred_fallthru
          _
        // Predicated region
        $region77: #{tpu_custom_call.1} parent=59 // pred_check
          %p445 = pneg %p137
        $region78: #{tpu_custom_call.1} parent=59 // pred_check_branch
          %447 = sbr.rel (%p445) target = $region80
        $region79: #{tpu_custom_call.1} parent=59 // pred_region
          %448 = dma.done [#allocation11], 49152
        $region80: #{tpu_custom_call.1} parent=59 // pred_fallthru
          _
        // Predicated region
        $region81: #{tpu_custom_call.1} parent=59 // pred_check
          %p449 = pneg %p158
        $region82: #{tpu_custom_call.1} parent=59 // pred_check_branch
          %451 = sbr.rel (%p449) target = $region84
        $region83: #{tpu_custom_call.1} parent=59 // pred_region
          %452 = dma.done [#allocation11], 384
        $region84: #{tpu_custom_call.1} parent=59 // pred_fallthru
          _
        // Predicated region
        $region85: #{tpu_custom_call.1} parent=59 // pred_check
          %p453 = pneg %p179
        $region86: #{tpu_custom_call.1} parent=59 // pred_check_branch
          %455 = sbr.rel (%p453) target = $region88
        $region87: #{tpu_custom_call.1} parent=59 // pred_region
          %456 = dma.done [#allocation14], 49152
        $region88: #{tpu_custom_call.1} parent=59 // pred_fallthru
          _
        // Predicated region
        $region89: #{tpu_custom_call.1} parent=59 // pred_check
          %p457 = pneg %p200
        $region90: #{tpu_custom_call.1} parent=59 // pred_check_branch
          %459 = sbr.rel (%p457) target = $region92
        $region91: #{tpu_custom_call.1} parent=59 // pred_region
          %460 = dma.done [#allocation14], 96
        $region92: #{tpu_custom_call.1} parent=59 // pred_fallthru
          _
        // Predicated region
        $region93: #{tpu_custom_call.1} parent=59 // pred_check
          %p461 = pneg %p221
        $region94: #{tpu_custom_call.1} parent=59 // pred_check_branch
          %463 = sbr.rel (%p461) target = $region96
        $region95: #{tpu_custom_call.1} parent=59 // pred_region
          %464 = dma.done [#allocation17], 96
        $region96: #{tpu_custom_call.1} parent=59 // pred_fallthru
          _
        // Predicated region
        $region97: #{tpu_custom_call.1} parent=59 // pred_check
          %p465 = pneg %p242
        $region98: #{tpu_custom_call.1} parent=59 // pred_check_branch
          %467 = sbr.rel (%p465) target = $region100
        $region99: #{tpu_custom_call.1} parent=59 // pred_region
          %468 = dma.done [#allocation17], 96
        $region100: #{tpu_custom_call.1} parent=59 // pred_fallthru
          _
        %469 = sfence
        %p470 = pneg %p48
        %p471 = pneg %p45
        %s472 = sand.u32 %s61, 1
        %s473 = scalar_lea.sflag [#allocation3], %s472
        %s474 = sand.u32 %s61, 1
        %s475 = smul.addr %s474, 12
        %s476 = scalar_lea.vmem [#allocation6], %s475
        %p477 = pneg %p74
        %p478 = pneg %p71
        %p479 = pneg %p95
        %p480 = pneg %p92
        %p481 = pneg %p116
        %p482 = pneg %p113
        %p483 = pneg %p137
        %p484 = pneg %p134
        %p485 = pneg %p158
        %p486 = pneg %p155
        %p487 = pneg %p179
        %p488 = pneg %p176
        %p489 = pneg %p200
        %p490 = pneg %p197
        %p491 = pneg %p221
        %p492 = pneg %p218
        %p493 = pneg %p242
        %p494 = pneg %p239
        %p495 = pneg %p268
        %p496 = pneg %p265
        %s497 = sand.u32 %s255, 1
        %s498 = scalar_lea.sflag [#allocation4], %s497
        %s499 = sand.u32 %s255, 1
        %s500 = smul.addr %s499, 8
        %s501 = scalar_lea.vmem [#allocation19], %s500
        %v503 = vld [vmem:[%s432] sm:$0xff]
        %v504 = vld [vmem:[%s432 + $0x8] sm:$0xf]
        %v505 = vld [vmem:[#allocation7] sm:$0xff]
        %v506 = vld [vmem:[#allocation7 + $0x8] sm:$0xff]
        %v507 = vld [vmem:[#allocation7 + $0x10] sm:$0xff]
        %v508 = vld [vmem:[#allocation7 + $0x18] sm:$0xff]
        %v509 = vld [vmem:[#allocation7 + $0x20] sm:$0xff]
        %v510 = vld [vmem:[#allocation7 + $0x28] sm:$0xff]
        %v511 = vld [vmem:[#allocation7 + $0x30] sm:$0xff]
        %v512 = vld [vmem:[#allocation7 + $0x38] sm:$0xff]
        %v513 = vld [vmem:[#allocation7 + $0x40] sm:$0xff]
        %v514 = vld [vmem:[#allocation7 + $0x48] sm:$0xff]
        %v515 = vld [vmem:[#allocation7 + $0x50] sm:$0xff]
        %v516 = vld [vmem:[#allocation7 + $0x58] sm:$0xff]
        %v517 = vld [vmem:[#allocation7 + $0x60] sm:$0xff]
        %v518 = vld [vmem:[#allocation7 + $0x68] sm:$0xff]
        %v519 = vld [vmem:[#allocation7 + $0x70] sm:$0xff]
        %v520 = vld [vmem:[#allocation7 + $0x78] sm:$0xff]
        %v521 = vld [vmem:[#allocation7 + $0x80] sm:$0xff]
        %v522 = vld [vmem:[#allocation7 + $0x88] sm:$0xff]
        %v523 = vld [vmem:[#allocation7 + $0x90] sm:$0xff]
        %v524 = vld [vmem:[#allocation7 + $0x98] sm:$0xff]
        %v525 = vld [vmem:[#allocation7 + $0xa0] sm:$0xff]
        %v526 = vld [vmem:[#allocation7 + $0xa8] sm:$0xff]
        %v527 = vld [vmem:[#allocation7 + $0xb0] sm:$0xff]
        %v528 = vld [vmem:[#allocation7 + $0xb8] sm:$0xff]
        %v529 = vld [vmem:[#allocation7 + $0xc0] sm:$0xff]
        %v530 = vld [vmem:[#allocation7 + $0xc8] sm:$0xff]
        %v531 = vld [vmem:[#allocation7 + $0xd0] sm:$0xff]
        %v532 = vld [vmem:[#allocation7 + $0xd8] sm:$0xff]
        %v533 = vld [vmem:[#allocation7 + $0xe0] sm:$0xff]
        %v534 = vld [vmem:[#allocation7 + $0xe8] sm:$0xff]
        %v535 = vld [vmem:[#allocation7 + $0xf0] sm:$0xff]
        %v536 = vld [vmem:[#allocation7 + $0xf8] sm:$0xff]
        %v537 = vld [vmem:[#allocation7 + $0x100] sm:$0xff]
        %v538 = vld [vmem:[#allocation7 + $0x108] sm:$0xff]
        %v539 = vld [vmem:[#allocation7 + $0x110] sm:$0xff]
        %v540 = vld [vmem:[#allocation7 + $0x118] sm:$0xff]
        %v541 = vld [vmem:[#allocation7 + $0x120] sm:$0xff]
        %v542 = vld [vmem:[#allocation7 + $0x128] sm:$0xff]
        %v543 = vld [vmem:[#allocation7 + $0x130] sm:$0xff]
        %v544 = vld [vmem:[#allocation7 + $0x138] sm:$0xff]
        %v545 = vld [vmem:[#allocation9] sm:$0x3]
        %v547 = vlaneseq
        %v548 = vshrl.u32 %v547, 7
        %v549 = vsub.s32 0, %v548
        %v550 = vrot.slane %v545, %v549
        %v551 = vlaneseq
        %v552 = vshrl.u32 %v551, 7
        %v553 = vsub.s32 1, %v552
        %v554 = vrot.slane %v545, %v553
        %v559 = vunpack.c.l.b16 %v503
        %v560 = vunpack.c.h.b16 %v503
        %v561 = vunpack.c.l.b16 %v504
        %v562 = vpack.c.b16 %v559, %v559
        %v563 = vpack.c.b16 %v560, %v560
        %v564 = vpack.c.b16 %v561, %v561
        %v607 = vunpack.c.l.b16 %v505
        %v608 = vunpack.c.h.b16 %v505
        %v609 = vunpack.c.l.b16 %v506
        %v610 = vunpack.c.h.b16 %v506
        %v611 = vunpack.c.l.b16 %v507
        %v612 = vunpack.c.h.b16 %v507
        %v613 = vunpack.c.l.b16 %v508
        %v614 = vunpack.c.h.b16 %v508
        %v615 = vunpack.c.l.b16 %v509
        %v616 = vunpack.c.h.b16 %v509
        %v617 = vunpack.c.l.b16 %v510
        %v618 = vunpack.c.h.b16 %v510
        %v619 = vunpack.c.l.b16 %v511
        %v620 = vunpack.c.h.b16 %v511
        %v621 = vunpack.c.l.b16 %v512
        %v622 = vunpack.c.h.b16 %v512
        %v623 = vunpack.c.l.b16 %v513
        %v624 = vunpack.c.h.b16 %v513
        %v625 = vunpack.c.l.b16 %v514
        %v626 = vunpack.c.h.b16 %v514
        %v627 = vunpack.c.l.b16 %v515
        %v628 = vunpack.c.h.b16 %v515
        %v629 = vunpack.c.l.b16 %v516
        %v630 = vunpack.c.h.b16 %v516
        %v631 = vunpack.c.l.b16 %v517
        %v632 = vunpack.c.h.b16 %v517
        %v633 = vunpack.c.l.b16 %v518
        %v634 = vunpack.c.h.b16 %v518
        %v635 = vunpack.c.l.b16 %v519
        %v636 = vunpack.c.h.b16 %v519
        %v637 = vunpack.c.l.b16 %v520
        %v638 = vunpack.c.h.b16 %v520
        %v639 = vunpack.c.l.b16 %v521
        %v640 = vunpack.c.h.b16 %v521
        %v641 = vunpack.c.l.b16 %v522
        %v642 = vunpack.c.h.b16 %v522
        %v643 = vunpack.c.l.b16 %v523
        %v644 = vunpack.c.h.b16 %v523
        %v645 = vunpack.c.l.b16 %v524
        %v646 = vunpack.c.h.b16 %v524
        %v647 = vunpack.c.l.b16 %v525
        %v648 = vunpack.c.h.b16 %v525
        %v649 = vunpack.c.l.b16 %v526
        %v650 = vunpack.c.h.b16 %v526
        %v651 = vunpack.c.l.b16 %v527
        %v652 = vunpack.c.h.b16 %v527
        %v653 = vunpack.c.l.b16 %v528
        %v654 = vunpack.c.h.b16 %v528
        %v655 = vunpack.c.l.b16 %v529
        %v656 = vunpack.c.h.b16 %v529
        %v657 = vunpack.c.l.b16 %v530
        %v658 = vunpack.c.h.b16 %v530
        %v659 = vunpack.c.l.b16 %v531
        %v660 = vunpack.c.h.b16 %v531
        %v661 = vunpack.c.l.b16 %v532
        %v662 = vunpack.c.h.b16 %v532
        %v663 = vunpack.c.l.b16 %v533
        %v664 = vunpack.c.h.b16 %v533
        %v665 = vunpack.c.l.b16 %v534
        %v666 = vunpack.c.h.b16 %v534
        %v667 = vunpack.c.l.b16 %v535
        %v668 = vunpack.c.h.b16 %v535
        %v669 = vunpack.c.l.b16 %v536
        %v670 = vunpack.c.h.b16 %v536
        %v671 = vunpack.c.l.b16 %v537
        %v672 = vunpack.c.h.b16 %v537
        %v673 = vunpack.c.l.b16 %v538
        %v674 = vunpack.c.h.b16 %v538
        %v675 = vunpack.c.l.b16 %v539
        %v676 = vunpack.c.h.b16 %v539
        %v677 = vunpack.c.l.b16 %v540
        %v678 = vunpack.c.h.b16 %v540
        %v679 = vunpack.c.l.b16 %v541
        %v680 = vunpack.c.h.b16 %v541
        %v681 = vunpack.c.l.b16 %v542
        %v682 = vunpack.c.h.b16 %v542
        %v683 = vunpack.c.l.b16 %v543
        %v684 = vunpack.c.h.b16 %v543
        %v685 = vunpack.c.l.b16 %v544
        %v686 = vunpack.c.h.b16 %v544
        %v687 = vpack.c.b16 %v609, %v607
        %v688 = vpack.c.b16 %v610, %v608
        %v689 = vpack.c.b16 %v613, %v611
        %v690 = vpack.c.b16 %v614, %v612
        %v691 = vpack.c.b16 %v617, %v615
        %v692 = vpack.c.b16 %v618, %v616
        %v693 = vpack.c.b16 %v621, %v619
        %v694 = vpack.c.b16 %v622, %v620
        %v695 = vpack.c.b16 %v625, %v623
        %v696 = vpack.c.b16 %v626, %v624
        %v697 = vpack.c.b16 %v629, %v627
        %v698 = vpack.c.b16 %v630, %v628
        %v699 = vpack.c.b16 %v633, %v631
        %v700 = vpack.c.b16 %v634, %v632
        %v701 = vpack.c.b16 %v637, %v635
        %v702 = vpack.c.b16 %v638, %v636
        %v703 = vpack.c.b16 %v641, %v639
        %v704 = vpack.c.b16 %v642, %v640
        %v705 = vpack.c.b16 %v645, %v643
        %v706 = vpack.c.b16 %v646, %v644
        %v707 = vpack.c.b16 %v649, %v647
        %v708 = vpack.c.b16 %v650, %v648
        %v709 = vpack.c.b16 %v653, %v651
        %v710 = vpack.c.b16 %v654, %v652
        %v711 = vpack.c.b16 %v657, %v655
        %v712 = vpack.c.b16 %v658, %v656
        %v713 = vpack.c.b16 %v661, %v659
        %v714 = vpack.c.b16 %v662, %v660
        %v715 = vpack.c.b16 %v665, %v663
        %v716 = vpack.c.b16 %v666, %v664
        %v717 = vpack.c.b16 %v669, %v667
        %v718 = vpack.c.b16 %v670, %v668
        %v719 = vpack.c.b16 %v673, %v671
        %v720 = vpack.c.b16 %v674, %v672
        %v721 = vpack.c.b16 %v677, %v675
        %v722 = vpack.c.b16 %v678, %v676
        %v723 = vpack.c.b16 %v681, %v679
        %v724 = vpack.c.b16 %v682, %v680
        %v725 = vpack.c.b16 %v685, %v683
        %v726 = vpack.c.b16 %v686, %v684
        %vm767 = vcmask 523264
        %v769 = vsel %vm767, %v564, 0
        %771 = vmatprep.subr.bf16.mxu0 %v702
        %772 = vmatpush1.bf16.msra.mxu0 %v701
        %773 = vmatprep.subr.bf16.mxu0 %v700
        %774 = vmatpush1.bf16.msra.mxu0 %v699
        %775 = vmatprep.subr.bf16.mxu0 %v698
        %776 = vmatpush1.bf16.msra.mxu0 %v697
        %777 = vmatprep.subr.bf16.mxu0 %v696
        %778 = vmatpush1.bf16.msra.mxu0 %v695
        %779 = vmatprep.subr.bf16.mxu0 %v694
        %780 = vmatpush1.bf16.msra.mxu0 %v693
        %781 = vmatprep.subr.bf16.mxu0 %v692
        %782 = vmatpush1.bf16.msra.mxu0 %v691
        %783 = vmatprep.subr.bf16.mxu0 %v690
        %784 = vmatpush1.bf16.msra.mxu0 %v689
        %785 = vmatprep.subr.bf16.mxu0 %v688
        %786 = vmatpush1.bf16.msra.mxu0 %v687
        %787 = vmatprep.subr.bf16.mxu0 %v718
        %788 = vmatpush2.bf16.msra.mxu0 %v717
        %789 = vmatprep.subr.bf16.mxu0 %v716
        %790 = vmatpush2.bf16.msra.mxu0 %v715
        %791 = vmatprep.subr.bf16.mxu0 %v714
        %792 = vmatpush2.bf16.msra.mxu0 %v713
        %793 = vmatprep.subr.bf16.mxu0 %v712
        %794 = vmatpush2.bf16.msra.mxu0 %v711
        %795 = vmatprep.subr.bf16.mxu0 %v710
        %796 = vmatpush2.bf16.msra.mxu0 %v709
        %797 = vmatprep.subr.bf16.mxu0 %v708
        %798 = vmatpush2.bf16.msra.mxu0 %v707
        %799 = vmatprep.subr.bf16.mxu0 %v706
        %800 = vmatpush2.bf16.msra.mxu0 %v705
        %801 = vmatprep.subr.bf16.mxu0 %v704
        %802 = vmatpush2.bf16.msra.mxu0 %v703
        %803 = vmatprep.mubr.bf16.mxu0 %v563
        %804 = vmatmul.mubr.bf16.gmra.mxu0 %v562
        %v805 = vpop.f32.mrf.mxu0
        %v806 = vadd.f32 %v550, %v805
        %v807 = vpop.f32.mrf.mxu0
        %v808 = vadd.f32 %v554, %v807
        %v809 = vpop.f32.mrf.mxu0
        %v810 = vpop.f32.mrf.mxu0
        %811 = vdwg.mxu0
        %812 = vmatprep.subr.bf16.mxu0 0
        %813 = vmatpush1.bf16.msra.mxu0 0
        %814 = vmatprep.subr.bf16.mxu0 0
        %815 = vmatpush1.bf16.msra.mxu0 0
        %816 = vmatprep.subr.bf16.mxu0 0
        %817 = vmatpush1.bf16.msra.mxu0 0
        %818 = vmatprep.subr.bf16.mxu0 0
        %819 = vmatpush1.bf16.msra.mxu0 0
        %820 = vmatprep.subr.bf16.mxu0 %v726
        %821 = vmatpush1.bf16.msra.mxu0 %v725
        %822 = vmatprep.subr.bf16.mxu0 %v724
        %823 = vmatpush1.bf16.msra.mxu0 %v723
        %824 = vmatprep.subr.bf16.mxu0 %v722
        %825 = vmatpush1.bf16.msra.mxu0 %v721
        %826 = vmatprep.subr.bf16.mxu0 %v720
        %827 = vmatpush1.bf16.msra.mxu0 %v719
        %828 = vmatprep.subr.bf16.mxu0 0
        %829 = vmatpush2.bf16.msra.mxu0 0
        %830 = vmatprep.subr.bf16.mxu0 0
        %831 = vmatpush2.bf16.msra.mxu0 0
        %832 = vmatprep.subr.bf16.mxu0 0
        %833 = vmatpush2.bf16.msra.mxu0 0
        %834 = vmatprep.subr.bf16.mxu0 0
        %835 = vmatpush2.bf16.msra.mxu0 0
        %836 = vmatprep.subr.bf16.mxu0 0
        %837 = vmatpush2.bf16.msra.mxu0 0
        %838 = vmatprep.subr.bf16.mxu0 0
        %839 = vmatpush2.bf16.msra.mxu0 0
        %840 = vmatprep.subr.bf16.mxu0 0
        %841 = vmatpush2.bf16.msra.mxu0 0
        %842 = vmatprep.subr.bf16.mxu0 0
        %843 = vmatpush2.bf16.msra.mxu0 0
        %844 = vmatprep.mubr.bf16.mxu0 0
        %845 = vmatmul.mubr.bf16.gmra.mxu0 %v769
        %v846 = vpop.f32.mrf.mxu0
        %v847 = vadd.f32 %v806, %v846
        %v848 = vpop.f32.mrf.mxu0
        %v849 = vadd.f32 %v808, %v848
        %v850 = vpop.f32.mrf.mxu0
        %v851 = vpop.f32.mrf.mxu0
        %852 = vdwg.mxu0
        %s853 = sld [smem:[#allocation2]]
        %v854 = vstv %s853
        %v855 = vmul.f32 %v854, %v847
        %v856 = vmul.f32 %v854, %v849
        %v857 = vpack.c.bf16 %v847, %v847
        %v858 = vpack.c.bf16 %v849, %v849
        %v859 = vld [vmem:[#allocation10] sm:$0xff]
        %v860 = vld [vmem:[#allocation10 + $0x8] sm:$0xff]
        %v861 = vld [vmem:[#allocation10 + $0x10] sm:$0xff]
        %v862 = vld [vmem:[#allocation10 + $0x18] sm:$0xff]
        %v863 = vld [vmem:[#allocation10 + $0x20] sm:$0xff]
        %v864 = vld [vmem:[#allocation10 + $0x28] sm:$0xff]
        %v865 = vld [vmem:[#allocation10 + $0x30] sm:$0xff]
        %v866 = vld [vmem:[#allocation10 + $0x38] sm:$0xff]
        %v867 = vld [vmem:[#allocation10 + $0x40] sm:$0xff]
        %v868 = vld [vmem:[#allocation10 + $0x48] sm:$0xff]
        %v869 = vld [vmem:[#allocation10 + $0x50] sm:$0xff]
        %v870 = vld [vmem:[#allocation10 + $0x58] sm:$0xff]
        %v871 = vld [vmem:[#allocation10 + $0x60] sm:$0xff]
        %v872 = vld [vmem:[#allocation10 + $0x68] sm:$0xff]
        %v873 = vld [vmem:[#allocation10 + $0x70] sm:$0xff]
        %v874 = vld [vmem:[#allocation10 + $0x78] sm:$0xff]
        %v875 = vld [vmem:[#allocation10 + $0x80] sm:$0xff]
        %v876 = vld [vmem:[#allocation10 + $0x88] sm:$0xff]
        %v877 = vld [vmem:[#allocation10 + $0x90] sm:$0xff]
        %v878 = vld [vmem:[#allocation10 + $0x98] sm:$0xff]
        %v879 = vld [vmem:[#allocation10 + $0xa0] sm:$0xff]
        %v880 = vld [vmem:[#allocation10 + $0xa8] sm:$0xff]
        %v881 = vld [vmem:[#allocation10 + $0xb0] sm:$0xff]
        %v882 = vld [vmem:[#allocation10 + $0xb8] sm:$0xff]
        %v883 = vld [vmem:[#allocation10 + $0xc0] sm:$0xff]
        %v884 = vld [vmem:[#allocation10 + $0xc8] sm:$0xff]
        %v885 = vld [vmem:[#allocation10 + $0xd0] sm:$0xff]
        %v886 = vld [vmem:[#allocation10 + $0xd8] sm:$0xff]
        %v887 = vld [vmem:[#allocation10 + $0xe0] sm:$0xff]
        %v888 = vld [vmem:[#allocation10 + $0xe8] sm:$0xff]
        %v889 = vld [vmem:[#allocation10 + $0xf0] sm:$0xff]
        %v890 = vld [vmem:[#allocation10 + $0xf8] sm:$0xff]
        %v891 = vld [vmem:[#allocation10 + $0x100] sm:$0xff]
        %v892 = vld [vmem:[#allocation10 + $0x108] sm:$0xff]
        %v893 = vld [vmem:[#allocation10 + $0x110] sm:$0xff]
        %v894 = vld [vmem:[#allocation10 + $0x118] sm:$0xff]
        %v895 = vld [vmem:[#allocation10 + $0x120] sm:$0xff]
        %v896 = vld [vmem:[#allocation10 + $0x128] sm:$0xff]
        %v897 = vld [vmem:[#allocation10 + $0x130] sm:$0xff]
        %v898 = vld [vmem:[#allocation10 + $0x138] sm:$0xff]
        %v899 = vld [vmem:[#allocation10 + $0x140] sm:$0xff]
        %v900 = vld [vmem:[#allocation10 + $0x148] sm:$0xff]
        %v901 = vld [vmem:[#allocation10 + $0x150] sm:$0xff]
        %v902 = vld [vmem:[#allocation10 + $0x158] sm:$0xff]
        %v903 = vld [vmem:[#allocation10 + $0x160] sm:$0xff]
        %v904 = vld [vmem:[#allocation10 + $0x168] sm:$0xff]
        %v905 = vld [vmem:[#allocation10 + $0x170] sm:$0xff]
        %v906 = vld [vmem:[#allocation10 + $0x178] sm:$0xff]
        %v907 = vld [vmem:[#allocation10 + $0x180] sm:$0xff]
        %v908 = vld [vmem:[#allocation10 + $0x188] sm:$0xff]
        %v909 = vld [vmem:[#allocation10 + $0x190] sm:$0xff]
        %v910 = vld [vmem:[#allocation10 + $0x198] sm:$0xff]
        %v911 = vld [vmem:[#allocation10 + $0x1a0] sm:$0xff]
        %v912 = vld [vmem:[#allocation10 + $0x1a8] sm:$0xff]
        %v913 = vld [vmem:[#allocation10 + $0x1b0] sm:$0xff]
        %v914 = vld [vmem:[#allocation10 + $0x1b8] sm:$0xff]
        %v915 = vld [vmem:[#allocation10 + $0x1c0] sm:$0xff]
        %v916 = vld [vmem:[#allocation10 + $0x1c8] sm:$0xff]
        %v917 = vld [vmem:[#allocation10 + $0x1d0] sm:$0xff]
        %v918 = vld [vmem:[#allocation10 + $0x1d8] sm:$0xff]
        %v919 = vld [vmem:[#allocation10 + $0x1e0] sm:$0xff]
        %v920 = vld [vmem:[#allocation10 + $0x1e8] sm:$0xff]
        %v921 = vld [vmem:[#allocation10 + $0x1f0] sm:$0xff]
        %v922 = vld [vmem:[#allocation10 + $0x1f8] sm:$0xff]
        %v923 = vld [vmem:[#allocation10 + $0x200] sm:$0xff]
        %v924 = vld [vmem:[#allocation10 + $0x208] sm:$0xff]
        %v925 = vld [vmem:[#allocation10 + $0x210] sm:$0xff]
        %v926 = vld [vmem:[#allocation10 + $0x218] sm:$0xff]
        %v927 = vld [vmem:[#allocation10 + $0x220] sm:$0xff]
        %v928 = vld [vmem:[#allocation10 + $0x228] sm:$0xff]
        %v929 = vld [vmem:[#allocation10 + $0x230] sm:$0xff]
        %v930 = vld [vmem:[#allocation10 + $0x238] sm:$0xff]
        %v931 = vld [vmem:[#allocation10 + $0x240] sm:$0xff]
        %v932 = vld [vmem:[#allocation10 + $0x248] sm:$0xff]
        %v933 = vld [vmem:[#allocation10 + $0x250] sm:$0xff]
        %v934 = vld [vmem:[#allocation10 + $0x258] sm:$0xff]
        %v935 = vld [vmem:[#allocation10 + $0x260] sm:$0xff]
        %v936 = vld [vmem:[#allocation10 + $0x268] sm:$0xff]
        %v937 = vld [vmem:[#allocation10 + $0x270] sm:$0xff]
        %v938 = vld [vmem:[#allocation10 + $0x278] sm:$0xff]
        %v939 = vld [vmem:[#allocation10 + $0x280] sm:$0xff]
        %v940 = vld [vmem:[#allocation10 + $0x288] sm:$0xff]
        %v941 = vld [vmem:[#allocation10 + $0x290] sm:$0xff]
        %v942 = vld [vmem:[#allocation10 + $0x298] sm:$0xff]
        %v943 = vld [vmem:[#allocation10 + $0x2a0] sm:$0xff]
        %v944 = vld [vmem:[#allocation10 + $0x2a8] sm:$0xff]
        %v945 = vld [vmem:[#allocation10 + $0x2b0] sm:$0xff]
        %v946 = vld [vmem:[#allocation10 + $0x2b8] sm:$0xff]
        %v947 = vld [vmem:[#allocation10 + $0x2c0] sm:$0xff]
        %v948 = vld [vmem:[#allocation10 + $0x2c8] sm:$0xff]
        %v949 = vld [vmem:[#allocation10 + $0x2d0] sm:$0xff]
        %v950 = vld [vmem:[#allocation10 + $0x2d8] sm:$0xff]
        %v951 = vld [vmem:[#allocation10 + $0x2e0] sm:$0xff]
        %v952 = vld [vmem:[#allocation10 + $0x2e8] sm:$0xff]
        %v953 = vld [vmem:[#allocation10 + $0x2f0] sm:$0xff]
        %v954 = vld [vmem:[#allocation10 + $0x2f8] sm:$0xff]
        %v955 = vld [vmem:[#allocation10 + $0x300] sm:$0xff]
        %v956 = vld [vmem:[#allocation10 + $0x308] sm:$0xff]
        %v957 = vld [vmem:[#allocation10 + $0x310] sm:$0xff]
        %v958 = vld [vmem:[#allocation10 + $0x318] sm:$0xff]
        %v959 = vld [vmem:[#allocation10 + $0x320] sm:$0xff]
        %v960 = vld [vmem:[#allocation10 + $0x328] sm:$0xff]
        %v961 = vld [vmem:[#allocation10 + $0x330] sm:$0xff]
        %v962 = vld [vmem:[#allocation10 + $0x338] sm:$0xff]
        %v963 = vld [vmem:[#allocation10 + $0x340] sm:$0xff]
        %v964 = vld [vmem:[#allocation10 + $0x348] sm:$0xff]
        %v965 = vld [vmem:[#allocation10 + $0x350] sm:$0xff]
        %v966 = vld [vmem:[#allocation10 + $0x358] sm:$0xff]
        %v967 = vld [vmem:[#allocation10 + $0x360] sm:$0xff]
        %v968 = vld [vmem:[#allocation10 + $0x368] sm:$0xff]
        %v969 = vld [vmem:[#allocation10 + $0x370] sm:$0xff]
        %v970 = vld [vmem:[#allocation10 + $0x378] sm:$0xff]
        %v971 = vld [vmem:[#allocation10 + $0x380] sm:$0xff]
        %v972 = vld [vmem:[#allocation10 + $0x388] sm:$0xff]
        %v973 = vld [vmem:[#allocation10 + $0x390] sm:$0xff]
        %v974 = vld [vmem:[#allocation10 + $0x398] sm:$0xff]
        %v975 = vld [vmem:[#allocation10 + $0x3a0] sm:$0xff]
        %v976 = vld [vmem:[#allocation10 + $0x3a8] sm:$0xff]
        %v977 = vld [vmem:[#allocation10 + $0x3b0] sm:$0xff]
        %v978 = vld [vmem:[#allocation10 + $0x3b8] sm:$0xff]
        %v979 = vld [vmem:[#allocation10 + $0x3c0] sm:$0xff]
        %v980 = vld [vmem:[#allocation10 + $0x3c8] sm:$0xff]
        %v981 = vld [vmem:[#allocation10 + $0x3d0] sm:$0xff]
        %v982 = vld [vmem:[#allocation10 + $0x3d8] sm:$0xff]
        %v983 = vld [vmem:[#allocation10 + $0x3e0] sm:$0xff]
        %v984 = vld [vmem:[#allocation10 + $0x3e8] sm:$0xff]
        %v985 = vld [vmem:[#allocation10 + $0x3f0] sm:$0xff]
        %v986 = vld [vmem:[#allocation10 + $0x3f8] sm:$0xff]
        %v987 = vld [vmem:[#allocation12] sm:$0xff]
        %v989 = vlaneseq
        %v990 = vshrl.u32 %v989, 7
        %v991 = vsub.s32 0, %v990
        %v992 = vrot.slane %v987, %v991
        %v993 = vlaneseq
        %v994 = vshrl.u32 %v993, 7
        %v995 = vsub.s32 1, %v994
        %v996 = vrot.slane %v987, %v995
        %v997 = vlaneseq
        %v998 = vshrl.u32 %v997, 7
        %v999 = vsub.s32 2, %v998
        %v1000 = vrot.slane %v987, %v999
        %v1001 = vlaneseq
        %v1002 = vshrl.u32 %v1001, 7
        %v1003 = vsub.s32 3, %v1002
        %v1004 = vrot.slane %v987, %v1003
        %v1005 = vlaneseq
        %v1006 = vshrl.u32 %v1005, 7
        %v1007 = vsub.s32 4, %v1006
        %v1008 = vrot.slane %v987, %v1007
        %v1009 = vlaneseq
        %v1010 = vshrl.u32 %v1009, 7
        %v1011 = vsub.s32 5, %v1010
        %v1012 = vrot.slane %v987, %v1011
        %v1013 = vlaneseq
        %v1014 = vshrl.u32 %v1013, 7
        %v1015 = vsub.s32 6, %v1014
        %v1016 = vrot.slane %v987, %v1015
        %v1017 = vlaneseq
        %v1018 = vshrl.u32 %v1017, 7
        %v1019 = vsub.s32 7, %v1018
        %v1020 = vrot.slane %v987, %v1019
        %v1157 = vunpack.c.l.b16 %v859
        %v1158 = vunpack.c.h.b16 %v859
        %v1159 = vunpack.c.l.b16 %v860
        %v1160 = vunpack.c.h.b16 %v860
        %v1161 = vunpack.c.l.b16 %v861
        %v1162 = vunpack.c.h.b16 %v861
        %v1163 = vunpack.c.l.b16 %v862
        %v1164 = vunpack.c.h.b16 %v862
        %v1165 = vunpack.c.l.b16 %v863
        %v1166 = vunpack.c.h.b16 %v863
        %v1167 = vunpack.c.l.b16 %v864
        %v1168 = vunpack.c.h.b16 %v864
        %v1169 = vunpack.c.l.b16 %v865
        %v1170 = vunpack.c.h.b16 %v865
        %v1171 = vunpack.c.l.b16 %v866
        %v1172 = vunpack.c.h.b16 %v866
        %v1173 = vunpack.c.l.b16 %v867
        %v1174 = vunpack.c.h.b16 %v867
        %v1175 = vunpack.c.l.b16 %v868
        %v1176 = vunpack.c.h.b16 %v868
        %v1177 = vunpack.c.l.b16 %v869
        %v1178 = vunpack.c.h.b16 %v869
        %v1179 = vunpack.c.l.b16 %v870
        %v1180 = vunpack.c.h.b16 %v870
        %v1181 = vunpack.c.l.b16 %v871
        %v1182 = vunpack.c.h.b16 %v871
        %v1183 = vunpack.c.l.b16 %v872
        %v1184 = vunpack.c.h.b16 %v872
        %v1185 = vunpack.c.l.b16 %v873
        %v1186 = vunpack.c.h.b16 %v873
        %v1187 = vunpack.c.l.b16 %v874
        %v1188 = vunpack.c.h.b16 %v874
        %v1189 = vunpack.c.l.b16 %v875
        %v1190 = vunpack.c.h.b16 %v875
        %v1191 = vunpack.c.l.b16 %v876
        %v1192 = vunpack.c.h.b16 %v876
        %v1193 = vunpack.c.l.b16 %v877
        %v1194 = vunpack.c.h.b16 %v877
        %v1195 = vunpack.c.l.b16 %v878
        %v1196 = vunpack.c.h.b16 %v878
        %v1197 = vunpack.c.l.b16 %v879
        %v1198 = vunpack.c.h.b16 %v879
        %v1199 = vunpack.c.l.b16 %v880
        %v1200 = vunpack.c.h.b16 %v880
        %v1201 = vunpack.c.l.b16 %v881
        %v1202 = vunpack.c.h.b16 %v881
        %v1203 = vunpack.c.l.b16 %v882
        %v1204 = vunpack.c.h.b16 %v882
        %v1205 = vunpack.c.l.b16 %v883
        %v1206 = vunpack.c.h.b16 %v883
        %v1207 = vunpack.c.l.b16 %v884
        %v1208 = vunpack.c.h.b16 %v884
        %v1209 = vunpack.c.l.b16 %v885
        %v1210 = vunpack.c.h.b16 %v885
        %v1211 = vunpack.c.l.b16 %v886
        %v1212 = vunpack.c.h.b16 %v886
        %v1213 = vunpack.c.l.b16 %v887
        %v1214 = vunpack.c.h.b16 %v887
        %v1215 = vunpack.c.l.b16 %v888
        %v1216 = vunpack.c.h.b16 %v888
        %v1217 = vunpack.c.l.b16 %v889
        %v1218 = vunpack.c.h.b16 %v889
        %v1219 = vunpack.c.l.b16 %v890
        %v1220 = vunpack.c.h.b16 %v890
        %v1221 = vunpack.c.l.b16 %v891
        %v1222 = vunpack.c.h.b16 %v891
        %v1223 = vunpack.c.l.b16 %v892
        %v1224 = vunpack.c.h.b16 %v892
        %v1225 = vunpack.c.l.b16 %v893
        %v1226 = vunpack.c.h.b16 %v893
        %v1227 = vunpack.c.l.b16 %v894
        %v1228 = vunpack.c.h.b16 %v894
        %v1229 = vunpack.c.l.b16 %v895
        %v1230 = vunpack.c.h.b16 %v895
        %v1231 = vunpack.c.l.b16 %v896
        %v1232 = vunpack.c.h.b16 %v896
        %v1233 = vunpack.c.l.b16 %v897
        %v1234 = vunpack.c.h.b16 %v897
        %v1235 = vunpack.c.l.b16 %v898
        %v1236 = vunpack.c.h.b16 %v898
        %v1237 = vunpack.c.l.b16 %v899
        %v1238 = vunpack.c.h.b16 %v899
        %v1239 = vunpack.c.l.b16 %v900
        %v1240 = vunpack.c.h.b16 %v900
        %v1241 = vunpack.c.l.b16 %v901
        %v1242 = vunpack.c.h.b16 %v901
        %v1243 = vunpack.c.l.b16 %v902
        %v1244 = vunpack.c.h.b16 %v902
        %v1245 = vunpack.c.l.b16 %v903
        %v1246 = vunpack.c.h.b16 %v903
        %v1247 = vunpack.c.l.b16 %v904
        %v1248 = vunpack.c.h.b16 %v904
        %v1249 = vunpack.c.l.b16 %v905
        %v1250 = vunpack.c.h.b16 %v905
        %v1251 = vunpack.c.l.b16 %v906
        %v1252 = vunpack.c.h.b16 %v906
        %v1253 = vunpack.c.l.b16 %v907
        %v1254 = vunpack.c.h.b16 %v907
        %v1255 = vunpack.c.l.b16 %v908
        %v1256 = vunpack.c.h.b16 %v908
        %v1257 = vunpack.c.l.b16 %v909
        %v1258 = vunpack.c.h.b16 %v909
        %v1259 = vunpack.c.l.b16 %v910
        %v1260 = vunpack.c.h.b16 %v910
        %v1261 = vunpack.c.l.b16 %v911
        %v1262 = vunpack.c.h.b16 %v911
        %v1263 = vunpack.c.l.b16 %v912
        %v1264 = vunpack.c.h.b16 %v912
        %v1265 = vunpack.c.l.b16 %v913
        %v1266 = vunpack.c.h.b16 %v913
        %v1267 = vunpack.c.l.b16 %v914
        %v1268 = vunpack.c.h.b16 %v914
        %v1269 = vunpack.c.l.b16 %v915
        %v1270 = vunpack.c.h.b16 %v915
        %v1271 = vunpack.c.l.b16 %v916
        %v1272 = vunpack.c.h.b16 %v916
        %v1273 = vunpack.c.l.b16 %v917
        %v1274 = vunpack.c.h.b16 %v917
        %v1275 = vunpack.c.l.b16 %v918
        %v1276 = vunpack.c.h.b16 %v918
        %v1277 = vunpack.c.l.b16 %v919
        %v1278 = vunpack.c.h.b16 %v919
        %v1279 = vunpack.c.l.b16 %v920
        %v1280 = vunpack.c.h.b16 %v920
        %v1281 = vunpack.c.l.b16 %v921
        %v1282 = vunpack.c.h.b16 %v921
        %v1283 = vunpack.c.l.b16 %v922
        %v1284 = vunpack.c.h.b16 %v922
        %v1285 = vunpack.c.l.b16 %v923
        %v1286 = vunpack.c.h.b16 %v923
        %v1287 = vunpack.c.l.b16 %v924
        %v1288 = vunpack.c.h.b16 %v924
        %v1289 = vunpack.c.l.b16 %v925
        %v1290 = vunpack.c.h.b16 %v925
        %v1291 = vunpack.c.l.b16 %v926
        %v1292 = vunpack.c.h.b16 %v926
        %v1293 = vunpack.c.l.b16 %v927
        %v1294 = vunpack.c.h.b16 %v927
        %v1295 = vunpack.c.l.b16 %v928
        %v1296 = vunpack.c.h.b16 %v928
        %v1297 = vunpack.c.l.b16 %v929
        %v1298 = vunpack.c.h.b16 %v929
        %v1299 = vunpack.c.l.b16 %v930
        %v1300 = vunpack.c.h.b16 %v930
        %v1301 = vunpack.c.l.b16 %v931
        %v1302 = vunpack.c.h.b16 %v931
        %v1303 = vunpack.c.l.b16 %v932
        %v1304 = vunpack.c.h.b16 %v932
        %v1305 = vunpack.c.l.b16 %v933
        %v1306 = vunpack.c.h.b16 %v933
        %v1307 = vunpack.c.l.b16 %v934
        %v1308 = vunpack.c.h.b16 %v934
        %v1309 = vunpack.c.l.b16 %v935
        %v1310 = vunpack.c.h.b16 %v935
        %v1311 = vunpack.c.l.b16 %v936
        %v1312 = vunpack.c.h.b16 %v936
        %v1313 = vunpack.c.l.b16 %v937
        %v1314 = vunpack.c.h.b16 %v937
        %v1315 = vunpack.c.l.b16 %v938
        %v1316 = vunpack.c.h.b16 %v938
        %v1317 = vunpack.c.l.b16 %v939
        %v1318 = vunpack.c.h.b16 %v939
        %v1319 = vunpack.c.l.b16 %v940
        %v1320 = vunpack.c.h.b16 %v940
        %v1321 = vunpack.c.l.b16 %v941
        %v1322 = vunpack.c.h.b16 %v941
        %v1323 = vunpack.c.l.b16 %v942
        %v1324 = vunpack.c.h.b16 %v942
        %v1325 = vunpack.c.l.b16 %v943
        %v1326 = vunpack.c.h.b16 %v943
        %v1327 = vunpack.c.l.b16 %v944
        %v1328 = vunpack.c.h.b16 %v944
        %v1329 = vunpack.c.l.b16 %v945
        %v1330 = vunpack.c.h.b16 %v945
        %v1331 = vunpack.c.l.b16 %v946
        %v1332 = vunpack.c.h.b16 %v946
        %v1333 = vunpack.c.l.b16 %v947
        %v1334 = vunpack.c.h.b16 %v947
        %v1335 = vunpack.c.l.b16 %v948
        %v1336 = vunpack.c.h.b16 %v948
        %v1337 = vunpack.c.l.b16 %v949
        %v1338 = vunpack.c.h.b16 %v949
        %v1339 = vunpack.c.l.b16 %v950
        %v1340 = vunpack.c.h.b16 %v950
        %v1341 = vunpack.c.l.b16 %v951
        %v1342 = vunpack.c.h.b16 %v951
        %v1343 = vunpack.c.l.b16 %v952
        %v1344 = vunpack.c.h.b16 %v952
        %v1345 = vunpack.c.l.b16 %v953
        %v1346 = vunpack.c.h.b16 %v953
        %v1347 = vunpack.c.l.b16 %v954
        %v1348 = vunpack.c.h.b16 %v954
        %v1349 = vunpack.c.l.b16 %v955
        %v1350 = vunpack.c.h.b16 %v955
        %v1351 = vunpack.c.l.b16 %v956
        %v1352 = vunpack.c.h.b16 %v956
        %v1353 = vunpack.c.l.b16 %v957
        %v1354 = vunpack.c.h.b16 %v957
        %v1355 = vunpack.c.l.b16 %v958
        %v1356 = vunpack.c.h.b16 %v958
        %v1357 = vunpack.c.l.b16 %v959
        %v1358 = vunpack.c.h.b16 %v959
        %v1359 = vunpack.c.l.b16 %v960
        %v1360 = vunpack.c.h.b16 %v960
        %v1361 = vunpack.c.l.b16 %v961
        %v1362 = vunpack.c.h.b16 %v961
        %v1363 = vunpack.c.l.b16 %v962
        %v1364 = vunpack.c.h.b16 %v962
        %v1365 = vunpack.c.l.b16 %v963
        %v1366 = vunpack.c.h.b16 %v963
        %v1367 = vunpack.c.l.b16 %v964
        %v1368 = vunpack.c.h.b16 %v964
        %v1369 = vunpack.c.l.b16 %v965
        %v1370 = vunpack.c.h.b16 %v965
        %v1371 = vunpack.c.l.b16 %v966
        %v1372 = vunpack.c.h.b16 %v966
        %v1373 = vunpack.c.l.b16 %v967
        %v1374 = vunpack.c.h.b16 %v967
        %v1375 = vunpack.c.l.b16 %v968
        %v1376 = vunpack.c.h.b16 %v968
        %v1377 = vunpack.c.l.b16 %v969
        %v1378 = vunpack.c.h.b16 %v969
        %v1379 = vunpack.c.l.b16 %v970
        %v1380 = vunpack.c.h.b16 %v970
        %v1381 = vunpack.c.l.b16 %v971
        %v1382 = vunpack.c.h.b16 %v971
        %v1383 = vunpack.c.l.b16 %v972
        %v1384 = vunpack.c.h.b16 %v972
        %v1385 = vunpack.c.l.b16 %v973
        %v1386 = vunpack.c.h.b16 %v973
        %v1387 = vunpack.c.l.b16 %v974
        %v1388 = vunpack.c.h.b16 %v974
        %v1389 = vunpack.c.l.b16 %v975
        %v1390 = vunpack.c.h.b16 %v975
        %v1391 = vunpack.c.l.b16 %v976
        %v1392 = vunpack.c.h.b16 %v976
        %v1393 = vunpack.c.l.b16 %v977
        %v1394 = vunpack.c.h.b16 %v977
        %v1395 = vunpack.c.l.b16 %v978
        %v1396 = vunpack.c.h.b16 %v978
        %v1397 = vunpack.c.l.b16 %v979
        %v1398 = vunpack.c.h.b16 %v979
        %v1399 = vunpack.c.l.b16 %v980
        %v1400 = vunpack.c.h.b16 %v980
        %v1401 = vunpack.c.l.b16 %v981
        %v1402 = vunpack.c.h.b16 %v981
        %v1403 = vunpack.c.l.b16 %v982
        %v1404 = vunpack.c.h.b16 %v982
        %v1405 = vunpack.c.l.b16 %v983
        %v1406 = vunpack.c.h.b16 %v983
        %v1407 = vunpack.c.l.b16 %v984
        %v1408 = vunpack.c.h.b16 %v984
        %v1409 = vunpack.c.l.b16 %v985
        %v1410 = vunpack.c.h.b16 %v985
        %v1411 = vunpack.c.l.b16 %v986
        %v1412 = vunpack.c.h.b16 %v986
        %v1413 = vpack.c.b16 %v1165, %v1157
        %v1414 = vpack.c.b16 %v1166, %v1158
        %v1415 = vpack.c.b16 %v1167, %v1159
        %v1416 = vpack.c.b16 %v1168, %v1160
        %v1417 = vpack.c.b16 %v1169, %v1161
        %v1418 = vpack.c.b16 %v1170, %v1162
        %v1419 = vpack.c.b16 %v1171, %v1163
        %v1420 = vpack.c.b16 %v1172, %v1164
        %v1421 = vpack.c.b16 %v1181, %v1173
        %v1422 = vpack.c.b16 %v1182, %v1174
        %v1423 = vpack.c.b16 %v1183, %v1175
        %v1424 = vpack.c.b16 %v1184, %v1176
        %v1425 = vpack.c.b16 %v1185, %v1177
        %v1426 = vpack.c.b16 %v1186, %v1178
        %v1427 = vpack.c.b16 %v1187, %v1179
        %v1428 = vpack.c.b16 %v1188, %v1180
        %v1429 = vpack.c.b16 %v1197, %v1189
        %v1430 = vpack.c.b16 %v1198, %v1190
        %v1431 = vpack.c.b16 %v1199, %v1191
        %v1432 = vpack.c.b16 %v1200, %v1192
        %v1433 = vpack.c.b16 %v1201, %v1193
        %v1434 = vpack.c.b16 %v1202, %v1194
        %v1435 = vpack.c.b16 %v1203, %v1195
        %v1436 = vpack.c.b16 %v1204, %v1196
        %v1437 = vpack.c.b16 %v1213, %v1205
        %v1438 = vpack.c.b16 %v1214, %v1206
        %v1439 = vpack.c.b16 %v1215, %v1207
        %v1440 = vpack.c.b16 %v1216, %v1208
        %v1441 = vpack.c.b16 %v1217, %v1209
        %v1442 = vpack.c.b16 %v1218, %v1210
        %v1443 = vpack.c.b16 %v1219, %v1211
        %v1444 = vpack.c.b16 %v1220, %v1212
        %v1445 = vpack.c.b16 %v1229, %v1221
        %v1446 = vpack.c.b16 %v1230, %v1222
        %v1447 = vpack.c.b16 %v1231, %v1223
        %v1448 = vpack.c.b16 %v1232, %v1224
        %v1449 = vpack.c.b16 %v1233, %v1225
        %v1450 = vpack.c.b16 %v1234, %v1226
        %v1451 = vpack.c.b16 %v1235, %v1227
        %v1452 = vpack.c.b16 %v1236, %v1228
        %v1453 = vpack.c.b16 %v1245, %v1237
        %v1454 = vpack.c.b16 %v1246, %v1238
        %v1455 = vpack.c.b16 %v1247, %v1239
        %v1456 = vpack.c.b16 %v1248, %v1240
        %v1457 = vpack.c.b16 %v1249, %v1241
        %v1458 = vpack.c.b16 %v1250, %v1242
        %v1459 = vpack.c.b16 %v1251, %v1243
        %v1460 = vpack.c.b16 %v1252, %v1244
        %v1461 = vpack.c.b16 %v1261, %v1253
        %v1462 = vpack.c.b16 %v1262, %v1254
        %v1463 = vpack.c.b16 %v1263, %v1255
        %v1464 = vpack.c.b16 %v1264, %v1256
        %v1465 = vpack.c.b16 %v1265, %v1257
        %v1466 = vpack.c.b16 %v1266, %v1258
        %v1467 = vpack.c.b16 %v1267, %v1259
        %v1468 = vpack.c.b16 %v1268, %v1260
        %v1469 = vpack.c.b16 %v1277, %v1269
        %v1470 = vpack.c.b16 %v1278, %v1270
        %v1471 = vpack.c.b16 %v1279, %v1271
        %v1472 = vpack.c.b16 %v1280, %v1272
        %v1473 = vpack.c.b16 %v1281, %v1273
        %v1474 = vpack.c.b16 %v1282, %v1274
        %v1475 = vpack.c.b16 %v1283, %v1275
        %v1476 = vpack.c.b16 %v1284, %v1276
        %v1477 = vpack.c.b16 %v1293, %v1285
        %v1478 = vpack.c.b16 %v1294, %v1286
        %v1479 = vpack.c.b16 %v1295, %v1287
        %v1480 = vpack.c.b16 %v1296, %v1288
        %v1481 = vpack.c.b16 %v1297, %v1289
        %v1482 = vpack.c.b16 %v1298, %v1290
        %v1483 = vpack.c.b16 %v1299, %v1291
        %v1484 = vpack.c.b16 %v1300, %v1292
        %v1485 = vpack.c.b16 %v1309, %v1301
        %v1486 = vpack.c.b16 %v1310, %v1302
        %v1487 = vpack.c.b16 %v1311, %v1303
        %v1488 = vpack.c.b16 %v1312, %v1304
        %v1489 = vpack.c.b16 %v1313, %v1305
        %v1490 = vpack.c.b16 %v1314, %v1306
        %v1491 = vpack.c.b16 %v1315, %v1307
        %v1492 = vpack.c.b16 %v1316, %v1308
        %v1493 = vpack.c.b16 %v1325, %v1317
        %v1494 = vpack.c.b16 %v1326, %v1318
        %v1495 = vpack.c.b16 %v1327, %v1319
        %v1496 = vpack.c.b16 %v1328, %v1320
        %v1497 = vpack.c.b16 %v1329, %v1321
        %v1498 = vpack.c.b16 %v1330, %v1322
        %v1499 = vpack.c.b16 %v1331, %v1323
        %v1500 = vpack.c.b16 %v1332, %v1324
        %v1501 = vpack.c.b16 %v1341, %v1333
        %v1502 = vpack.c.b16 %v1342, %v1334
        %v1503 = vpack.c.b16 %v1343, %v1335
        %v1504 = vpack.c.b16 %v1344, %v1336
        %v1505 = vpack.c.b16 %v1345, %v1337
        %v1506 = vpack.c.b16 %v1346, %v1338
        %v1507 = vpack.c.b16 %v1347, %v1339
        %v1508 = vpack.c.b16 %v1348, %v1340
        %v1509 = vpack.c.b16 %v1357, %v1349
        %v1510 = vpack.c.b16 %v1358, %v1350
        %v1511 = vpack.c.b16 %v1359, %v1351
        %v1512 = vpack.c.b16 %v1360, %v1352
        %v1513 = vpack.c.b16 %v1361, %v1353
        %v1514 = vpack.c.b16 %v1362, %v1354
        %v1515 = vpack.c.b16 %v1363, %v1355
        %v1516 = vpack.c.b16 %v1364, %v1356
        %v1517 = vpack.c.b16 %v1373, %v1365
        %v1518 = vpack.c.b16 %v1374, %v1366
        %v1519 = vpack.c.b16 %v1375, %v1367
        %v1520 = vpack.c.b16 %v1376, %v1368
        %v1521 = vpack.c.b16 %v1377, %v1369
        %v1522 = vpack.c.b16 %v1378, %v1370
        %v1523 = vpack.c.b16 %v1379, %v1371
        %v1524 = vpack.c.b16 %v1380, %v1372
        %v1525 = vpack.c.b16 %v1389, %v1381
        %v1526 = vpack.c.b16 %v1390, %v1382
        %v1527 = vpack.c.b16 %v1391, %v1383
        %v1528 = vpack.c.b16 %v1392, %v1384
        %v1529 = vpack.c.b16 %v1393, %v1385
        %v1530 = vpack.c.b16 %v1394, %v1386
        %v1531 = vpack.c.b16 %v1395, %v1387
        %v1532 = vpack.c.b16 %v1396, %v1388
        %v1533 = vpack.c.b16 %v1405, %v1397
        %v1534 = vpack.c.b16 %v1406, %v1398
        %v1535 = vpack.c.b16 %v1407, %v1399
        %v1536 = vpack.c.b16 %v1408, %v1400
        %v1537 = vpack.c.b16 %v1409, %v1401
        %v1538 = vpack.c.b16 %v1410, %v1402
        %v1539 = vpack.c.b16 %v1411, %v1403
        %v1540 = vpack.c.b16 %v1412, %v1404
        %1669 = vmatprep.subr.bf16.mxu0 %v1470
        %1670 = vmatpush1.bf16.msra.mxu0 %v1469
        %1671 = vmatprep.subr.bf16.mxu0 %v1462
        %1672 = vmatpush1.bf16.msra.mxu0 %v1461
        %1673 = vmatprep.subr.bf16.mxu0 %v1454
        %1674 = vmatpush1.bf16.msra.mxu0 %v1453
        %1675 = vmatprep.subr.bf16.mxu0 %v1446
        %1676 = vmatpush1.bf16.msra.mxu0 %v1445
        %1677 = vmatprep.subr.bf16.mxu0 %v1438
        %1678 = vmatpush1.bf16.msra.mxu0 %v1437
        %1679 = vmatprep.subr.bf16.mxu0 %v1430
        %1680 = vmatpush1.bf16.msra.mxu0 %v1429
        %1681 = vmatprep.subr.bf16.mxu0 %v1422
        %1682 = vmatpush1.bf16.msra.mxu0 %v1421
        %1683 = vmatprep.subr.bf16.mxu0 %v1414
        %1684 = vmatpush1.bf16.msra.mxu0 %v1413
        %1685 = vmatprep.subr.bf16.mxu0 %v1534
        %1686 = vmatpush2.bf16.msra.mxu0 %v1533
        %1687 = vmatprep.subr.bf16.mxu0 %v1526
        %1688 = vmatpush2.bf16.msra.mxu0 %v1525
        %1689 = vmatprep.subr.bf16.mxu0 %v1518
        %1690 = vmatpush2.bf16.msra.mxu0 %v1517
        %1691 = vmatprep.subr.bf16.mxu0 %v1510
        %1692 = vmatpush2.bf16.msra.mxu0 %v1509
        %1693 = vmatprep.subr.bf16.mxu0 %v1502
        %1694 = vmatpush2.bf16.msra.mxu0 %v1501
        %1695 = vmatprep.subr.bf16.mxu0 %v1494
        %1696 = vmatpush2.bf16.msra.mxu0 %v1493
        %1697 = vmatprep.subr.bf16.mxu0 %v1486
        %1698 = vmatpush2.bf16.msra.mxu0 %v1485
        %1699 = vmatprep.subr.bf16.mxu0 %v1478
        %1700 = vmatpush2.bf16.msra.mxu0 %v1477
        %1701 = vmatprep.mubr.bf16.mxu0 %v858
        %1702 = vmatmul.mubr.bf16.gmra.mxu0 %v857
        %v1703 = vpop.f32.mrf.mxu0
        %v1704 = vadd.f32 %v992, %v1703
        %v1705 = vpop.f32.mrf.mxu0
        %v1706 = vadd.f32 %v996, %v1705
        %v1707 = vpop.f32.mrf.mxu0
        %v1708 = vpop.f32.mrf.mxu0
        %1709 = vdwg.mxu0
        %1710 = vmatprep.subr.bf16.mxu0 %v1472
        %1711 = vmatpush1.bf16.msra.mxu0 %v1471
        %1712 = vmatprep.subr.bf16.mxu0 %v1464
        %1713 = vmatpush1.bf16.msra.mxu0 %v1463
        %1714 = vmatprep.subr.bf16.mxu0 %v1456
        %1715 = vmatpush1.bf16.msra.mxu0 %v1455
        %1716 = vmatprep.subr.bf16.mxu0 %v1448
        %1717 = vmatpush1.bf16.msra.mxu0 %v1447
        %1718 = vmatprep.subr.bf16.mxu0 %v1440
        %1719 = vmatpush1.bf16.msra.mxu0 %v1439
        %1720 = vmatprep.subr.bf16.mxu0 %v1432
        %1721 = vmatpush1.bf16.msra.mxu0 %v1431
        %1722 = vmatprep.subr.bf16.mxu0 %v1424
        %1723 = vmatpush1.bf16.msra.mxu0 %v1423
        %1724 = vmatprep.subr.bf16.mxu0 %v1416
        %1725 = vmatpush1.bf16.msra.mxu0 %v1415
        %1726 = vmatprep.subr.bf16.mxu0 %v1536
        %1727 = vmatpush2.bf16.msra.mxu0 %v1535
        %1728 = vmatprep.subr.bf16.mxu0 %v1528
        %1729 = vmatpush2.bf16.msra.mxu0 %v1527
        %1730 = vmatprep.subr.bf16.mxu0 %v1520
        %1731 = vmatpush2.bf16.msra.mxu0 %v1519
        %1732 = vmatprep.subr.bf16.mxu0 %v1512
        %1733 = vmatpush2.bf16.msra.mxu0 %v1511
        %1734 = vmatprep.subr.bf16.mxu0 %v1504
        %1735 = vmatpush2.bf16.msra.mxu0 %v1503
        %1736 = vmatprep.subr.bf16.mxu0 %v1496
        %1737 = vmatpush2.bf16.msra.mxu0 %v1495
        %1738 = vmatprep.subr.bf16.mxu0 %v1488
        %1739 = vmatpush2.bf16.msra.mxu0 %v1487
        %1740 = vmatprep.subr.bf16.mxu0 %v1480
        %1741 = vmatpush2.bf16.msra.mxu0 %v1479
        %1742 = vmatprep.mubr.bf16.mxu0 %v858
        %1743 = vmatmul.mubr.bf16.gmra.mxu0 %v857
        %v1744 = vpop.f32.mrf.mxu0
        %v1745 = vadd.f32 %v1000, %v1744
        %v1746 = vpop.f32.mrf.mxu0
        %v1747 = vadd.f32 %v1004, %v1746
        %v1748 = vpop.f32.mrf.mxu0
        %v1749 = vpop.f32.mrf.mxu0
        %1750 = vdwg.mxu0
        %1751 = vmatprep.subr.bf16.mxu0 %v1474
        %1752 = vmatpush1.bf16.msra.mxu0 %v1473
        %1753 = vmatprep.subr.bf16.mxu0 %v1466
        %1754 = vmatpush1.bf16.msra.mxu0 %v1465
        %1755 = vmatprep.subr.bf16.mxu0 %v1458
        %1756 = vmatpush1.bf16.msra.mxu0 %v1457
        %1757 = vmatprep.subr.bf16.mxu0 %v1450
        %1758 = vmatpush1.bf16.msra.mxu0 %v1449
        %1759 = vmatprep.subr.bf16.mxu0 %v1442
        %1760 = vmatpush1.bf16.msra.mxu0 %v1441
        %1761 = vmatprep.subr.bf16.mxu0 %v1434
        %1762 = vmatpush1.bf16.msra.mxu0 %v1433
        %1763 = vmatprep.subr.bf16.mxu0 %v1426
        %1764 = vmatpush1.bf16.msra.mxu0 %v1425
        %1765 = vmatprep.subr.bf16.mxu0 %v1418
        %1766 = vmatpush1.bf16.msra.mxu0 %v1417
        %1767 = vmatprep.subr.bf16.mxu0 %v1538
        %1768 = vmatpush2.bf16.msra.mxu0 %v1537
        %1769 = vmatprep.subr.bf16.mxu0 %v1530
        %1770 = vmatpush2.bf16.msra.mxu0 %v1529
        %1771 = vmatprep.subr.bf16.mxu0 %v1522
        %1772 = vmatpush2.bf16.msra.mxu0 %v1521
        %1773 = vmatprep.subr.bf16.mxu0 %v1514
        %1774 = vmatpush2.bf16.msra.mxu0 %v1513
        %1775 = vmatprep.subr.bf16.mxu0 %v1506
        %1776 = vmatpush2.bf16.msra.mxu0 %v1505
        %1777 = vmatprep.subr.bf16.mxu0 %v1498
        %1778 = vmatpush2.bf16.msra.mxu0 %v1497
        %1779 = vmatprep.subr.bf16.mxu0 %v1490
        %1780 = vmatpush2.bf16.msra.mxu0 %v1489
        %1781 = vmatprep.subr.bf16.mxu0 %v1482
        %1782 = vmatpush2.bf16.msra.mxu0 %v1481
        %1783 = vmatprep.mubr.bf16.mxu0 %v858
        %1784 = vmatmul.mubr.bf16.gmra.mxu0 %v857
        %v1785 = vpop.f32.mrf.mxu0
        %v1786 = vadd.f32 %v1008, %v1785
        %v1787 = vpop.f32.mrf.mxu0
        %v1788 = vadd.f32 %v1012, %v1787
        %v1789 = vpop.f32.mrf.mxu0
        %v1790 = vpop.f32.mrf.mxu0
        %1791 = vdwg.mxu0
        %1792 = vmatprep.subr.bf16.mxu0 %v1476
        %1793 = vmatpush1.bf16.msra.mxu0 %v1475
        %1794 = vmatprep.subr.bf16.mxu0 %v1468
        %1795 = vmatpush1.bf16.msra.mxu0 %v1467
        %1796 = vmatprep.subr.bf16.mxu0 %v1460
        %1797 = vmatpush1.bf16.msra.mxu0 %v1459
        %1798 = vmatprep.subr.bf16.mxu0 %v1452
        %1799 = vmatpush1.bf16.msra.mxu0 %v1451
        %1800 = vmatprep.subr.bf16.mxu0 %v1444
        %1801 = vmatpush1.bf16.msra.mxu0 %v1443
        %1802 = vmatprep.subr.bf16.mxu0 %v1436
        %1803 = vmatpush1.bf16.msra.mxu0 %v1435
        %1804 = vmatprep.subr.bf16.mxu0 %v1428
        %1805 = vmatpush1.bf16.msra.mxu0 %v1427
        %1806 = vmatprep.subr.bf16.mxu0 %v1420
        %1807 = vmatpush1.bf16.msra.mxu0 %v1419
        %1808 = vmatprep.subr.bf16.mxu0 %v1540
        %1809 = vmatpush2.bf16.msra.mxu0 %v1539
        %1810 = vmatprep.subr.bf16.mxu0 %v1532
        %1811 = vmatpush2.bf16.msra.mxu0 %v1531
        %1812 = vmatprep.subr.bf16.mxu0 %v1524
        %1813 = vmatpush2.bf16.msra.mxu0 %v1523
        %1814 = vmatprep.subr.bf16.mxu0 %v1516
        %1815 = vmatpush2.bf16.msra.mxu0 %v1515
        %1816 = vmatprep.subr.bf16.mxu0 %v1508
        %1817 = vmatpush2.bf16.msra.mxu0 %v1507
        %1818 = vmatprep.subr.bf16.mxu0 %v1500
        %1819 = vmatpush2.bf16.msra.mxu0 %v1499
        %1820 = vmatprep.subr.bf16.mxu0 %v1492
        %1821 = vmatpush2.bf16.msra.mxu0 %v1491
        %1822 = vmatprep.subr.bf16.mxu0 %v1484
        %1823 = vmatpush2.bf16.msra.mxu0 %v1483
        %1824 = vmatprep.mubr.bf16.mxu0 %v858
        %1825 = vmatmul.mubr.bf16.gmra.mxu0 %v857
        %v1826 = vpop.f32.mrf.mxu0
        %v1827 = vadd.f32 %v1016, %v1826
        %v1828 = vpop.f32.mrf.mxu0
        %v1829 = vadd.f32 %v1020, %v1828
        %v1830 = vpop.f32.mrf.mxu0
        %v1831 = vpop.f32.mrf.mxu0
        %1832 = vdwg.mxu0
        %v1833 = vmul.f32 %v1704, %v1704
        %v1834 = vmul.f32 %v1706, %v1706
        %v1835 = vmul.f32 %v1745, %v1745
        %v1836 = vmul.f32 %v1747, %v1747
        %v1837 = vmul.f32 %v1786, %v1786
        %v1838 = vmul.f32 %v1788, %v1788
        %v1839 = vmul.f32 %v1827, %v1827
        %v1840 = vmul.f32 %v1829, %v1829
        %v1841 = vmul.f32 %v1704, %v1833
        %v1842 = vmul.f32 %v1706, %v1834
        %v1843 = vmul.f32 %v1745, %v1835
        %v1844 = vmul.f32 %v1747, %v1836
        %v1845 = vmul.f32 %v1786, %v1837
        %v1846 = vmul.f32 %v1788, %v1838
        %v1847 = vmul.f32 %v1827, %v1839
        %v1848 = vmul.f32 %v1829, %v1840
        %v1849 = vmul.f32 %v1841, 0.044715
        %v1850 = vmul.f32 %v1842, 0.044715
        %v1851 = vmul.f32 %v1843, 0.044715
        %v1852 = vmul.f32 %v1844, 0.044715
        %v1853 = vmul.f32 %v1845, 0.044715
        %v1854 = vmul.f32 %v1846, 0.044715
        %v1855 = vmul.f32 %v1847, 0.044715
        %v1856 = vmul.f32 %v1848, 0.044715
        %v1857 = vadd.f32 %v1704, %v1849
        %v1858 = vadd.f32 %v1706, %v1850
        %v1859 = vadd.f32 %v1745, %v1851
        %v1860 = vadd.f32 %v1747, %v1852
        %v1861 = vadd.f32 %v1786, %v1853
        %v1862 = vadd.f32 %v1788, %v1854
        %v1863 = vadd.f32 %v1827, %v1855
        %v1864 = vadd.f32 %v1829, %v1856
        %v1865 = vmul.f32 %v1857, 0.7978846
        %v1866 = vmul.f32 %v1858, 0.7978846
        %v1867 = vmul.f32 %v1859, 0.7978846
        %v1868 = vmul.f32 %v1860, 0.7978846
        %v1869 = vmul.f32 %v1861, 0.7978846
        %v1870 = vmul.f32 %v1862, 0.7978846
        %v1871 = vmul.f32 %v1863, 0.7978846
        %v1872 = vmul.f32 %v1864, 0.7978846
        %v1873 = vtanh.pop %v1865
        %v1874 = vtanh.pop %v1866
        %v1875 = vtanh.pop %v1867
        %v1876 = vtanh.pop %v1868
        %v1877 = vtanh.pop %v1869
        %v1878 = vtanh.pop %v1870
        %v1879 = vtanh.pop %v1871
        %v1880 = vtanh.pop %v1872
        %v1881 = vadd.f32 %v1873, 1.0
        %v1882 = vadd.f32 %v1874, 1.0
        %v1883 = vadd.f32 %v1875, 1.0
        %v1884 = vadd.f32 %v1876, 1.0
        %v1885 = vadd.f32 %v1877, 1.0
        %v1886 = vadd.f32 %v1878, 1.0
        %v1887 = vadd.f32 %v1879, 1.0
        %v1888 = vadd.f32 %v1880, 1.0
        %v1889 = vmul.f32 %v1881, 0.5
        %v1890 = vmul.f32 %v1882, 0.5
        %v1891 = vmul.f32 %v1883, 0.5
        %v1892 = vmul.f32 %v1884, 0.5
        %v1893 = vmul.f32 %v1885, 0.5
        %v1894 = vmul.f32 %v1886, 0.5
        %v1895 = vmul.f32 %v1887, 0.5
        %v1896 = vmul.f32 %v1888, 0.5
        %v1897 = vmul.f32 %v1704, %v1889
        %v1898 = vmul.f32 %v1706, %v1890
        %v1899 = vmul.f32 %v1745, %v1891
        %v1900 = vmul.f32 %v1747, %v1892
        %v1901 = vmul.f32 %v1786, %v1893
        %v1902 = vmul.f32 %v1788, %v1894
        %v1903 = vmul.f32 %v1827, %v1895
        %v1904 = vmul.f32 %v1829, %v1896
        %v1905 = vpack.c.bf16 %v1897, %v1897
        %v1906 = vpack.c.bf16 %v1898, %v1898
        %v1907 = vpack.c.bf16 %v1899, %v1899
        %v1908 = vpack.c.bf16 %v1900, %v1900
        %v1909 = vpack.c.bf16 %v1901, %v1901
        %v1910 = vpack.c.bf16 %v1902, %v1902
        %v1911 = vpack.c.bf16 %v1903, %v1903
        %v1912 = vpack.c.bf16 %v1904, %v1904
        %v1913 = vld [vmem:[#allocation13] sm:$0xff]
        %v1914 = vld [vmem:[#allocation13 + $0x8] sm:$0xff]
        %v1915 = vld [vmem:[#allocation13 + $0x10] sm:$0xff]
        %v1916 = vld [vmem:[#allocation13 + $0x18] sm:$0xff]
        %v1917 = vld [vmem:[#allocation13 + $0x20] sm:$0xff]
        %v1918 = vld [vmem:[#allocation13 + $0x28] sm:$0xff]
        %v1919 = vld [vmem:[#allocation13 + $0x30] sm:$0xff]
        %v1920 = vld [vmem:[#allocation13 + $0x38] sm:$0xff]
        %v1921 = vld [vmem:[#allocation13 + $0x40] sm:$0xff]
        %v1922 = vld [vmem:[#allocation13 + $0x48] sm:$0xff]
        %v1923 = vld [vmem:[#allocation13 + $0x50] sm:$0xff]
        %v1924 = vld [vmem:[#allocation13 + $0x58] sm:$0xff]
        %v1925 = vld [vmem:[#allocation13 + $0x60] sm:$0xff]
        %v1926 = vld [vmem:[#allocation13 + $0x68] sm:$0xff]
        %v1927 = vld [vmem:[#allocation13 + $0x70] sm:$0xff]
        %v1928 = vld [vmem:[#allocation13 + $0x78] sm:$0xff]
        %v1929 = vld [vmem:[#allocation13 + $0x80] sm:$0xff]
        %v1930 = vld [vmem:[#allocation13 + $0x88] sm:$0xff]
        %v1931 = vld [vmem:[#allocation13 + $0x90] sm:$0xff]
        %v1932 = vld [vmem:[#allocation13 + $0x98] sm:$0xff]
        %v1933 = vld [vmem:[#allocation13 + $0xa0] sm:$0xff]
        %v1934 = vld [vmem:[#allocation13 + $0xa8] sm:$0xff]
        %v1935 = vld [vmem:[#allocation13 + $0xb0] sm:$0xff]
        %v1936 = vld [vmem:[#allocation13 + $0xb8] sm:$0xff]
        %v1937 = vld [vmem:[#allocation13 + $0xc0] sm:$0xff]
        %v1938 = vld [vmem:[#allocation13 + $0xc8] sm:$0xff]
        %v1939 = vld [vmem:[#allocation13 + $0xd0] sm:$0xff]
        %v1940 = vld [vmem:[#allocation13 + $0xd8] sm:$0xff]
        %v1941 = vld [vmem:[#allocation13 + $0xe0] sm:$0xff]
        %v1942 = vld [vmem:[#allocation13 + $0xe8] sm:$0xff]
        %v1943 = vld [vmem:[#allocation13 + $0xf0] sm:$0xff]
        %v1944 = vld [vmem:[#allocation13 + $0xf8] sm:$0xff]
        %v1945 = vld [vmem:[#allocation13 + $0x100] sm:$0xff]
        %v1946 = vld [vmem:[#allocation13 + $0x108] sm:$0xff]
        %v1947 = vld [vmem:[#allocation13 + $0x110] sm:$0xff]
        %v1948 = vld [vmem:[#allocation13 + $0x118] sm:$0xff]
        %v1949 = vld [vmem:[#allocation13 + $0x120] sm:$0xff]
        %v1950 = vld [vmem:[#allocation13 + $0x128] sm:$0xff]
        %v1951 = vld [vmem:[#allocation13 + $0x130] sm:$0xff]
        %v1952 = vld [vmem:[#allocation13 + $0x138] sm:$0xff]
        %v1953 = vld [vmem:[#allocation13 + $0x140] sm:$0xff]
        %v1954 = vld [vmem:[#allocation13 + $0x148] sm:$0xff]
        %v1955 = vld [vmem:[#allocation13 + $0x150] sm:$0xff]
        %v1956 = vld [vmem:[#allocation13 + $0x158] sm:$0xff]
        %v1957 = vld [vmem:[#allocation13 + $0x160] sm:$0xff]
        %v1958 = vld [vmem:[#allocation13 + $0x168] sm:$0xff]
        %v1959 = vld [vmem:[#allocation13 + $0x170] sm:$0xff]
        %v1960 = vld [vmem:[#allocation13 + $0x178] sm:$0xff]
        %v1961 = vld [vmem:[#allocation13 + $0x180] sm:$0xff]
        %v1962 = vld [vmem:[#allocation13 + $0x188] sm:$0xff]
        %v1963 = vld [vmem:[#allocation13 + $0x190] sm:$0xff]
        %v1964 = vld [vmem:[#allocation13 + $0x198] sm:$0xff]
        %v1965 = vld [vmem:[#allocation13 + $0x1a0] sm:$0xff]
        %v1966 = vld [vmem:[#allocation13 + $0x1a8] sm:$0xff]
        %v1967 = vld [vmem:[#allocation13 + $0x1b0] sm:$0xff]
        %v1968 = vld [vmem:[#allocation13 + $0x1b8] sm:$0xff]
        %v1969 = vld [vmem:[#allocation13 + $0x1c0] sm:$0xff]
        %v1970 = vld [vmem:[#allocation13 + $0x1c8] sm:$0xff]
        %v1971 = vld [vmem:[#allocation13 + $0x1d0] sm:$0xff]
        %v1972 = vld [vmem:[#allocation13 + $0x1d8] sm:$0xff]
        %v1973 = vld [vmem:[#allocation13 + $0x1e0] sm:$0xff]
        %v1974 = vld [vmem:[#allocation13 + $0x1e8] sm:$0xff]
        %v1975 = vld [vmem:[#allocation13 + $0x1f0] sm:$0xff]
        %v1976 = vld [vmem:[#allocation13 + $0x1f8] sm:$0xff]
        %v1977 = vld [vmem:[#allocation13 + $0x200] sm:$0xff]
        %v1978 = vld [vmem:[#allocation13 + $0x208] sm:$0xff]
        %v1979 = vld [vmem:[#allocation13 + $0x210] sm:$0xff]
        %v1980 = vld [vmem:[#allocation13 + $0x218] sm:$0xff]
        %v1981 = vld [vmem:[#allocation13 + $0x220] sm:$0xff]
        %v1982 = vld [vmem:[#allocation13 + $0x228] sm:$0xff]
        %v1983 = vld [vmem:[#allocation13 + $0x230] sm:$0xff]
        %v1984 = vld [vmem:[#allocation13 + $0x238] sm:$0xff]
        %v1985 = vld [vmem:[#allocation13 + $0x240] sm:$0xff]
        %v1986 = vld [vmem:[#allocation13 + $0x248] sm:$0xff]
        %v1987 = vld [vmem:[#allocation13 + $0x250] sm:$0xff]
        %v1988 = vld [vmem:[#allocation13 + $0x258] sm:$0xff]
        %v1989 = vld [vmem:[#allocation13 + $0x260] sm:$0xff]
        %v1990 = vld [vmem:[#allocation13 + $0x268] sm:$0xff]
        %v1991 = vld [vmem:[#allocation13 + $0x270] sm:$0xff]
        %v1992 = vld [vmem:[#allocation13 + $0x278] sm:$0xff]
        %v1993 = vld [vmem:[#allocation13 + $0x280] sm:$0xff]
        %v1994 = vld [vmem:[#allocation13 + $0x288] sm:$0xff]
        %v1995 = vld [vmem:[#allocation13 + $0x290] sm:$0xff]
        %v1996 = vld [vmem:[#allocation13 + $0x298] sm:$0xff]
        %v1997 = vld [vmem:[#allocation13 + $0x2a0] sm:$0xff]
        %v1998 = vld [vmem:[#allocation13 + $0x2a8] sm:$0xff]
        %v1999 = vld [vmem:[#allocation13 + $0x2b0] sm:$0xff]
        %v2000 = vld [vmem:[#allocation13 + $0x2b8] sm:$0xff]
        %v2001 = vld [vmem:[#allocation13 + $0x2c0] sm:$0xff]
        %v2002 = vld [vmem:[#allocation13 + $0x2c8] sm:$0xff]
        %v2003 = vld [vmem:[#allocation13 + $0x2d0] sm:$0xff]
        %v2004 = vld [vmem:[#allocation13 + $0x2d8] sm:$0xff]
        %v2005 = vld [vmem:[#allocation13 + $0x2e0] sm:$0xff]
        %v2006 = vld [vmem:[#allocation13 + $0x2e8] sm:$0xff]
        %v2007 = vld [vmem:[#allocation13 + $0x2f0] sm:$0xff]
        %v2008 = vld [vmem:[#allocation13 + $0x2f8] sm:$0xff]
        %v2009 = vld [vmem:[#allocation13 + $0x300] sm:$0xff]
        %v2010 = vld [vmem:[#allocation13 + $0x308] sm:$0xff]
        %v2011 = vld [vmem:[#allocation13 + $0x310] sm:$0xff]
        %v2012 = vld [vmem:[#allocation13 + $0x318] sm:$0xff]
        %v2013 = vld [vmem:[#allocation13 + $0x320] sm:$0xff]
        %v2014 = vld [vmem:[#allocation13 + $0x328] sm:$0xff]
        %v2015 = vld [vmem:[#allocation13 + $0x330] sm:$0xff]
        %v2016 = vld [vmem:[#allocation13 + $0x338] sm:$0xff]
        %v2017 = vld [vmem:[#allocation13 + $0x340] sm:$0xff]
        %v2018 = vld [vmem:[#allocation13 + $0x348] sm:$0xff]
        %v2019 = vld [vmem:[#allocation13 + $0x350] sm:$0xff]
        %v2020 = vld [vmem:[#allocation13 + $0x358] sm:$0xff]
        %v2021 = vld [vmem:[#allocation13 + $0x360] sm:$0xff]
        %v2022 = vld [vmem:[#allocation13 + $0x368] sm:$0xff]
        %v2023 = vld [vmem:[#allocation13 + $0x370] sm:$0xff]
        %v2024 = vld [vmem:[#allocation13 + $0x378] sm:$0xff]
        %v2025 = vld [vmem:[#allocation13 + $0x380] sm:$0xff]
        %v2026 = vld [vmem:[#allocation13 + $0x388] sm:$0xff]
        %v2027 = vld [vmem:[#allocation13 + $0x390] sm:$0xff]
        %v2028 = vld [vmem:[#allocation13 + $0x398] sm:$0xff]
        %v2029 = vld [vmem:[#allocation13 + $0x3a0] sm:$0xff]
        %v2030 = vld [vmem:[#allocation13 + $0x3a8] sm:$0xff]
        %v2031 = vld [vmem:[#allocation13 + $0x3b0] sm:$0xff]
        %v2032 = vld [vmem:[#allocation13 + $0x3b8] sm:$0xff]
        %v2033 = vld [vmem:[#allocation13 + $0x3c0] sm:$0xff]
        %v2034 = vld [vmem:[#allocation13 + $0x3c8] sm:$0xff]
        %v2035 = vld [vmem:[#allocation13 + $0x3d0] sm:$0xff]
        %v2036 = vld [vmem:[#allocation13 + $0x3d8] sm:$0xff]
        %v2037 = vld [vmem:[#allocation13 + $0x3e0] sm:$0xff]
        %v2038 = vld [vmem:[#allocation13 + $0x3e8] sm:$0xff]
        %v2039 = vld [vmem:[#allocation13 + $0x3f0] sm:$0xff]
        %v2040 = vld [vmem:[#allocation13 + $0x3f8] sm:$0xff]
        %v2041 = vld [vmem:[#allocation15] sm:$0x3]
        %v2043 = vlaneseq
        %v2044 = vshrl.u32 %v2043, 7
        %v2045 = vsub.s32 0, %v2044
        %v2046 = vrot.slane %v2041, %v2045
        %v2047 = vlaneseq
        %v2048 = vshrl.u32 %v2047, 7
        %v2049 = vsub.s32 1, %v2048
        %v2050 = vrot.slane %v2041, %v2049
        %v2181 = vunpack.c.l.b16 %v1913
        %v2182 = vunpack.c.h.b16 %v1913
        %v2183 = vunpack.c.l.b16 %v1914
        %v2184 = vunpack.c.h.b16 %v1914
        %v2185 = vunpack.c.l.b16 %v1915
        %v2186 = vunpack.c.h.b16 %v1915
        %v2187 = vunpack.c.l.b16 %v1916
        %v2188 = vunpack.c.h.b16 %v1916
        %v2189 = vunpack.c.l.b16 %v1917
        %v2190 = vunpack.c.h.b16 %v1917
        %v2191 = vunpack.c.l.b16 %v1918
        %v2192 = vunpack.c.h.b16 %v1918
        %v2193 = vunpack.c.l.b16 %v1919
        %v2194 = vunpack.c.h.b16 %v1919
        %v2195 = vunpack.c.l.b16 %v1920
        %v2196 = vunpack.c.h.b16 %v1920
        %v2197 = vunpack.c.l.b16 %v1921
        %v2198 = vunpack.c.h.b16 %v1921
        %v2199 = vunpack.c.l.b16 %v1922
        %v2200 = vunpack.c.h.b16 %v1922
        %v2201 = vunpack.c.l.b16 %v1923
        %v2202 = vunpack.c.h.b16 %v1923
        %v2203 = vunpack.c.l.b16 %v1924
        %v2204 = vunpack.c.h.b16 %v1924
        %v2205 = vunpack.c.l.b16 %v1925
        %v2206 = vunpack.c.h.b16 %v1925
        %v2207 = vunpack.c.l.b16 %v1926
        %v2208 = vunpack.c.h.b16 %v1926
        %v2209 = vunpack.c.l.b16 %v1927
        %v2210 = vunpack.c.h.b16 %v1927
        %v2211 = vunpack.c.l.b16 %v1928
        %v2212 = vunpack.c.h.b16 %v1928
        %v2213 = vunpack.c.l.b16 %v1929
        %v2214 = vunpack.c.h.b16 %v1929
        %v2215 = vunpack.c.l.b16 %v1930
        %v2216 = vunpack.c.h.b16 %v1930
        %v2217 = vunpack.c.l.b16 %v1931
        %v2218 = vunpack.c.h.b16 %v1931
        %v2219 = vunpack.c.l.b16 %v1932
        %v2220 = vunpack.c.h.b16 %v1932
        %v2221 = vunpack.c.l.b16 %v1933
        %v2222 = vunpack.c.h.b16 %v1933
        %v2223 = vunpack.c.l.b16 %v1934
        %v2224 = vunpack.c.h.b16 %v1934
        %v2225 = vunpack.c.l.b16 %v1935
        %v2226 = vunpack.c.h.b16 %v1935
        %v2227 = vunpack.c.l.b16 %v1936
        %v2228 = vunpack.c.h.b16 %v1936
        %v2229 = vunpack.c.l.b16 %v1937
        %v2230 = vunpack.c.h.b16 %v1937
        %v2231 = vunpack.c.l.b16 %v1938
        %v2232 = vunpack.c.h.b16 %v1938
        %v2233 = vunpack.c.l.b16 %v1939
        %v2234 = vunpack.c.h.b16 %v1939
        %v2235 = vunpack.c.l.b16 %v1940
        %v2236 = vunpack.c.h.b16 %v1940
        %v2237 = vunpack.c.l.b16 %v1941
        %v2238 = vunpack.c.h.b16 %v1941
        %v2239 = vunpack.c.l.b16 %v1942
        %v2240 = vunpack.c.h.b16 %v1942
        %v2241 = vunpack.c.l.b16 %v1943
        %v2242 = vunpack.c.h.b16 %v1943
        %v2243 = vunpack.c.l.b16 %v1944
        %v2244 = vunpack.c.h.b16 %v1944
        %v2245 = vunpack.c.l.b16 %v1945
        %v2246 = vunpack.c.h.b16 %v1945
        %v2247 = vunpack.c.l.b16 %v1946
        %v2248 = vunpack.c.h.b16 %v1946
        %v2249 = vunpack.c.l.b16 %v1947
        %v2250 = vunpack.c.h.b16 %v1947
        %v2251 = vunpack.c.l.b16 %v1948
        %v2252 = vunpack.c.h.b16 %v1948
        %v2253 = vunpack.c.l.b16 %v1949
        %v2254 = vunpack.c.h.b16 %v1949
        %v2255 = vunpack.c.l.b16 %v1950
        %v2256 = vunpack.c.h.b16 %v1950
        %v2257 = vunpack.c.l.b16 %v1951
        %v2258 = vunpack.c.h.b16 %v1951
        %v2259 = vunpack.c.l.b16 %v1952
        %v2260 = vunpack.c.h.b16 %v1952
        %v2261 = vunpack.c.l.b16 %v1953
        %v2262 = vunpack.c.h.b16 %v1953
        %v2263 = vunpack.c.l.b16 %v1954
        %v2264 = vunpack.c.h.b16 %v1954
        %v2265 = vunpack.c.l.b16 %v1955
        %v2266 = vunpack.c.h.b16 %v1955
        %v2267 = vunpack.c.l.b16 %v1956
        %v2268 = vunpack.c.h.b16 %v1956
        %v2269 = vunpack.c.l.b16 %v1957
        %v2270 = vunpack.c.h.b16 %v1957
        %v2271 = vunpack.c.l.b16 %v1958
        %v2272 = vunpack.c.h.b16 %v1958
        %v2273 = vunpack.c.l.b16 %v1959
        %v2274 = vunpack.c.h.b16 %v1959
        %v2275 = vunpack.c.l.b16 %v1960
        %v2276 = vunpack.c.h.b16 %v1960
        %v2277 = vunpack.c.l.b16 %v1961
        %v2278 = vunpack.c.h.b16 %v1961
        %v2279 = vunpack.c.l.b16 %v1962
        %v2280 = vunpack.c.h.b16 %v1962
        %v2281 = vunpack.c.l.b16 %v1963
        %v2282 = vunpack.c.h.b16 %v1963
        %v2283 = vunpack.c.l.b16 %v1964
        %v2284 = vunpack.c.h.b16 %v1964
        %v2285 = vunpack.c.l.b16 %v1965
        %v2286 = vunpack.c.h.b16 %v1965
        %v2287 = vunpack.c.l.b16 %v1966
        %v2288 = vunpack.c.h.b16 %v1966
        %v2289 = vunpack.c.l.b16 %v1967
        %v2290 = vunpack.c.h.b16 %v1967
        %v2291 = vunpack.c.l.b16 %v1968
        %v2292 = vunpack.c.h.b16 %v1968
        %v2293 = vunpack.c.l.b16 %v1969
        %v2294 = vunpack.c.h.b16 %v1969
        %v2295 = vunpack.c.l.b16 %v1970
        %v2296 = vunpack.c.h.b16 %v1970
        %v2297 = vunpack.c.l.b16 %v1971
        %v2298 = vunpack.c.h.b16 %v1971
        %v2299 = vunpack.c.l.b16 %v1972
        %v2300 = vunpack.c.h.b16 %v1972
        %v2301 = vunpack.c.l.b16 %v1973
        %v2302 = vunpack.c.h.b16 %v1973
        %v2303 = vunpack.c.l.b16 %v1974
        %v2304 = vunpack.c.h.b16 %v1974
        %v2305 = vunpack.c.l.b16 %v1975
        %v2306 = vunpack.c.h.b16 %v1975
        %v2307 = vunpack.c.l.b16 %v1976
        %v2308 = vunpack.c.h.b16 %v1976
        %v2309 = vunpack.c.l.b16 %v1977
        %v2310 = vunpack.c.h.b16 %v1977
        %v2311 = vunpack.c.l.b16 %v1978
        %v2312 = vunpack.c.h.b16 %v1978
        %v2313 = vunpack.c.l.b16 %v1979
        %v2314 = vunpack.c.h.b16 %v1979
        %v2315 = vunpack.c.l.b16 %v1980
        %v2316 = vunpack.c.h.b16 %v1980
        %v2317 = vunpack.c.l.b16 %v1981
        %v2318 = vunpack.c.h.b16 %v1981
        %v2319 = vunpack.c.l.b16 %v1982
        %v2320 = vunpack.c.h.b16 %v1982
        %v2321 = vunpack.c.l.b16 %v1983
        %v2322 = vunpack.c.h.b16 %v1983
        %v2323 = vunpack.c.l.b16 %v1984
        %v2324 = vunpack.c.h.b16 %v1984
        %v2325 = vunpack.c.l.b16 %v1985
        %v2326 = vunpack.c.h.b16 %v1985
        %v2327 = vunpack.c.l.b16 %v1986
        %v2328 = vunpack.c.h.b16 %v1986
        %v2329 = vunpack.c.l.b16 %v1987
        %v2330 = vunpack.c.h.b16 %v1987
        %v2331 = vunpack.c.l.b16 %v1988
        %v2332 = vunpack.c.h.b16 %v1988
        %v2333 = vunpack.c.l.b16 %v1989
        %v2334 = vunpack.c.h.b16 %v1989
        %v2335 = vunpack.c.l.b16 %v1990
        %v2336 = vunpack.c.h.b16 %v1990
        %v2337 = vunpack.c.l.b16 %v1991
        %v2338 = vunpack.c.h.b16 %v1991
        %v2339 = vunpack.c.l.b16 %v1992
        %v2340 = vunpack.c.h.b16 %v1992
        %v2341 = vunpack.c.l.b16 %v1993
        %v2342 = vunpack.c.h.b16 %v1993
        %v2343 = vunpack.c.l.b16 %v1994
        %v2344 = vunpack.c.h.b16 %v1994
        %v2345 = vunpack.c.l.b16 %v1995
        %v2346 = vunpack.c.h.b16 %v1995
        %v2347 = vunpack.c.l.b16 %v1996
        %v2348 = vunpack.c.h.b16 %v1996
        %v2349 = vunpack.c.l.b16 %v1997
        %v2350 = vunpack.c.h.b16 %v1997
        %v2351 = vunpack.c.l.b16 %v1998
        %v2352 = vunpack.c.h.b16 %v1998
        %v2353 = vunpack.c.l.b16 %v1999
        %v2354 = vunpack.c.h.b16 %v1999
        %v2355 = vunpack.c.l.b16 %v2000
        %v2356 = vunpack.c.h.b16 %v2000
        %v2357 = vunpack.c.l.b16 %v2001
        %v2358 = vunpack.c.h.b16 %v2001
        %v2359 = vunpack.c.l.b16 %v2002
        %v2360 = vunpack.c.h.b16 %v2002
        %v2361 = vunpack.c.l.b16 %v2003
        %v2362 = vunpack.c.h.b16 %v2003
        %v2363 = vunpack.c.l.b16 %v2004
        %v2364 = vunpack.c.h.b16 %v2004
        %v2365 = vunpack.c.l.b16 %v2005
        %v2366 = vunpack.c.h.b16 %v2005
        %v2367 = vunpack.c.l.b16 %v2006
        %v2368 = vunpack.c.h.b16 %v2006
        %v2369 = vunpack.c.l.b16 %v2007
        %v2370 = vunpack.c.h.b16 %v2007
        %v2371 = vunpack.c.l.b16 %v2008
        %v2372 = vunpack.c.h.b16 %v2008
        %v2373 = vunpack.c.l.b16 %v2009
        %v2374 = vunpack.c.h.b16 %v2009
        %v2375 = vunpack.c.l.b16 %v2010
        %v2376 = vunpack.c.h.b16 %v2010
        %v2377 = vunpack.c.l.b16 %v2011
        %v2378 = vunpack.c.h.b16 %v2011
        %v2379 = vunpack.c.l.b16 %v2012
        %v2380 = vunpack.c.h.b16 %v2012
        %v2381 = vunpack.c.l.b16 %v2013
        %v2382 = vunpack.c.h.b16 %v2013
        %v2383 = vunpack.c.l.b16 %v2014
        %v2384 = vunpack.c.h.b16 %v2014
        %v2385 = vunpack.c.l.b16 %v2015
        %v2386 = vunpack.c.h.b16 %v2015
        %v2387 = vunpack.c.l.b16 %v2016
        %v2388 = vunpack.c.h.b16 %v2016
        %v2389 = vunpack.c.l.b16 %v2017
        %v2390 = vunpack.c.h.b16 %v2017
        %v2391 = vunpack.c.l.b16 %v2018
        %v2392 = vunpack.c.h.b16 %v2018
        %v2393 = vunpack.c.l.b16 %v2019
        %v2394 = vunpack.c.h.b16 %v2019
        %v2395 = vunpack.c.l.b16 %v2020
        %v2396 = vunpack.c.h.b16 %v2020
        %v2397 = vunpack.c.l.b16 %v2021
        %v2398 = vunpack.c.h.b16 %v2021
        %v2399 = vunpack.c.l.b16 %v2022
        %v2400 = vunpack.c.h.b16 %v2022
        %v2401 = vunpack.c.l.b16 %v2023
        %v2402 = vunpack.c.h.b16 %v2023
        %v2403 = vunpack.c.l.b16 %v2024
        %v2404 = vunpack.c.h.b16 %v2024
        %v2405 = vunpack.c.l.b16 %v2025
        %v2406 = vunpack.c.h.b16 %v2025
        %v2407 = vunpack.c.l.b16 %v2026
        %v2408 = vunpack.c.h.b16 %v2026
        %v2409 = vunpack.c.l.b16 %v2027
        %v2410 = vunpack.c.h.b16 %v2027
        %v2411 = vunpack.c.l.b16 %v2028
        %v2412 = vunpack.c.h.b16 %v2028
        %v2413 = vunpack.c.l.b16 %v2029
        %v2414 = vunpack.c.h.b16 %v2029
        %v2415 = vunpack.c.l.b16 %v2030
        %v2416 = vunpack.c.h.b16 %v2030
        %v2417 = vunpack.c.l.b16 %v2031
        %v2418 = vunpack.c.h.b16 %v2031
        %v2419 = vunpack.c.l.b16 %v2032
        %v2420 = vunpack.c.h.b16 %v2032
        %v2421 = vunpack.c.l.b16 %v2033
        %v2422 = vunpack.c.h.b16 %v2033
        %v2423 = vunpack.c.l.b16 %v2034
        %v2424 = vunpack.c.h.b16 %v2034
        %v2425 = vunpack.c.l.b16 %v2035
        %v2426 = vunpack.c.h.b16 %v2035
        %v2427 = vunpack.c.l.b16 %v2036
        %v2428 = vunpack.c.h.b16 %v2036
        %v2429 = vunpack.c.l.b16 %v2037
        %v2430 = vunpack.c.h.b16 %v2037
        %v2431 = vunpack.c.l.b16 %v2038
        %v2432 = vunpack.c.h.b16 %v2038
        %v2433 = vunpack.c.l.b16 %v2039
        %v2434 = vunpack.c.h.b16 %v2039
        %v2435 = vunpack.c.l.b16 %v2040
        %v2436 = vunpack.c.h.b16 %v2040
        %v2437 = vpack.c.b16 %v2183, %v2181
        %v2438 = vpack.c.b16 %v2184, %v2182
        %v2439 = vpack.c.b16 %v2187, %v2185
        %v2440 = vpack.c.b16 %v2188, %v2186
        %v2441 = vpack.c.b16 %v2191, %v2189
        %v2442 = vpack.c.b16 %v2192, %v2190
        %v2443 = vpack.c.b16 %v2195, %v2193
        %v2444 = vpack.c.b16 %v2196, %v2194
        %v2445 = vpack.c.b16 %v2199, %v2197
        %v2446 = vpack.c.b16 %v2200, %v2198
        %v2447 = vpack.c.b16 %v2203, %v2201
        %v2448 = vpack.c.b16 %v2204, %v2202
        %v2449 = vpack.c.b16 %v2207, %v2205
        %v2450 = vpack.c.b16 %v2208, %v2206
        %v2451 = vpack.c.b16 %v2211, %v2209
        %v2452 = vpack.c.b16 %v2212, %v2210
        %v2453 = vpack.c.b16 %v2215, %v2213
        %v2454 = vpack.c.b16 %v2216, %v2214
        %v2455 = vpack.c.b16 %v2219, %v2217
        %v2456 = vpack.c.b16 %v2220, %v2218
        %v2457 = vpack.c.b16 %v2223, %v2221
        %v2458 = vpack.c.b16 %v2224, %v2222
        %v2459 = vpack.c.b16 %v2227, %v2225
        %v2460 = vpack.c.b16 %v2228, %v2226
        %v2461 = vpack.c.b16 %v2231, %v2229
        %v2462 = vpack.c.b16 %v2232, %v2230
        %v2463 = vpack.c.b16 %v2235, %v2233
        %v2464 = vpack.c.b16 %v2236, %v2234
        %v2465 = vpack.c.b16 %v2239, %v2237
        %v2466 = vpack.c.b16 %v2240, %v2238
        %v2467 = vpack.c.b16 %v2243, %v2241
        %v2468 = vpack.c.b16 %v2244, %v2242
        %v2469 = vpack.c.b16 %v2247, %v2245
        %v2470 = vpack.c.b16 %v2248, %v2246
        %v2471 = vpack.c.b16 %v2251, %v2249
        %v2472 = vpack.c.b16 %v2252, %v2250
        %v2473 = vpack.c.b16 %v2255, %v2253
        %v2474 = vpack.c.b16 %v2256, %v2254
        %v2475 = vpack.c.b16 %v2259, %v2257
        %v2476 = vpack.c.b16 %v2260, %v2258
        %v2477 = vpack.c.b16 %v2263, %v2261
        %v2478 = vpack.c.b16 %v2264, %v2262
        %v2479 = vpack.c.b16 %v2267, %v2265
        %v2480 = vpack.c.b16 %v2268, %v2266
        %v2481 = vpack.c.b16 %v2271, %v2269
        %v2482 = vpack.c.b16 %v2272, %v2270
        %v2483 = vpack.c.b16 %v2275, %v2273
        %v2484 = vpack.c.b16 %v2276, %v2274
        %v2485 = vpack.c.b16 %v2279, %v2277
        %v2486 = vpack.c.b16 %v2280, %v2278
        %v2487 = vpack.c.b16 %v2283, %v2281
        %v2488 = vpack.c.b16 %v2284, %v2282
        %v2489 = vpack.c.b16 %v2287, %v2285
        %v2490 = vpack.c.b16 %v2288, %v2286
        %v2491 = vpack.c.b16 %v2291, %v2289
        %v2492 = vpack.c.b16 %v2292, %v2290
        %v2493 = vpack.c.b16 %v2295, %v2293
        %v2494 = vpack.c.b16 %v2296, %v2294
        %v2495 = vpack.c.b16 %v2299, %v2297
        %v2496 = vpack.c.b16 %v2300, %v2298
        %v2497 = vpack.c.b16 %v2303, %v2301
        %v2498 = vpack.c.b16 %v2304, %v2302
        %v2499 = vpack.c.b16 %v2307, %v2305
        %v2500 = vpack.c.b16 %v2308, %v2306
        %v2501 = vpack.c.b16 %v2311, %v2309
        %v2502 = vpack.c.b16 %v2312, %v2310
        %v2503 = vpack.c.b16 %v2315, %v2313
        %v2504 = vpack.c.b16 %v2316, %v2314
        %v2505 = vpack.c.b16 %v2319, %v2317
        %v2506 = vpack.c.b16 %v2320, %v2318
        %v2507 = vpack.c.b16 %v2323, %v2321
        %v2508 = vpack.c.b16 %v2324, %v2322
        %v2509 = vpack.c.b16 %v2327, %v2325
        %v2510 = vpack.c.b16 %v2328, %v2326
        %v2511 = vpack.c.b16 %v2331, %v2329
        %v2512 = vpack.c.b16 %v2332, %v2330
        %v2513 = vpack.c.b16 %v2335, %v2333
        %v2514 = vpack.c.b16 %v2336, %v2334
        %v2515 = vpack.c.b16 %v2339, %v2337
        %v2516 = vpack.c.b16 %v2340, %v2338
        %v2517 = vpack.c.b16 %v2343, %v2341
        %v2518 = vpack.c.b16 %v2344, %v2342
        %v2519 = vpack.c.b16 %v2347, %v2345
        %v2520 = vpack.c.b16 %v2348, %v2346
        %v2521 = vpack.c.b16 %v2351, %v2349
        %v2522 = vpack.c.b16 %v2352, %v2350
        %v2523 = vpack.c.b16 %v2355, %v2353
        %v2524 = vpack.c.b16 %v2356, %v2354
        %v2525 = vpack.c.b16 %v2359, %v2357
        %v2526 = vpack.c.b16 %v2360, %v2358
        %v2527 = vpack.c.b16 %v2363, %v2361
        %v2528 = vpack.c.b16 %v2364, %v2362
        %v2529 = vpack.c.b16 %v2367, %v2365
        %v2530 = vpack.c.b16 %v2368, %v2366
        %v2531 = vpack.c.b16 %v2371, %v2369
        %v2532 = vpack.c.b16 %v2372, %v2370
        %v2533 = vpack.c.b16 %v2375, %v2373
        %v2534 = vpack.c.b16 %v2376, %v2374
        %v2535 = vpack.c.b16 %v2379, %v2377
        %v2536 = vpack.c.b16 %v2380, %v2378
        %v2537 = vpack.c.b16 %v2383, %v2381
        %v2538 = vpack.c.b16 %v2384, %v2382
        %v2539 = vpack.c.b16 %v2387, %v2385
        %v2540 = vpack.c.b16 %v2388, %v2386
        %v2541 = vpack.c.b16 %v2391, %v2389
        %v2542 = vpack.c.b16 %v2392, %v2390
        %v2543 = vpack.c.b16 %v2395, %v2393
        %v2544 = vpack.c.b16 %v2396, %v2394
        %v2545 = vpack.c.b16 %v2399, %v2397
        %v2546 = vpack.c.b16 %v2400, %v2398
        %v2547 = vpack.c.b16 %v2403, %v2401
        %v2548 = vpack.c.b16 %v2404, %v2402
        %v2549 = vpack.c.b16 %v2407, %v2405
        %v2550 = vpack.c.b16 %v2408, %v2406
        %v2551 = vpack.c.b16 %v2411, %v2409
        %v2552 = vpack.c.b16 %v2412, %v2410
        %v2553 = vpack.c.b16 %v2415, %v2413
        %v2554 = vpack.c.b16 %v2416, %v2414
        %v2555 = vpack.c.b16 %v2419, %v2417
        %v2556 = vpack.c.b16 %v2420, %v2418
        %v2557 = vpack.c.b16 %v2423, %v2421
        %v2558 = vpack.c.b16 %v2424, %v2422
        %v2559 = vpack.c.b16 %v2427, %v2425
        %v2560 = vpack.c.b16 %v2428, %v2426
        %v2561 = vpack.c.b16 %v2431, %v2429
        %v2562 = vpack.c.b16 %v2432, %v2430
        %v2563 = vpack.c.b16 %v2435, %v2433
        %v2564 = vpack.c.b16 %v2436, %v2434
        %2693 = vmatprep.subr.bf16.mxu0 %v2452
        %2694 = vmatpush1.bf16.msra.mxu0 %v2451
        %2695 = vmatprep.subr.bf16.mxu0 %v2450
        %2696 = vmatpush1.bf16.msra.mxu0 %v2449
        %2697 = vmatprep.subr.bf16.mxu0 %v2448
        %2698 = vmatpush1.bf16.msra.mxu0 %v2447
        %2699 = vmatprep.subr.bf16.mxu0 %v2446
        %2700 = vmatpush1.bf16.msra.mxu0 %v2445
        %2701 = vmatprep.subr.bf16.mxu0 %v2444
        %2702 = vmatpush1.bf16.msra.mxu0 %v2443
        %2703 = vmatprep.subr.bf16.mxu0 %v2442
        %2704 = vmatpush1.bf16.msra.mxu0 %v2441
        %2705 = vmatprep.subr.bf16.mxu0 %v2440
        %2706 = vmatpush1.bf16.msra.mxu0 %v2439
        %2707 = vmatprep.subr.bf16.mxu0 %v2438
        %2708 = vmatpush1.bf16.msra.mxu0 %v2437
        %2709 = vmatprep.subr.bf16.mxu0 %v2468
        %2710 = vmatpush2.bf16.msra.mxu0 %v2467
        %2711 = vmatprep.subr.bf16.mxu0 %v2466
        %2712 = vmatpush2.bf16.msra.mxu0 %v2465
        %2713 = vmatprep.subr.bf16.mxu0 %v2464
        %2714 = vmatpush2.bf16.msra.mxu0 %v2463
        %2715 = vmatprep.subr.bf16.mxu0 %v2462
        %2716 = vmatpush2.bf16.msra.mxu0 %v2461
        %2717 = vmatprep.subr.bf16.mxu0 %v2460
        %2718 = vmatpush2.bf16.msra.mxu0 %v2459
        %2719 = vmatprep.subr.bf16.mxu0 %v2458
        %2720 = vmatpush2.bf16.msra.mxu0 %v2457
        %2721 = vmatprep.subr.bf16.mxu0 %v2456
        %2722 = vmatpush2.bf16.msra.mxu0 %v2455
        %2723 = vmatprep.subr.bf16.mxu0 %v2454
        %2724 = vmatpush2.bf16.msra.mxu0 %v2453
        %2725 = vmatprep.mubr.bf16.mxu0 %v1906
        %2726 = vmatmul.mubr.bf16.gmra.mxu0 %v1905
        %v2727 = vpop.f32.mrf.mxu0
        %v2728 = vadd.f32 %v2046, %v2727
        %v2729 = vpop.f32.mrf.mxu0
        %v2730 = vadd.f32 %v2050, %v2729
        %v2731 = vpop.f32.mrf.mxu0
        %v2732 = vpop.f32.mrf.mxu0
        %2733 = vdwg.mxu0
        %2734 = vmatprep.subr.bf16.mxu0 %v2484
        %2735 = vmatpush1.bf16.msra.mxu0 %v2483
        %2736 = vmatprep.subr.bf16.mxu0 %v2482
        %2737 = vmatpush1.bf16.msra.mxu0 %v2481
        %2738 = vmatprep.subr.bf16.mxu0 %v2480
        %2739 = vmatpush1.bf16.msra.mxu0 %v2479
        %2740 = vmatprep.subr.bf16.mxu0 %v2478
        %2741 = vmatpush1.bf16.msra.mxu0 %v2477
        %2742 = vmatprep.subr.bf16.mxu0 %v2476
        %2743 = vmatpush1.bf16.msra.mxu0 %v2475
        %2744 = vmatprep.subr.bf16.mxu0 %v2474
        %2745 = vmatpush1.bf16.msra.mxu0 %v2473
        %2746 = vmatprep.subr.bf16.mxu0 %v2472
        %2747 = vmatpush1.bf16.msra.mxu0 %v2471
        %2748 = vmatprep.subr.bf16.mxu0 %v2470
        %2749 = vmatpush1.bf16.msra.mxu0 %v2469
        %2750 = vmatprep.subr.bf16.mxu0 %v2500
        %2751 = vmatpush2.bf16.msra.mxu0 %v2499
        %2752 = vmatprep.subr.bf16.mxu0 %v2498
        %2753 = vmatpush2.bf16.msra.mxu0 %v2497
        %2754 = vmatprep.subr.bf16.mxu0 %v2496
        %2755 = vmatpush2.bf16.msra.mxu0 %v2495
        %2756 = vmatprep.subr.bf16.mxu0 %v2494
        %2757 = vmatpush2.bf16.msra.mxu0 %v2493
        %2758 = vmatprep.subr.bf16.mxu0 %v2492
        %2759 = vmatpush2.bf16.msra.mxu0 %v2491
        %2760 = vmatprep.subr.bf16.mxu0 %v2490
        %2761 = vmatpush2.bf16.msra.mxu0 %v2489
        %2762 = vmatprep.subr.bf16.mxu0 %v2488
        %2763 = vmatpush2.bf16.msra.mxu0 %v2487
        %2764 = vmatprep.subr.bf16.mxu0 %v2486
        %2765 = vmatpush2.bf16.msra.mxu0 %v2485
        %2766 = vmatprep.mubr.bf16.mxu0 %v1908
        %2767 = vmatmul.mubr.bf16.gmra.mxu0 %v1907
        %v2768 = vpop.f32.mrf.mxu0
        %v2769 = vadd.f32 %v2728, %v2768
        %v2770 = vpop.f32.mrf.mxu0
        %v2771 = vadd.f32 %v2730, %v2770
        %v2772 = vpop.f32.mrf.mxu0
        %v2773 = vpop.f32.mrf.mxu0
        %2774 = vdwg.mxu0
        %2775 = vmatprep.subr.bf16.mxu0 %v2516
        %2776 = vmatpush1.bf16.msra.mxu0 %v2515
        %2777 = vmatprep.subr.bf16.mxu0 %v2514
        %2778 = vmatpush1.bf16.msra.mxu0 %v2513
        %2779 = vmatprep.subr.bf16.mxu0 %v2512
        %2780 = vmatpush1.bf16.msra.mxu0 %v2511
        %2781 = vmatprep.subr.bf16.mxu0 %v2510
        %2782 = vmatpush1.bf16.msra.mxu0 %v2509
        %2783 = vmatprep.subr.bf16.mxu0 %v2508
        %2784 = vmatpush1.bf16.msra.mxu0 %v2507
        %2785 = vmatprep.subr.bf16.mxu0 %v2506
        %2786 = vmatpush1.bf16.msra.mxu0 %v2505
        %2787 = vmatprep.subr.bf16.mxu0 %v2504
        %2788 = vmatpush1.bf16.msra.mxu0 %v2503
        %2789 = vmatprep.subr.bf16.mxu0 %v2502
        %2790 = vmatpush1.bf16.msra.mxu0 %v2501
        %2791 = vmatprep.subr.bf16.mxu0 %v2532
        %2792 = vmatpush2.bf16.msra.mxu0 %v2531
        %2793 = vmatprep.subr.bf16.mxu0 %v2530
        %2794 = vmatpush2.bf16.msra.mxu0 %v2529
        %2795 = vmatprep.subr.bf16.mxu0 %v2528
        %2796 = vmatpush2.bf16.msra.mxu0 %v2527
        %2797 = vmatprep.subr.bf16.mxu0 %v2526
        %2798 = vmatpush2.bf16.msra.mxu0 %v2525
        %2799 = vmatprep.subr.bf16.mxu0 %v2524
        %2800 = vmatpush2.bf16.msra.mxu0 %v2523
        %2801 = vmatprep.subr.bf16.mxu0 %v2522
        %2802 = vmatpush2.bf16.msra.mxu0 %v2521
        %2803 = vmatprep.subr.bf16.mxu0 %v2520
        %2804 = vmatpush2.bf16.msra.mxu0 %v2519
        %2805 = vmatprep.subr.bf16.mxu0 %v2518
        %2806 = vmatpush2.bf16.msra.mxu0 %v2517
        %2807 = vmatprep.mubr.bf16.mxu0 %v1910
        %2808 = vmatmul.mubr.bf16.gmra.mxu0 %v1909
        %v2809 = vpop.f32.mrf.mxu0
        %v2810 = vadd.f32 %v2769, %v2809
        %v2811 = vpop.f32.mrf.mxu0
        %v2812 = vadd.f32 %v2771, %v2811
        %v2813 = vpop.f32.mrf.mxu0
        %v2814 = vpop.f32.mrf.mxu0
        %2815 = vdwg.mxu0
        %2816 = vmatprep.subr.bf16.mxu0 %v2548
        %2817 = vmatpush1.bf16.msra.mxu0 %v2547
        %2818 = vmatprep.subr.bf16.mxu0 %v2546
        %2819 = vmatpush1.bf16.msra.mxu0 %v2545
        %2820 = vmatprep.subr.bf16.mxu0 %v2544
        %2821 = vmatpush1.bf16.msra.mxu0 %v2543
        %2822 = vmatprep.subr.bf16.mxu0 %v2542
        %2823 = vmatpush1.bf16.msra.mxu0 %v2541
        %2824 = vmatprep.subr.bf16.mxu0 %v2540
        %2825 = vmatpush1.bf16.msra.mxu0 %v2539
        %2826 = vmatprep.subr.bf16.mxu0 %v2538
        %2827 = vmatpush1.bf16.msra.mxu0 %v2537
        %2828 = vmatprep.subr.bf16.mxu0 %v2536
        %2829 = vmatpush1.bf16.msra.mxu0 %v2535
        %2830 = vmatprep.subr.bf16.mxu0 %v2534
        %2831 = vmatpush1.bf16.msra.mxu0 %v2533
        %2832 = vmatprep.subr.bf16.mxu0 %v2564
        %2833 = vmatpush2.bf16.msra.mxu0 %v2563
        %2834 = vmatprep.subr.bf16.mxu0 %v2562
        %2835 = vmatpush2.bf16.msra.mxu0 %v2561
        %2836 = vmatprep.subr.bf16.mxu0 %v2560
        %2837 = vmatpush2.bf16.msra.mxu0 %v2559
        %2838 = vmatprep.subr.bf16.mxu0 %v2558
        %2839 = vmatpush2.bf16.msra.mxu0 %v2557
        %2840 = vmatprep.subr.bf16.mxu0 %v2556
        %2841 = vmatpush2.bf16.msra.mxu0 %v2555
        %2842 = vmatprep.subr.bf16.mxu0 %v2554
        %2843 = vmatpush2.bf16.msra.mxu0 %v2553
        %2844 = vmatprep.subr.bf16.mxu0 %v2552
        %2845 = vmatpush2.bf16.msra.mxu0 %v2551
        %2846 = vmatprep.subr.bf16.mxu0 %v2550
        %2847 = vmatpush2.bf16.msra.mxu0 %v2549
        %2848 = vmatprep.mubr.bf16.mxu0 %v1912
        %2849 = vmatmul.mubr.bf16.gmra.mxu0 %v1911
        %v2850 = vpop.f32.mrf.mxu0
        %v2851 = vadd.f32 %v2810, %v2850
        %v2852 = vpop.f32.mrf.mxu0
        %v2853 = vadd.f32 %v2812, %v2852
        %v2854 = vpop.f32.mrf.mxu0
        %v2855 = vpop.f32.mrf.mxu0
        %2856 = vdwg.mxu0
        %v2857 = vadd.f32 %v847, %v2851
        %v2858 = vadd.f32 %v849, %v2853
        %v2859 = vadd.f32 %v2857, %v2858
        %2860 = vadd.xlane.f32.xlu0 %v2859
        %v2861 = vpop.xlane.xlu0 %2860
        %v2862 = vrcp.pop 256.0
        %v2863 = vmul.f32 %v2861, %v2862
        %v2864 = vsub.f32 %v2857, %v2863
        %v2865 = vsub.f32 %v2858, %v2863
        %v2866 = vmul.f32 %v2864, %v2864
        %v2867 = vmul.f32 %v2865, %v2865
        %v2868 = vadd.f32 %v2866, %v2867
        %2869 = vadd.xlane.f32.xlu0 %v2868
        %v2870 = vpop.xlane.xlu0 %2869
        %v2871 = vmul.f32 %v2870, %v2862
        %v2872 = vadd.f32 %v2871, 1e-05
        %v2873 = vrsqrt.pop %v2872
        %v2874 = vmul.f32 %v2864, %v2873
        %v2875 = vmul.f32 %v2865, %v2873
        %v2876 = vld [vmem:[#allocation16] sm:$0x3]
        %v2878 = vlaneseq
        %v2879 = vshrl.u32 %v2878, 7
        %v2880 = vsub.s32 0, %v2879
        %v2881 = vrot.slane %v2876, %v2880
        %v2882 = vlaneseq
        %v2883 = vshrl.u32 %v2882, 7
        %v2884 = vsub.s32 1, %v2883
        %v2885 = vrot.slane %v2876, %v2884
        %v2888 = vmul.f32 %v2874, %v2881
        %v2889 = vmul.f32 %v2875, %v2885
        %v2890 = vld [vmem:[#allocation18] sm:$0x3]
        %v2892 = vlaneseq
        %v2893 = vshrl.u32 %v2892, 7
        %v2894 = vsub.s32 0, %v2893
        %v2895 = vrot.slane %v2890, %v2894
        %v2896 = vlaneseq
        %v2897 = vshrl.u32 %v2896, 7
        %v2898 = vsub.s32 1, %v2897
        %v2899 = vrot.slane %v2890, %v2898
        %v2902 = vadd.f32 %v2888, %v2895
        %v2903 = vadd.f32 %v2889, %v2899
        %s2904 = sld [smem:[#allocation2 + $0x1]]
        %v2905 = vstv %s2904
        %v2906 = vmul.f32 %v2905, %v2902
        %v2907 = vmul.f32 %v2905, %v2903
        %v2908 = vadd.f32 %v855, %v2906
        %v2909 = vadd.f32 %v856, %v2907
        %v2910 = vpack.c.bf16 %v2902, %v2902
        %v2911 = vpack.c.bf16 %v2903, %v2903
        %s2912 = scalar_lea.vmem [#allocation10], 1024
        %v2913 = vld [vmem:[%s2912] sm:$0xff]
        %v2914 = vld [vmem:[%s2912 + $0x8] sm:$0xff]
        %v2915 = vld [vmem:[%s2912 + $0x10] sm:$0xff]
        %v2916 = vld [vmem:[%s2912 + $0x18] sm:$0xff]
        %v2917 = vld [vmem:[%s2912 + $0x20] sm:$0xff]
        %v2918 = vld [vmem:[%s2912 + $0x28] sm:$0xff]
        %v2919 = vld [vmem:[%s2912 + $0x30] sm:$0xff]
        %v2920 = vld [vmem:[%s2912 + $0x38] sm:$0xff]
        %v2921 = vld [vmem:[%s2912 + $0x40] sm:$0xff]
        %v2922 = vld [vmem:[%s2912 + $0x48] sm:$0xff]
        %v2923 = vld [vmem:[%s2912 + $0x50] sm:$0xff]
        %v2924 = vld [vmem:[%s2912 + $0x58] sm:$0xff]
        %v2925 = vld [vmem:[%s2912 + $0x60] sm:$0xff]
        %v2926 = vld [vmem:[%s2912 + $0x68] sm:$0xff]
        %v2927 = vld [vmem:[%s2912 + $0x70] sm:$0xff]
        %v2928 = vld [vmem:[%s2912 + $0x78] sm:$0xff]
        %v2929 = vld [vmem:[%s2912 + $0x80] sm:$0xff]
        %v2930 = vld [vmem:[%s2912 + $0x88] sm:$0xff]
        %v2931 = vld [vmem:[%s2912 + $0x90] sm:$0xff]
        %v2932 = vld [vmem:[%s2912 + $0x98] sm:$0xff]
        %v2933 = vld [vmem:[%s2912 + $0xa0] sm:$0xff]
        %v2934 = vld [vmem:[%s2912 + $0xa8] sm:$0xff]
        %v2935 = vld [vmem:[%s2912 + $0xb0] sm:$0xff]
        %v2936 = vld [vmem:[%s2912 + $0xb8] sm:$0xff]
        %v2937 = vld [vmem:[%s2912 + $0xc0] sm:$0xff]
        %v2938 = vld [vmem:[%s2912 + $0xc8] sm:$0xff]
        %v2939 = vld [vmem:[%s2912 + $0xd0] sm:$0xff]
        %v2940 = vld [vmem:[%s2912 + $0xd8] sm:$0xff]
        %v2941 = vld [vmem:[%s2912 + $0xe0] sm:$0xff]
        %v2942 = vld [vmem:[%s2912 + $0xe8] sm:$0xff]
        %v2943 = vld [vmem:[%s2912 + $0xf0] sm:$0xff]
        %v2944 = vld [vmem:[%s2912 + $0xf8] sm:$0xff]
        %v2945 = vld [vmem:[%s2912 + $0x100] sm:$0xff]
        %v2946 = vld [vmem:[%s2912 + $0x108] sm:$0xff]
        %v2947 = vld [vmem:[%s2912 + $0x110] sm:$0xff]
        %v2948 = vld [vmem:[%s2912 + $0x118] sm:$0xff]
        %v2949 = vld [vmem:[%s2912 + $0x120] sm:$0xff]
        %v2950 = vld [vmem:[%s2912 + $0x128] sm:$0xff]
        %v2951 = vld [vmem:[%s2912 + $0x130] sm:$0xff]
        %v2952 = vld [vmem:[%s2912 + $0x138] sm:$0xff]
        %v2953 = vld [vmem:[%s2912 + $0x140] sm:$0xff]
        %v2954 = vld [vmem:[%s2912 + $0x148] sm:$0xff]
        %v2955 = vld [vmem:[%s2912 + $0x150] sm:$0xff]
        %v2956 = vld [vmem:[%s2912 + $0x158] sm:$0xff]
        %v2957 = vld [vmem:[%s2912 + $0x160] sm:$0xff]
        %v2958 = vld [vmem:[%s2912 + $0x168] sm:$0xff]
        %v2959 = vld [vmem:[%s2912 + $0x170] sm:$0xff]
        %v2960 = vld [vmem:[%s2912 + $0x178] sm:$0xff]
        %v2961 = vld [vmem:[%s2912 + $0x180] sm:$0xff]
        %v2962 = vld [vmem:[%s2912 + $0x188] sm:$0xff]
        %v2963 = vld [vmem:[%s2912 + $0x190] sm:$0xff]
        %v2964 = vld [vmem:[%s2912 + $0x198] sm:$0xff]
        %v2965 = vld [vmem:[%s2912 + $0x1a0] sm:$0xff]
        %v2966 = vld [vmem:[%s2912 + $0x1a8] sm:$0xff]
        %v2967 = vld [vmem:[%s2912 + $0x1b0] sm:$0xff]
        %v2968 = vld [vmem:[%s2912 + $0x1b8] sm:$0xff]
        %v2969 = vld [vmem:[%s2912 + $0x1c0] sm:$0xff]
        %v2970 = vld [vmem:[%s2912 + $0x1c8] sm:$0xff]
        %v2971 = vld [vmem:[%s2912 + $0x1d0] sm:$0xff]
        %v2972 = vld [vmem:[%s2912 + $0x1d8] sm:$0xff]
        %v2973 = vld [vmem:[%s2912 + $0x1e0] sm:$0xff]
        %v2974 = vld [vmem:[%s2912 + $0x1e8] sm:$0xff]
        %v2975 = vld [vmem:[%s2912 + $0x1f0] sm:$0xff]
        %v2976 = vld [vmem:[%s2912 + $0x1f8] sm:$0xff]
        %v2977 = vld [vmem:[%s2912 + $0x200] sm:$0xff]
        %v2978 = vld [vmem:[%s2912 + $0x208] sm:$0xff]
        %v2979 = vld [vmem:[%s2912 + $0x210] sm:$0xff]
        %v2980 = vld [vmem:[%s2912 + $0x218] sm:$0xff]
        %v2981 = vld [vmem:[%s2912 + $0x220] sm:$0xff]
        %v2982 = vld [vmem:[%s2912 + $0x228] sm:$0xff]
        %v2983 = vld [vmem:[%s2912 + $0x230] sm:$0xff]
        %v2984 = vld [vmem:[%s2912 + $0x238] sm:$0xff]
        %v2985 = vld [vmem:[%s2912 + $0x240] sm:$0xff]
        %v2986 = vld [vmem:[%s2912 + $0x248] sm:$0xff]
        %v2987 = vld [vmem:[%s2912 + $0x250] sm:$0xff]
        %v2988 = vld [vmem:[%s2912 + $0x258] sm:$0xff]
        %v2989 = vld [vmem:[%s2912 + $0x260] sm:$0xff]
        %v2990 = vld [vmem:[%s2912 + $0x268] sm:$0xff]
        %v2991 = vld [vmem:[%s2912 + $0x270] sm:$0xff]
        %v2992 = vld [vmem:[%s2912 + $0x278] sm:$0xff]
        %v2993 = vld [vmem:[%s2912 + $0x280] sm:$0xff]
        %v2994 = vld [vmem:[%s2912 + $0x288] sm:$0xff]
        %v2995 = vld [vmem:[%s2912 + $0x290] sm:$0xff]
        %v2996 = vld [vmem:[%s2912 + $0x298] sm:$0xff]
        %v2997 = vld [vmem:[%s2912 + $0x2a0] sm:$0xff]
        %v2998 = vld [vmem:[%s2912 + $0x2a8] sm:$0xff]
        %v2999 = vld [vmem:[%s2912 + $0x2b0] sm:$0xff]
        %v3000 = vld [vmem:[%s2912 + $0x2b8] sm:$0xff]
        %v3001 = vld [vmem:[%s2912 + $0x2c0] sm:$0xff]
        %v3002 = vld [vmem:[%s2912 + $0x2c8] sm:$0xff]
        %v3003 = vld [vmem:[%s2912 + $0x2d0] sm:$0xff]
        %v3004 = vld [vmem:[%s2912 + $0x2d8] sm:$0xff]
        %v3005 = vld [vmem:[%s2912 + $0x2e0] sm:$0xff]
        %v3006 = vld [vmem:[%s2912 + $0x2e8] sm:$0xff]
        %v3007 = vld [vmem:[%s2912 + $0x2f0] sm:$0xff]
        %v3008 = vld [vmem:[%s2912 + $0x2f8] sm:$0xff]
        %v3009 = vld [vmem:[%s2912 + $0x300] sm:$0xff]
        %v3010 = vld [vmem:[%s2912 + $0x308] sm:$0xff]
        %v3011 = vld [vmem:[%s2912 + $0x310] sm:$0xff]
        %v3012 = vld [vmem:[%s2912 + $0x318] sm:$0xff]
        %v3013 = vld [vmem:[%s2912 + $0x320] sm:$0xff]
        %v3014 = vld [vmem:[%s2912 + $0x328] sm:$0xff]
        %v3015 = vld [vmem:[%s2912 + $0x330] sm:$0xff]
        %v3016 = vld [vmem:[%s2912 + $0x338] sm:$0xff]
        %v3017 = vld [vmem:[%s2912 + $0x340] sm:$0xff]
        %v3018 = vld [vmem:[%s2912 + $0x348] sm:$0xff]
        %v3019 = vld [vmem:[%s2912 + $0x350] sm:$0xff]
        %v3020 = vld [vmem:[%s2912 + $0x358] sm:$0xff]
        %v3021 = vld [vmem:[%s2912 + $0x360] sm:$0xff]
        %v3022 = vld [vmem:[%s2912 + $0x368] sm:$0xff]
        %v3023 = vld [vmem:[%s2912 + $0x370] sm:$0xff]
        %v3024 = vld [vmem:[%s2912 + $0x378] sm:$0xff]
        %v3025 = vld [vmem:[%s2912 + $0x380] sm:$0xff]
        %v3026 = vld [vmem:[%s2912 + $0x388] sm:$0xff]
        %v3027 = vld [vmem:[%s2912 + $0x390] sm:$0xff]
        %v3028 = vld [vmem:[%s2912 + $0x398] sm:$0xff]
        %v3029 = vld [vmem:[%s2912 + $0x3a0] sm:$0xff]
        %v3030 = vld [vmem:[%s2912 + $0x3a8] sm:$0xff]
        %v3031 = vld [vmem:[%s2912 + $0x3b0] sm:$0xff]
        %v3032 = vld [vmem:[%s2912 + $0x3b8] sm:$0xff]
        %v3033 = vld [vmem:[%s2912 + $0x3c0] sm:$0xff]
        %v3034 = vld [vmem:[%s2912 + $0x3c8] sm:$0xff]
        %v3035 = vld [vmem:[%s2912 + $0x3d0] sm:$0xff]
        %v3036 = vld [vmem:[%s2912 + $0x3d8] sm:$0xff]
        %v3037 = vld [vmem:[%s2912 + $0x3e0] sm:$0xff]
        %v3038 = vld [vmem:[%s2912 + $0x3e8] sm:$0xff]
        %v3039 = vld [vmem:[%s2912 + $0x3f0] sm:$0xff]
        %v3040 = vld [vmem:[%s2912 + $0x3f8] sm:$0xff]
        %s3041 = scalar_lea.vmem [#allocation12], 8
        %v3042 = vld [vmem:[%s3041] sm:$0xff]
        %v3044 = vlaneseq
        %v3045 = vshrl.u32 %v3044, 7
        %v3046 = vsub.s32 0, %v3045
        %v3047 = vrot.slane %v3042, %v3046
        %v3048 = vlaneseq
        %v3049 = vshrl.u32 %v3048, 7
        %v3050 = vsub.s32 1, %v3049
        %v3051 = vrot.slane %v3042, %v3050
        %v3052 = vlaneseq
        %v3053 = vshrl.u32 %v3052, 7
        %v3054 = vsub.s32 2, %v3053
        %v3055 = vrot.slane %v3042, %v3054
        %v3056 = vlaneseq
        %v3057 = vshrl.u32 %v3056, 7
        %v3058 = vsub.s32 3, %v3057
        %v3059 = vrot.slane %v3042, %v3058
        %v3060 = vlaneseq
        %v3061 = vshrl.u32 %v3060, 7
        %v3062 = vsub.s32 4, %v3061
        %v3063 = vrot.slane %v3042, %v3062
        %v3064 = vlaneseq
        %v3065 = vshrl.u32 %v3064, 7
        %v3066 = vsub.s32 5, %v3065
        %v3067 = vrot.slane %v3042, %v3066
        %v3068 = vlaneseq
        %v3069 = vshrl.u32 %v3068, 7
        %v3070 = vsub.s32 6, %v3069
        %v3071 = vrot.slane %v3042, %v3070
        %v3072 = vlaneseq
        %v3073 = vshrl.u32 %v3072, 7
        %v3074 = vsub.s32 7, %v3073
        %v3075 = vrot.slane %v3042, %v3074
        %v3212 = vunpack.c.l.b16 %v2913
        %v3213 = vunpack.c.h.b16 %v2913
        %v3214 = vunpack.c.l.b16 %v2914
        %v3215 = vunpack.c.h.b16 %v2914
        %v3216 = vunpack.c.l.b16 %v2915
        %v3217 = vunpack.c.h.b16 %v2915
        %v3218 = vunpack.c.l.b16 %v2916
        %v3219 = vunpack.c.h.b16 %v2916
        %v3220 = vunpack.c.l.b16 %v2917
        %v3221 = vunpack.c.h.b16 %v2917
        %v3222 = vunpack.c.l.b16 %v2918
        %v3223 = vunpack.c.h.b16 %v2918
        %v3224 = vunpack.c.l.b16 %v2919
        %v3225 = vunpack.c.h.b16 %v2919
        %v3226 = vunpack.c.l.b16 %v2920
        %v3227 = vunpack.c.h.b16 %v2920
        %v3228 = vunpack.c.l.b16 %v2921
        %v3229 = vunpack.c.h.b16 %v2921
        %v3230 = vunpack.c.l.b16 %v2922
        %v3231 = vunpack.c.h.b16 %v2922
        %v3232 = vunpack.c.l.b16 %v2923
        %v3233 = vunpack.c.h.b16 %v2923
        %v3234 = vunpack.c.l.b16 %v2924
        %v3235 = vunpack.c.h.b16 %v2924
        %v3236 = vunpack.c.l.b16 %v2925
        %v3237 = vunpack.c.h.b16 %v2925
        %v3238 = vunpack.c.l.b16 %v2926
        %v3239 = vunpack.c.h.b16 %v2926
        %v3240 = vunpack.c.l.b16 %v2927
        %v3241 = vunpack.c.h.b16 %v2927
        %v3242 = vunpack.c.l.b16 %v2928
        %v3243 = vunpack.c.h.b16 %v2928
        %v3244 = vunpack.c.l.b16 %v2929
        %v3245 = vunpack.c.h.b16 %v2929
        %v3246 = vunpack.c.l.b16 %v2930
        %v3247 = vunpack.c.h.b16 %v2930
        %v3248 = vunpack.c.l.b16 %v2931
        %v3249 = vunpack.c.h.b16 %v2931
        %v3250 = vunpack.c.l.b16 %v2932
        %v3251 = vunpack.c.h.b16 %v2932
        %v3252 = vunpack.c.l.b16 %v2933
        %v3253 = vunpack.c.h.b16 %v2933
        %v3254 = vunpack.c.l.b16 %v2934
        %v3255 = vunpack.c.h.b16 %v2934
        %v3256 = vunpack.c.l.b16 %v2935
        %v3257 = vunpack.c.h.b16 %v2935
        %v3258 = vunpack.c.l.b16 %v2936
        %v3259 = vunpack.c.h.b16 %v2936
        %v3260 = vunpack.c.l.b16 %v2937
        %v3261 = vunpack.c.h.b16 %v2937
        %v3262 = vunpack.c.l.b16 %v2938
        %v3263 = vunpack.c.h.b16 %v2938
        %v3264 = vunpack.c.l.b16 %v2939
        %v3265 = vunpack.c.h.b16 %v2939
        %v3266 = vunpack.c.l.b16 %v2940
        %v3267 = vunpack.c.h.b16 %v2940
        %v3268 = vunpack.c.l.b16 %v2941
        %v3269 = vunpack.c.h.b16 %v2941
        %v3270 = vunpack.c.l.b16 %v2942
        %v3271 = vunpack.c.h.b16 %v2942
        %v3272 = vunpack.c.l.b16 %v2943
        %v3273 = vunpack.c.h.b16 %v2943
        %v3274 = vunpack.c.l.b16 %v2944
        %v3275 = vunpack.c.h.b16 %v2944
        %v3276 = vunpack.c.l.b16 %v2945
        %v3277 = vunpack.c.h.b16 %v2945
        %v3278 = vunpack.c.l.b16 %v2946
        %v3279 = vunpack.c.h.b16 %v2946
        %v3280 = vunpack.c.l.b16 %v2947
        %v3281 = vunpack.c.h.b16 %v2947
        %v3282 = vunpack.c.l.b16 %v2948
        %v3283 = vunpack.c.h.b16 %v2948
        %v3284 = vunpack.c.l.b16 %v2949
        %v3285 = vunpack.c.h.b16 %v2949
        %v3286 = vunpack.c.l.b16 %v2950
        %v3287 = vunpack.c.h.b16 %v2950
        %v3288 = vunpack.c.l.b16 %v2951
        %v3289 = vunpack.c.h.b16 %v2951
        %v3290 = vunpack.c.l.b16 %v2952
        %v3291 = vunpack.c.h.b16 %v2952
        %v3292 = vunpack.c.l.b16 %v2953
        %v3293 = vunpack.c.h.b16 %v2953
        %v3294 = vunpack.c.l.b16 %v2954
        %v3295 = vunpack.c.h.b16 %v2954
        %v3296 = vunpack.c.l.b16 %v2955
        %v3297 = vunpack.c.h.b16 %v2955
        %v3298 = vunpack.c.l.b16 %v2956
        %v3299 = vunpack.c.h.b16 %v2956
        %v3300 = vunpack.c.l.b16 %v2957
        %v3301 = vunpack.c.h.b16 %v2957
        %v3302 = vunpack.c.l.b16 %v2958
        %v3303 = vunpack.c.h.b16 %v2958
        %v3304 = vunpack.c.l.b16 %v2959
        %v3305 = vunpack.c.h.b16 %v2959
        %v3306 = vunpack.c.l.b16 %v2960
        %v3307 = vunpack.c.h.b16 %v2960
        %v3308 = vunpack.c.l.b16 %v2961
        %v3309 = vunpack.c.h.b16 %v2961
        %v3310 = vunpack.c.l.b16 %v2962
        %v3311 = vunpack.c.h.b16 %v2962
        %v3312 = vunpack.c.l.b16 %v2963
        %v3313 = vunpack.c.h.b16 %v2963
        %v3314 = vunpack.c.l.b16 %v2964
        %v3315 = vunpack.c.h.b16 %v2964
        %v3316 = vunpack.c.l.b16 %v2965
        %v3317 = vunpack.c.h.b16 %v2965
        %v3318 = vunpack.c.l.b16 %v2966
        %v3319 = vunpack.c.h.b16 %v2966
        %v3320 = vunpack.c.l.b16 %v2967
        %v3321 = vunpack.c.h.b16 %v2967
        %v3322 = vunpack.c.l.b16 %v2968
        %v3323 = vunpack.c.h.b16 %v2968
        %v3324 = vunpack.c.l.b16 %v2969
        %v3325 = vunpack.c.h.b16 %v2969
        %v3326 = vunpack.c.l.b16 %v2970
        %v3327 = vunpack.c.h.b16 %v2970
        %v3328 = vunpack.c.l.b16 %v2971
        %v3329 = vunpack.c.h.b16 %v2971
        %v3330 = vunpack.c.l.b16 %v2972
        %v3331 = vunpack.c.h.b16 %v2972
        %v3332 = vunpack.c.l.b16 %v2973
        %v3333 = vunpack.c.h.b16 %v2973
        %v3334 = vunpack.c.l.b16 %v2974
        %v3335 = vunpack.c.h.b16 %v2974
        %v3336 = vunpack.c.l.b16 %v2975
        %v3337 = vunpack.c.h.b16 %v2975
        %v3338 = vunpack.c.l.b16 %v2976
        %v3339 = vunpack.c.h.b16 %v2976
        %v3340 = vunpack.c.l.b16 %v2977
        %v3341 = vunpack.c.h.b16 %v2977
        %v3342 = vunpack.c.l.b16 %v2978
        %v3343 = vunpack.c.h.b16 %v2978
        %v3344 = vunpack.c.l.b16 %v2979
        %v3345 = vunpack.c.h.b16 %v2979
        %v3346 = vunpack.c.l.b16 %v2980
        %v3347 = vunpack.c.h.b16 %v2980
        %v3348 = vunpack.c.l.b16 %v2981
        %v3349 = vunpack.c.h.b16 %v2981
        %v3350 = vunpack.c.l.b16 %v2982
        %v3351 = vunpack.c.h.b16 %v2982
        %v3352 = vunpack.c.l.b16 %v2983
        %v3353 = vunpack.c.h.b16 %v2983
        %v3354 = vunpack.c.l.b16 %v2984
        %v3355 = vunpack.c.h.b16 %v2984
        %v3356 = vunpack.c.l.b16 %v2985
        %v3357 = vunpack.c.h.b16 %v2985
        %v3358 = vunpack.c.l.b16 %v2986
        %v3359 = vunpack.c.h.b16 %v2986
        %v3360 = vunpack.c.l.b16 %v2987
        %v3361 = vunpack.c.h.b16 %v2987
        %v3362 = vunpack.c.l.b16 %v2988
        %v3363 = vunpack.c.h.b16 %v2988
        %v3364 = vunpack.c.l.b16 %v2989
        %v3365 = vunpack.c.h.b16 %v2989
        %v3366 = vunpack.c.l.b16 %v2990
        %v3367 = vunpack.c.h.b16 %v2990
        %v3368 = vunpack.c.l.b16 %v2991
        %v3369 = vunpack.c.h.b16 %v2991
        %v3370 = vunpack.c.l.b16 %v2992
        %v3371 = vunpack.c.h.b16 %v2992
        %v3372 = vunpack.c.l.b16 %v2993
        %v3373 = vunpack.c.h.b16 %v2993
        %v3374 = vunpack.c.l.b16 %v2994
        %v3375 = vunpack.c.h.b16 %v2994
        %v3376 = vunpack.c.l.b16 %v2995
        %v3377 = vunpack.c.h.b16 %v2995
        %v3378 = vunpack.c.l.b16 %v2996
        %v3379 = vunpack.c.h.b16 %v2996
        %v3380 = vunpack.c.l.b16 %v2997
        %v3381 = vunpack.c.h.b16 %v2997
        %v3382 = vunpack.c.l.b16 %v2998
        %v3383 = vunpack.c.h.b16 %v2998
        %v3384 = vunpack.c.l.b16 %v2999
        %v3385 = vunpack.c.h.b16 %v2999
        %v3386 = vunpack.c.l.b16 %v3000
        %v3387 = vunpack.c.h.b16 %v3000
        %v3388 = vunpack.c.l.b16 %v3001
        %v3389 = vunpack.c.h.b16 %v3001
        %v3390 = vunpack.c.l.b16 %v3002
        %v3391 = vunpack.c.h.b16 %v3002
        %v3392 = vunpack.c.l.b16 %v3003
        %v3393 = vunpack.c.h.b16 %v3003
        %v3394 = vunpack.c.l.b16 %v3004
        %v3395 = vunpack.c.h.b16 %v3004
        %v3396 = vunpack.c.l.b16 %v3005
        %v3397 = vunpack.c.h.b16 %v3005
        %v3398 = vunpack.c.l.b16 %v3006
        %v3399 = vunpack.c.h.b16 %v3006
        %v3400 = vunpack.c.l.b16 %v3007
        %v3401 = vunpack.c.h.b16 %v3007
        %v3402 = vunpack.c.l.b16 %v3008
        %v3403 = vunpack.c.h.b16 %v3008
        %v3404 = vunpack.c.l.b16 %v3009
        %v3405 = vunpack.c.h.b16 %v3009
        %v3406 = vunpack.c.l.b16 %v3010
        %v3407 = vunpack.c.h.b16 %v3010
        %v3408 = vunpack.c.l.b16 %v3011
        %v3409 = vunpack.c.h.b16 %v3011
        %v3410 = vunpack.c.l.b16 %v3012
        %v3411 = vunpack.c.h.b16 %v3012
        %v3412 = vunpack.c.l.b16 %v3013
        %v3413 = vunpack.c.h.b16 %v3013
        %v3414 = vunpack.c.l.b16 %v3014
        %v3415 = vunpack.c.h.b16 %v3014
        %v3416 = vunpack.c.l.b16 %v3015
        %v3417 = vunpack.c.h.b16 %v3015
        %v3418 = vunpack.c.l.b16 %v3016
        %v3419 = vunpack.c.h.b16 %v3016
        %v3420 = vunpack.c.l.b16 %v3017
        %v3421 = vunpack.c.h.b16 %v3017
        %v3422 = vunpack.c.l.b16 %v3018
        %v3423 = vunpack.c.h.b16 %v3018
        %v3424 = vunpack.c.l.b16 %v3019
        %v3425 = vunpack.c.h.b16 %v3019
        %v3426 = vunpack.c.l.b16 %v3020
        %v3427 = vunpack.c.h.b16 %v3020
        %v3428 = vunpack.c.l.b16 %v3021
        %v3429 = vunpack.c.h.b16 %v3021
        %v3430 = vunpack.c.l.b16 %v3022
        %v3431 = vunpack.c.h.b16 %v3022
        %v3432 = vunpack.c.l.b16 %v3023
        %v3433 = vunpack.c.h.b16 %v3023
        %v3434 = vunpack.c.l.b16 %v3024
        %v3435 = vunpack.c.h.b16 %v3024
        %v3436 = vunpack.c.l.b16 %v3025
        %v3437 = vunpack.c.h.b16 %v3025
        %v3438 = vunpack.c.l.b16 %v3026
        %v3439 = vunpack.c.h.b16 %v3026
        %v3440 = vunpack.c.l.b16 %v3027
        %v3441 = vunpack.c.h.b16 %v3027
        %v3442 = vunpack.c.l.b16 %v3028
        %v3443 = vunpack.c.h.b16 %v3028
        %v3444 = vunpack.c.l.b16 %v3029
        %v3445 = vunpack.c.h.b16 %v3029
        %v3446 = vunpack.c.l.b16 %v3030
        %v3447 = vunpack.c.h.b16 %v3030
        %v3448 = vunpack.c.l.b16 %v3031
        %v3449 = vunpack.c.h.b16 %v3031
        %v3450 = vunpack.c.l.b16 %v3032
        %v3451 = vunpack.c.h.b16 %v3032
        %v3452 = vunpack.c.l.b16 %v3033
        %v3453 = vunpack.c.h.b16 %v3033
        %v3454 = vunpack.c.l.b16 %v3034
        %v3455 = vunpack.c.h.b16 %v3034
        %v3456 = vunpack.c.l.b16 %v3035
        %v3457 = vunpack.c.h.b16 %v3035
        %v3458 = vunpack.c.l.b16 %v3036
        %v3459 = vunpack.c.h.b16 %v3036
        %v3460 = vunpack.c.l.b16 %v3037
        %v3461 = vunpack.c.h.b16 %v3037
        %v3462 = vunpack.c.l.b16 %v3038
        %v3463 = vunpack.c.h.b16 %v3038
        %v3464 = vunpack.c.l.b16 %v3039
        %v3465 = vunpack.c.h.b16 %v3039
        %v3466 = vunpack.c.l.b16 %v3040
        %v3467 = vunpack.c.h.b16 %v3040
        %v3468 = vpack.c.b16 %v3220, %v3212
        %v3469 = vpack.c.b16 %v3221, %v3213
        %v3470 = vpack.c.b16 %v3222, %v3214
        %v3471 = vpack.c.b16 %v3223, %v3215
        %v3472 = vpack.c.b16 %v3224, %v3216
        %v3473 = vpack.c.b16 %v3225, %v3217
        %v3474 = vpack.c.b16 %v3226, %v3218
        %v3475 = vpack.c.b16 %v3227, %v3219
        %v3476 = vpack.c.b16 %v3236, %v3228
        %v3477 = vpack.c.b16 %v3237, %v3229
        %v3478 = vpack.c.b16 %v3238, %v3230
        %v3479 = vpack.c.b16 %v3239, %v3231
        %v3480 = vpack.c.b16 %v3240, %v3232
        %v3481 = vpack.c.b16 %v3241, %v3233
        %v3482 = vpack.c.b16 %v3242, %v3234
        %v3483 = vpack.c.b16 %v3243, %v3235
        %v3484 = vpack.c.b16 %v3252, %v3244
        %v3485 = vpack.c.b16 %v3253, %v3245
        %v3486 = vpack.c.b16 %v3254, %v3246
        %v3487 = vpack.c.b16 %v3255, %v3247
        %v3488 = vpack.c.b16 %v3256, %v3248
        %v3489 = vpack.c.b16 %v3257, %v3249
        %v3490 = vpack.c.b16 %v3258, %v3250
        %v3491 = vpack.c.b16 %v3259, %v3251
        %v3492 = vpack.c.b16 %v3268, %v3260
        %v3493 = vpack.c.b16 %v3269, %v3261
        %v3494 = vpack.c.b16 %v3270, %v3262
        %v3495 = vpack.c.b16 %v3271, %v3263
        %v3496 = vpack.c.b16 %v3272, %v3264
        %v3497 = vpack.c.b16 %v3273, %v3265
        %v3498 = vpack.c.b16 %v3274, %v3266
        %v3499 = vpack.c.b16 %v3275, %v3267
        %v3500 = vpack.c.b16 %v3284, %v3276
        %v3501 = vpack.c.b16 %v3285, %v3277
        %v3502 = vpack.c.b16 %v3286, %v3278
        %v3503 = vpack.c.b16 %v3287, %v3279
        %v3504 = vpack.c.b16 %v3288, %v3280
        %v3505 = vpack.c.b16 %v3289, %v3281
        %v3506 = vpack.c.b16 %v3290, %v3282
        %v3507 = vpack.c.b16 %v3291, %v3283
        %v3508 = vpack.c.b16 %v3300, %v3292
        %v3509 = vpack.c.b16 %v3301, %v3293
        %v3510 = vpack.c.b16 %v3302, %v3294
        %v3511 = vpack.c.b16 %v3303, %v3295
        %v3512 = vpack.c.b16 %v3304, %v3296
        %v3513 = vpack.c.b16 %v3305, %v3297
        %v3514 = vpack.c.b16 %v3306, %v3298
        %v3515 = vpack.c.b16 %v3307, %v3299
        %v3516 = vpack.c.b16 %v3316, %v3308
        %v3517 = vpack.c.b16 %v3317, %v3309
        %v3518 = vpack.c.b16 %v3318, %v3310
        %v3519 = vpack.c.b16 %v3319, %v3311
        %v3520 = vpack.c.b16 %v3320, %v3312
        %v3521 = vpack.c.b16 %v3321, %v3313
        %v3522 = vpack.c.b16 %v3322, %v3314
        %v3523 = vpack.c.b16 %v3323, %v3315
        %v3524 = vpack.c.b16 %v3332, %v3324
        %v3525 = vpack.c.b16 %v3333, %v3325
        %v3526 = vpack.c.b16 %v3334, %v3326
        %v3527 = vpack.c.b16 %v3335, %v3327
        %v3528 = vpack.c.b16 %v3336, %v3328
        %v3529 = vpack.c.b16 %v3337, %v3329
        %v3530 = vpack.c.b16 %v3338, %v3330
        %v3531 = vpack.c.b16 %v3339, %v3331
        %v3532 = vpack.c.b16 %v3348, %v3340
        %v3533 = vpack.c.b16 %v3349, %v3341
        %v3534 = vpack.c.b16 %v3350, %v3342
        %v3535 = vpack.c.b16 %v3351, %v3343
        %v3536 = vpack.c.b16 %v3352, %v3344
        %v3537 = vpack.c.b16 %v3353, %v3345
        %v3538 = vpack.c.b16 %v3354, %v3346
        %v3539 = vpack.c.b16 %v3355, %v3347
        %v3540 = vpack.c.b16 %v3364, %v3356
        %v3541 = vpack.c.b16 %v3365, %v3357
        %v3542 = vpack.c.b16 %v3366, %v3358
        %v3543 = vpack.c.b16 %v3367, %v3359
        %v3544 = vpack.c.b16 %v3368, %v3360
        %v3545 = vpack.c.b16 %v3369, %v3361
        %v3546 = vpack.c.b16 %v3370, %v3362
        %v3547 = vpack.c.b16 %v3371, %v3363
        %v3548 = vpack.c.b16 %v3380, %v3372
        %v3549 = vpack.c.b16 %v3381, %v3373
        %v3550 = vpack.c.b16 %v3382, %v3374
        %v3551 = vpack.c.b16 %v3383, %v3375
        %v3552 = vpack.c.b16 %v3384, %v3376
        %v3553 = vpack.c.b16 %v3385, %v3377
        %v3554 = vpack.c.b16 %v3386, %v3378
        %v3555 = vpack.c.b16 %v3387, %v3379
        %v3556 = vpack.c.b16 %v3396, %v3388
        %v3557 = vpack.c.b16 %v3397, %v3389
        %v3558 = vpack.c.b16 %v3398, %v3390
        %v3559 = vpack.c.b16 %v3399, %v3391
        %v3560 = vpack.c.b16 %v3400, %v3392
        %v3561 = vpack.c.b16 %v3401, %v3393
        %v3562 = vpack.c.b16 %v3402, %v3394
        %v3563 = vpack.c.b16 %v3403, %v3395
        %v3564 = vpack.c.b16 %v3412, %v3404
        %v3565 = vpack.c.b16 %v3413, %v3405
        %v3566 = vpack.c.b16 %v3414, %v3406
        %v3567 = vpack.c.b16 %v3415, %v3407
        %v3568 = vpack.c.b16 %v3416, %v3408
        %v3569 = vpack.c.b16 %v3417, %v3409
        %v3570 = vpack.c.b16 %v3418, %v3410
        %v3571 = vpack.c.b16 %v3419, %v3411
        %v3572 = vpack.c.b16 %v3428, %v3420
        %v3573 = vpack.c.b16 %v3429, %v3421
        %v3574 = vpack.c.b16 %v3430, %v3422
        %v3575 = vpack.c.b16 %v3431, %v3423
        %v3576 = vpack.c.b16 %v3432, %v3424
        %v3577 = vpack.c.b16 %v3433, %v3425
        %v3578 = vpack.c.b16 %v3434, %v3426
        %v3579 = vpack.c.b16 %v3435, %v3427
        %v3580 = vpack.c.b16 %v3444, %v3436
        %v3581 = vpack.c.b16 %v3445, %v3437
        %v3582 = vpack.c.b16 %v3446, %v3438
        %v3583 = vpack.c.b16 %v3447, %v3439
        %v3584 = vpack.c.b16 %v3448, %v3440
        %v3585 = vpack.c.b16 %v3449, %v3441
        %v3586 = vpack.c.b16 %v3450, %v3442
        %v3587 = vpack.c.b16 %v3451, %v3443
        %v3588 = vpack.c.b16 %v3460, %v3452
        %v3589 = vpack.c.b16 %v3461, %v3453
        %v3590 = vpack.c.b16 %v3462, %v3454
        %v3591 = vpack.c.b16 %v3463, %v3455
        %v3592 = vpack.c.b16 %v3464, %v3456
        %v3593 = vpack.c.b16 %v3465, %v3457
        %v3594 = vpack.c.b16 %v3466, %v3458
        %v3595 = vpack.c.b16 %v3467, %v3459
        %3724 = vmatprep.subr.bf16.mxu0 %v3525
        %3725 = vmatpush1.bf16.msra.mxu0 %v3524
        %3726 = vmatprep.subr.bf16.mxu0 %v3517
        %3727 = vmatpush1.bf16.msra.mxu0 %v3516
        %3728 = vmatprep.subr.bf16.mxu0 %v3509
        %3729 = vmatpush1.bf16.msra.mxu0 %v3508
        %3730 = vmatprep.subr.bf16.mxu0 %v3501
        %3731 = vmatpush1.bf16.msra.mxu0 %v3500
        %3732 = vmatprep.subr.bf16.mxu0 %v3493
        %3733 = vmatpush1.bf16.msra.mxu0 %v3492
        %3734 = vmatprep.subr.bf16.mxu0 %v3485
        %3735 = vmatpush1.bf16.msra.mxu0 %v3484
        %3736 = vmatprep.subr.bf16.mxu0 %v3477
        %3737 = vmatpush1.bf16.msra.mxu0 %v3476
        %3738 = vmatprep.subr.bf16.mxu0 %v3469
        %3739 = vmatpush1.bf16.msra.mxu0 %v3468
        %3740 = vmatprep.subr.bf16.mxu0 %v3589
        %3741 = vmatpush2.bf16.msra.mxu0 %v3588
        %3742 = vmatprep.subr.bf16.mxu0 %v3581
        %3743 = vmatpush2.bf16.msra.mxu0 %v3580
        %3744 = vmatprep.subr.bf16.mxu0 %v3573
        %3745 = vmatpush2.bf16.msra.mxu0 %v3572
        %3746 = vmatprep.subr.bf16.mxu0 %v3565
        %3747 = vmatpush2.bf16.msra.mxu0 %v3564
        %3748 = vmatprep.subr.bf16.mxu0 %v3557
        %3749 = vmatpush2.bf16.msra.mxu0 %v3556
        %3750 = vmatprep.subr.bf16.mxu0 %v3549
        %3751 = vmatpush2.bf16.msra.mxu0 %v3548
        %3752 = vmatprep.subr.bf16.mxu0 %v3541
        %3753 = vmatpush2.bf16.msra.mxu0 %v3540
        %3754 = vmatprep.subr.bf16.mxu0 %v3533
        %3755 = vmatpush2.bf16.msra.mxu0 %v3532
        %3756 = vmatprep.mubr.bf16.mxu0 %v2911
        %3757 = vmatmul.mubr.bf16.gmra.mxu0 %v2910
        %v3758 = vpop.f32.mrf.mxu0
        %v3759 = vadd.f32 %v3047, %v3758
        %v3760 = vpop.f32.mrf.mxu0
        %v3761 = vadd.f32 %v3051, %v3760
        %v3762 = vpop.f32.mrf.mxu0
        %v3763 = vpop.f32.mrf.mxu0
        %3764 = vdwg.mxu0
        %3765 = vmatprep.subr.bf16.mxu0 %v3527
        %3766 = vmatpush1.bf16.msra.mxu0 %v3526
        %3767 = vmatprep.subr.bf16.mxu0 %v3519
        %3768 = vmatpush1.bf16.msra.mxu0 %v3518
        %3769 = vmatprep.subr.bf16.mxu0 %v3511
        %3770 = vmatpush1.bf16.msra.mxu0 %v3510
        %3771 = vmatprep.subr.bf16.mxu0 %v3503
        %3772 = vmatpush1.bf16.msra.mxu0 %v3502
        %3773 = vmatprep.subr.bf16.mxu0 %v3495
        %3774 = vmatpush1.bf16.msra.mxu0 %v3494
        %3775 = vmatprep.subr.bf16.mxu0 %v3487
        %3776 = vmatpush1.bf16.msra.mxu0 %v3486
        %3777 = vmatprep.subr.bf16.mxu0 %v3479
        %3778 = vmatpush1.bf16.msra.mxu0 %v3478
        %3779 = vmatprep.subr.bf16.mxu0 %v3471
        %3780 = vmatpush1.bf16.msra.mxu0 %v3470
        %3781 = vmatprep.subr.bf16.mxu0 %v3591
        %3782 = vmatpush2.bf16.msra.mxu0 %v3590
        %3783 = vmatprep.subr.bf16.mxu0 %v3583
        %3784 = vmatpush2.bf16.msra.mxu0 %v3582
        %3785 = vmatprep.subr.bf16.mxu0 %v3575
        %3786 = vmatpush2.bf16.msra.mxu0 %v3574
        %3787 = vmatprep.subr.bf16.mxu0 %v3567
        %3788 = vmatpush2.bf16.msra.mxu0 %v3566
        %3789 = vmatprep.subr.bf16.mxu0 %v3559
        %3790 = vmatpush2.bf16.msra.mxu0 %v3558
        %3791 = vmatprep.subr.bf16.mxu0 %v3551
        %3792 = vmatpush2.bf16.msra.mxu0 %v3550
        %3793 = vmatprep.subr.bf16.mxu0 %v3543
        %3794 = vmatpush2.bf16.msra.mxu0 %v3542
        %3795 = vmatprep.subr.bf16.mxu0 %v3535
        %3796 = vmatpush2.bf16.msra.mxu0 %v3534
        %3797 = vmatprep.mubr.bf16.mxu0 %v2911
        %3798 = vmatmul.mubr.bf16.gmra.mxu0 %v2910
        %v3799 = vpop.f32.mrf.mxu0
        %v3800 = vadd.f32 %v3055, %v3799
        %v3801 = vpop.f32.mrf.mxu0
        %v3802 = vadd.f32 %v3059, %v3801
        %v3803 = vpop.f32.mrf.mxu0
        %v3804 = vpop.f32.mrf.mxu0
        %3805 = vdwg.mxu0
        %3806 = vmatprep.subr.bf16.mxu0 %v3529
        %3807 = vmatpush1.bf16.msra.mxu0 %v3528
        %3808 = vmatprep.subr.bf16.mxu0 %v3521
        %3809 = vmatpush1.bf16.msra.mxu0 %v3520
        %3810 = vmatprep.subr.bf16.mxu0 %v3513
        %3811 = vmatpush1.bf16.msra.mxu0 %v3512
        %3812 = vmatprep.subr.bf16.mxu0 %v3505
        %3813 = vmatpush1.bf16.msra.mxu0 %v3504
        %3814 = vmatprep.subr.bf16.mxu0 %v3497
        %3815 = vmatpush1.bf16.msra.mxu0 %v3496
        %3816 = vmatprep.subr.bf16.mxu0 %v3489
        %3817 = vmatpush1.bf16.msra.mxu0 %v3488
        %3818 = vmatprep.subr.bf16.mxu0 %v3481
        %3819 = vmatpush1.bf16.msra.mxu0 %v3480
        %3820 = vmatprep.subr.bf16.mxu0 %v3473
        %3821 = vmatpush1.bf16.msra.mxu0 %v3472
        %3822 = vmatprep.subr.bf16.mxu0 %v3593
        %3823 = vmatpush2.bf16.msra.mxu0 %v3592
        %3824 = vmatprep.subr.bf16.mxu0 %v3585
        %3825 = vmatpush2.bf16.msra.mxu0 %v3584
        %3826 = vmatprep.subr.bf16.mxu0 %v3577
        %3827 = vmatpush2.bf16.msra.mxu0 %v3576
        %3828 = vmatprep.subr.bf16.mxu0 %v3569
        %3829 = vmatpush2.bf16.msra.mxu0 %v3568
        %3830 = vmatprep.subr.bf16.mxu0 %v3561
        %3831 = vmatpush2.bf16.msra.mxu0 %v3560
        %3832 = vmatprep.subr.bf16.mxu0 %v3553
        %3833 = vmatpush2.bf16.msra.mxu0 %v3552
        %3834 = vmatprep.subr.bf16.mxu0 %v3545
        %3835 = vmatpush2.bf16.msra.mxu0 %v3544
        %3836 = vmatprep.subr.bf16.mxu0 %v3537
        %3837 = vmatpush2.bf16.msra.mxu0 %v3536
        %3838 = vmatprep.mubr.bf16.mxu0 %v2911
        %3839 = vmatmul.mubr.bf16.gmra.mxu0 %v2910
        %v3840 = vpop.f32.mrf.mxu0
        %v3841 = vadd.f32 %v3063, %v3840
        %v3842 = vpop.f32.mrf.mxu0
        %v3843 = vadd.f32 %v3067, %v3842
        %v3844 = vpop.f32.mrf.mxu0
        %v3845 = vpop.f32.mrf.mxu0
        %3846 = vdwg.mxu0
        %3847 = vmatprep.subr.bf16.mxu0 %v3531
        %3848 = vmatpush1.bf16.msra.mxu0 %v3530
        %3849 = vmatprep.subr.bf16.mxu0 %v3523
        %3850 = vmatpush1.bf16.msra.mxu0 %v3522
        %3851 = vmatprep.subr.bf16.mxu0 %v3515
        %3852 = vmatpush1.bf16.msra.mxu0 %v3514
        %3853 = vmatprep.subr.bf16.mxu0 %v3507
        %3854 = vmatpush1.bf16.msra.mxu0 %v3506
        %3855 = vmatprep.subr.bf16.mxu0 %v3499
        %3856 = vmatpush1.bf16.msra.mxu0 %v3498
        %3857 = vmatprep.subr.bf16.mxu0 %v3491
        %3858 = vmatpush1.bf16.msra.mxu0 %v3490
        %3859 = vmatprep.subr.bf16.mxu0 %v3483
        %3860 = vmatpush1.bf16.msra.mxu0 %v3482
        %3861 = vmatprep.subr.bf16.mxu0 %v3475
        %3862 = vmatpush1.bf16.msra.mxu0 %v3474
        %3863 = vmatprep.subr.bf16.mxu0 %v3595
        %3864 = vmatpush2.bf16.msra.mxu0 %v3594
        %3865 = vmatprep.subr.bf16.mxu0 %v3587
        %3866 = vmatpush2.bf16.msra.mxu0 %v3586
        %3867 = vmatprep.subr.bf16.mxu0 %v3579
        %3868 = vmatpush2.bf16.msra.mxu0 %v3578
        %3869 = vmatprep.subr.bf16.mxu0 %v3571
        %3870 = vmatpush2.bf16.msra.mxu0 %v3570
        %3871 = vmatprep.subr.bf16.mxu0 %v3563
        %3872 = vmatpush2.bf16.msra.mxu0 %v3562
        %3873 = vmatprep.subr.bf16.mxu0 %v3555
        %3874 = vmatpush2.bf16.msra.mxu0 %v3554
        %3875 = vmatprep.subr.bf16.mxu0 %v3547
        %3876 = vmatpush2.bf16.msra.mxu0 %v3546
        %3877 = vmatprep.subr.bf16.mxu0 %v3539
        %3878 = vmatpush2.bf16.msra.mxu0 %v3538
        %3879 = vmatprep.mubr.bf16.mxu0 %v2911
        %3880 = vmatmul.mubr.bf16.gmra.mxu0 %v2910
        %v3881 = vpop.f32.mrf.mxu0
        %v3882 = vadd.f32 %v3071, %v3881
        %v3883 = vpop.f32.mrf.mxu0
        %v3884 = vadd.f32 %v3075, %v3883
        %v3885 = vpop.f32.mrf.mxu0
        %v3886 = vpop.f32.mrf.mxu0
        %3887 = vdwg.mxu0
        %v3888 = vmul.f32 %v3759, %v3759
        %v3889 = vmul.f32 %v3761, %v3761
        %v3890 = vmul.f32 %v3800, %v3800
        %v3891 = vmul.f32 %v3802, %v3802
        %v3892 = vmul.f32 %v3841, %v3841
        %v3893 = vmul.f32 %v3843, %v3843
        %v3894 = vmul.f32 %v3882, %v3882
        %v3895 = vmul.f32 %v3884, %v3884
        %v3896 = vmul.f32 %v3759, %v3888
        %v3897 = vmul.f32 %v3761, %v3889
        %v3898 = vmul.f32 %v3800, %v3890
        %v3899 = vmul.f32 %v3802, %v3891
        %v3900 = vmul.f32 %v3841, %v3892
        %v3901 = vmul.f32 %v3843, %v3893
        %v3902 = vmul.f32 %v3882, %v3894
        %v3903 = vmul.f32 %v3884, %v3895
        %v3904 = vmul.f32 %v3896, 0.044715
        %v3905 = vmul.f32 %v3897, 0.044715
        %v3906 = vmul.f32 %v3898, 0.044715
        %v3907 = vmul.f32 %v3899, 0.044715
        %v3908 = vmul.f32 %v3900, 0.044715
        %v3909 = vmul.f32 %v3901, 0.044715
        %v3910 = vmul.f32 %v3902, 0.044715
        %v3911 = vmul.f32 %v3903, 0.044715
        %v3912 = vadd.f32 %v3759, %v3904
        %v3913 = vadd.f32 %v3761, %v3905
        %v3914 = vadd.f32 %v3800, %v3906
        %v3915 = vadd.f32 %v3802, %v3907
        %v3916 = vadd.f32 %v3841, %v3908
        %v3917 = vadd.f32 %v3843, %v3909
        %v3918 = vadd.f32 %v3882, %v3910
        %v3919 = vadd.f32 %v3884, %v3911
        %v3920 = vmul.f32 %v3912, 0.7978846
        %v3921 = vmul.f32 %v3913, 0.7978846
        %v3922 = vmul.f32 %v3914, 0.7978846
        %v3923 = vmul.f32 %v3915, 0.7978846
        %v3924 = vmul.f32 %v3916, 0.7978846
        %v3925 = vmul.f32 %v3917, 0.7978846
        %v3926 = vmul.f32 %v3918, 0.7978846
        %v3927 = vmul.f32 %v3919, 0.7978846
        %v3928 = vtanh.pop %v3920
        %v3929 = vtanh.pop %v3921
        %v3930 = vtanh.pop %v3922
        %v3931 = vtanh.pop %v3923
        %v3932 = vtanh.pop %v3924
        %v3933 = vtanh.pop %v3925
        %v3934 = vtanh.pop %v3926
        %v3935 = vtanh.pop %v3927
        %v3936 = vadd.f32 %v3928, 1.0
        %v3937 = vadd.f32 %v3929, 1.0
        %v3938 = vadd.f32 %v3930, 1.0
        %v3939 = vadd.f32 %v3931, 1.0
        %v3940 = vadd.f32 %v3932, 1.0
        %v3941 = vadd.f32 %v3933, 1.0
        %v3942 = vadd.f32 %v3934, 1.0
        %v3943 = vadd.f32 %v3935, 1.0
        %v3944 = vmul.f32 %v3936, 0.5
        %v3945 = vmul.f32 %v3937, 0.5
        %v3946 = vmul.f32 %v3938, 0.5
        %v3947 = vmul.f32 %v3939, 0.5
        %v3948 = vmul.f32 %v3940, 0.5
        %v3949 = vmul.f32 %v3941, 0.5
        %v3950 = vmul.f32 %v3942, 0.5
        %v3951 = vmul.f32 %v3943, 0.5
        %v3952 = vmul.f32 %v3759, %v3944
        %v3953 = vmul.f32 %v3761, %v3945
        %v3954 = vmul.f32 %v3800, %v3946
        %v3955 = vmul.f32 %v3802, %v3947
        %v3956 = vmul.f32 %v3841, %v3948
        %v3957 = vmul.f32 %v3843, %v3949
        %v3958 = vmul.f32 %v3882, %v3950
        %v3959 = vmul.f32 %v3884, %v3951
        %v3960 = vpack.c.bf16 %v3952, %v3952
        %v3961 = vpack.c.bf16 %v3953, %v3953
        %v3962 = vpack.c.bf16 %v3954, %v3954
        %v3963 = vpack.c.bf16 %v3955, %v3955
        %v3964 = vpack.c.bf16 %v3956, %v3956
        %v3965 = vpack.c.bf16 %v3957, %v3957
        %v3966 = vpack.c.bf16 %v3958, %v3958
        %v3967 = vpack.c.bf16 %v3959, %v3959
        %s3968 = scalar_lea.vmem [#allocation13], 1024
        %v3969 = vld [vmem:[%s3968] sm:$0xff]
        %v3970 = vld [vmem:[%s3968 + $0x8] sm:$0xff]
        %v3971 = vld [vmem:[%s3968 + $0x10] sm:$0xff]
        %v3972 = vld [vmem:[%s3968 + $0x18] sm:$0xff]
        %v3973 = vld [vmem:[%s3968 + $0x20] sm:$0xff]
        %v3974 = vld [vmem:[%s3968 + $0x28] sm:$0xff]
        %v3975 = vld [vmem:[%s3968 + $0x30] sm:$0xff]
        %v3976 = vld [vmem:[%s3968 + $0x38] sm:$0xff]
        %v3977 = vld [vmem:[%s3968 + $0x40] sm:$0xff]
        %v3978 = vld [vmem:[%s3968 + $0x48] sm:$0xff]
        %v3979 = vld [vmem:[%s3968 + $0x50] sm:$0xff]
        %v3980 = vld [vmem:[%s3968 + $0x58] sm:$0xff]
        %v3981 = vld [vmem:[%s3968 + $0x60] sm:$0xff]
        %v3982 = vld [vmem:[%s3968 + $0x68] sm:$0xff]
        %v3983 = vld [vmem:[%s3968 + $0x70] sm:$0xff]
        %v3984 = vld [vmem:[%s3968 + $0x78] sm:$0xff]
        %v3985 = vld [vmem:[%s3968 + $0x80] sm:$0xff]
        %v3986 = vld [vmem:[%s3968 + $0x88] sm:$0xff]
        %v3987 = vld [vmem:[%s3968 + $0x90] sm:$0xff]
        %v3988 = vld [vmem:[%s3968 + $0x98] sm:$0xff]
        %v3989 = vld [vmem:[%s3968 + $0xa0] sm:$0xff]
        %v3990 = vld [vmem:[%s3968 + $0xa8] sm:$0xff]
        %v3991 = vld [vmem:[%s3968 + $0xb0] sm:$0xff]
        %v3992 = vld [vmem:[%s3968 + $0xb8] sm:$0xff]
        %v3993 = vld [vmem:[%s3968 + $0xc0] sm:$0xff]
        %v3994 = vld [vmem:[%s3968 + $0xc8] sm:$0xff]
        %v3995 = vld [vmem:[%s3968 + $0xd0] sm:$0xff]
        %v3996 = vld [vmem:[%s3968 + $0xd8] sm:$0xff]
        %v3997 = vld [vmem:[%s3968 + $0xe0] sm:$0xff]
        %v3998 = vld [vmem:[%s3968 + $0xe8] sm:$0xff]
        %v3999 = vld [vmem:[%s3968 + $0xf0] sm:$0xff]
        %v4000 = vld [vmem:[%s3968 + $0xf8] sm:$0xff]
        %v4001 = vld [vmem:[%s3968 + $0x100] sm:$0xff]
        %v4002 = vld [vmem:[%s3968 + $0x108] sm:$0xff]
        %v4003 = vld [vmem:[%s3968 + $0x110] sm:$0xff]
        %v4004 = vld [vmem:[%s3968 + $0x118] sm:$0xff]
        %v4005 = vld [vmem:[%s3968 + $0x120] sm:$0xff]
        %v4006 = vld [vmem:[%s3968 + $0x128] sm:$0xff]
        %v4007 = vld [vmem:[%s3968 + $0x130] sm:$0xff]
        %v4008 = vld [vmem:[%s3968 + $0x138] sm:$0xff]
        %v4009 = vld [vmem:[%s3968 + $0x140] sm:$0xff]
        %v4010 = vld [vmem:[%s3968 + $0x148] sm:$0xff]
        %v4011 = vld [vmem:[%s3968 + $0x150] sm:$0xff]
        %v4012 = vld [vmem:[%s3968 + $0x158] sm:$0xff]
        %v4013 = vld [vmem:[%s3968 + $0x160] sm:$0xff]
        %v4014 = vld [vmem:[%s3968 + $0x168] sm:$0xff]
        %v4015 = vld [vmem:[%s3968 + $0x170] sm:$0xff]
        %v4016 = vld [vmem:[%s3968 + $0x178] sm:$0xff]
        %v4017 = vld [vmem:[%s3968 + $0x180] sm:$0xff]
        %v4018 = vld [vmem:[%s3968 + $0x188] sm:$0xff]
        %v4019 = vld [vmem:[%s3968 + $0x190] sm:$0xff]
        %v4020 = vld [vmem:[%s3968 + $0x198] sm:$0xff]
        %v4021 = vld [vmem:[%s3968 + $0x1a0] sm:$0xff]
        %v4022 = vld [vmem:[%s3968 + $0x1a8] sm:$0xff]
        %v4023 = vld [vmem:[%s3968 + $0x1b0] sm:$0xff]
        %v4024 = vld [vmem:[%s3968 + $0x1b8] sm:$0xff]
        %v4025 = vld [vmem:[%s3968 + $0x1c0] sm:$0xff]
        %v4026 = vld [vmem:[%s3968 + $0x1c8] sm:$0xff]
        %v4027 = vld [vmem:[%s3968 + $0x1d0] sm:$0xff]
        %v4028 = vld [vmem:[%s3968 + $0x1d8] sm:$0xff]
        %v4029 = vld [vmem:[%s3968 + $0x1e0] sm:$0xff]
        %v4030 = vld [vmem:[%s3968 + $0x1e8] sm:$0xff]
        %v4031 = vld [vmem:[%s3968 + $0x1f0] sm:$0xff]
        %v4032 = vld [vmem:[%s3968 + $0x1f8] sm:$0xff]
        %v4033 = vld [vmem:[%s3968 + $0x200] sm:$0xff]
        %v4034 = vld [vmem:[%s3968 + $0x208] sm:$0xff]
        %v4035 = vld [vmem:[%s3968 + $0x210] sm:$0xff]
        %v4036 = vld [vmem:[%s3968 + $0x218] sm:$0xff]
        %v4037 = vld [vmem:[%s3968 + $0x220] sm:$0xff]
        %v4038 = vld [vmem:[%s3968 + $0x228] sm:$0xff]
        %v4039 = vld [vmem:[%s3968 + $0x230] sm:$0xff]
        %v4040 = vld [vmem:[%s3968 + $0x238] sm:$0xff]
        %v4041 = vld [vmem:[%s3968 + $0x240] sm:$0xff]
        %v4042 = vld [vmem:[%s3968 + $0x248] sm:$0xff]
        %v4043 = vld [vmem:[%s3968 + $0x250] sm:$0xff]
        %v4044 = vld [vmem:[%s3968 + $0x258] sm:$0xff]
        %v4045 = vld [vmem:[%s3968 + $0x260] sm:$0xff]
        %v4046 = vld [vmem:[%s3968 + $0x268] sm:$0xff]
        %v4047 = vld [vmem:[%s3968 + $0x270] sm:$0xff]
        %v4048 = vld [vmem:[%s3968 + $0x278] sm:$0xff]
        %v4049 = vld [vmem:[%s3968 + $0x280] sm:$0xff]
        %v4050 = vld [vmem:[%s3968 + $0x288] sm:$0xff]
        %v4051 = vld [vmem:[%s3968 + $0x290] sm:$0xff]
        %v4052 = vld [vmem:[%s3968 + $0x298] sm:$0xff]
        %v4053 = vld [vmem:[%s3968 + $0x2a0] sm:$0xff]
        %v4054 = vld [vmem:[%s3968 + $0x2a8] sm:$0xff]
        %v4055 = vld [vmem:[%s3968 + $0x2b0] sm:$0xff]
        %v4056 = vld [vmem:[%s3968 + $0x2b8] sm:$0xff]
        %v4057 = vld [vmem:[%s3968 + $0x2c0] sm:$0xff]
        %v4058 = vld [vmem:[%s3968 + $0x2c8] sm:$0xff]
        %v4059 = vld [vmem:[%s3968 + $0x2d0] sm:$0xff]
        %v4060 = vld [vmem:[%s3968 + $0x2d8] sm:$0xff]
        %v4061 = vld [vmem:[%s3968 + $0x2e0] sm:$0xff]
        %v4062 = vld [vmem:[%s3968 + $0x2e8] sm:$0xff]
        %v4063 = vld [vmem:[%s3968 + $0x2f0] sm:$0xff]
        %v4064 = vld [vmem:[%s3968 + $0x2f8] sm:$0xff]
        %v4065 = vld [vmem:[%s3968 + $0x300] sm:$0xff]
        %v4066 = vld [vmem:[%s3968 + $0x308] sm:$0xff]
        %v4067 = vld [vmem:[%s3968 + $0x310] sm:$0xff]
        %v4068 = vld [vmem:[%s3968 + $0x318] sm:$0xff]
        %v4069 = vld [vmem:[%s3968 + $0x320] sm:$0xff]
        %v4070 = vld [vmem:[%s3968 + $0x328] sm:$0xff]
        %v4071 = vld [vmem:[%s3968 + $0x330] sm:$0xff]
        %v4072 = vld [vmem:[%s3968 + $0x338] sm:$0xff]
        %v4073 = vld [vmem:[%s3968 + $0x340] sm:$0xff]
        %v4074 = vld [vmem:[%s3968 + $0x348] sm:$0xff]
        %v4075 = vld [vmem:[%s3968 + $0x350] sm:$0xff]
        %v4076 = vld [vmem:[%s3968 + $0x358] sm:$0xff]
        %v4077 = vld [vmem:[%s3968 + $0x360] sm:$0xff]
        %v4078 = vld [vmem:[%s3968 + $0x368] sm:$0xff]
        %v4079 = vld [vmem:[%s3968 + $0x370] sm:$0xff]
        %v4080 = vld [vmem:[%s3968 + $0x378] sm:$0xff]
        %v4081 = vld [vmem:[%s3968 + $0x380] sm:$0xff]
        %v4082 = vld [vmem:[%s3968 + $0x388] sm:$0xff]
        %v4083 = vld [vmem:[%s3968 + $0x390] sm:$0xff]
        %v4084 = vld [vmem:[%s3968 + $0x398] sm:$0xff]
        %v4085 = vld [vmem:[%s3968 + $0x3a0] sm:$0xff]
        %v4086 = vld [vmem:[%s3968 + $0x3a8] sm:$0xff]
        %v4087 = vld [vmem:[%s3968 + $0x3b0] sm:$0xff]
        %v4088 = vld [vmem:[%s3968 + $0x3b8] sm:$0xff]
        %v4089 = vld [vmem:[%s3968 + $0x3c0] sm:$0xff]
        %v4090 = vld [vmem:[%s3968 + $0x3c8] sm:$0xff]
        %v4091 = vld [vmem:[%s3968 + $0x3d0] sm:$0xff]
        %v4092 = vld [vmem:[%s3968 + $0x3d8] sm:$0xff]
        %v4093 = vld [vmem:[%s3968 + $0x3e0] sm:$0xff]
        %v4094 = vld [vmem:[%s3968 + $0x3e8] sm:$0xff]
        %v4095 = vld [vmem:[%s3968 + $0x3f0] sm:$0xff]
        %v4096 = vld [vmem:[%s3968 + $0x3f8] sm:$0xff]
        %s4097 = scalar_lea.vmem [#allocation15], 2
        %v4098 = vld [vmem:[%s4097] sm:$0x3]
        %v4100 = vlaneseq
        %v4101 = vshrl.u32 %v4100, 7
        %v4102 = vsub.s32 0, %v4101
        %v4103 = vrot.slane %v4098, %v4102
        %v4104 = vlaneseq
        %v4105 = vshrl.u32 %v4104, 7
        %v4106 = vsub.s32 1, %v4105
        %v4107 = vrot.slane %v4098, %v4106
        %v4238 = vunpack.c.l.b16 %v3969
        %v4239 = vunpack.c.h.b16 %v3969
        %v4240 = vunpack.c.l.b16 %v3970
        %v4241 = vunpack.c.h.b16 %v3970
        %v4242 = vunpack.c.l.b16 %v3971
        %v4243 = vunpack.c.h.b16 %v3971
        %v4244 = vunpack.c.l.b16 %v3972
        %v4245 = vunpack.c.h.b16 %v3972
        %v4246 = vunpack.c.l.b16 %v3973
        %v4247 = vunpack.c.h.b16 %v3973
        %v4248 = vunpack.c.l.b16 %v3974
        %v4249 = vunpack.c.h.b16 %v3974
        %v4250 = vunpack.c.l.b16 %v3975
        %v4251 = vunpack.c.h.b16 %v3975
        %v4252 = vunpack.c.l.b16 %v3976
        %v4253 = vunpack.c.h.b16 %v3976
        %v4254 = vunpack.c.l.b16 %v3977
        %v4255 = vunpack.c.h.b16 %v3977
        %v4256 = vunpack.c.l.b16 %v3978
        %v4257 = vunpack.c.h.b16 %v3978
        %v4258 = vunpack.c.l.b16 %v3979
        %v4259 = vunpack.c.h.b16 %v3979
        %v4260 = vunpack.c.l.b16 %v3980
        %v4261 = vunpack.c.h.b16 %v3980
        %v4262 = vunpack.c.l.b16 %v3981
        %v4263 = vunpack.c.h.b16 %v3981
        %v4264 = vunpack.c.l.b16 %v3982
        %v4265 = vunpack.c.h.b16 %v3982
        %v4266 = vunpack.c.l.b16 %v3983
        %v4267 = vunpack.c.h.b16 %v3983
        %v4268 = vunpack.c.l.b16 %v3984
        %v4269 = vunpack.c.h.b16 %v3984
        %v4270 = vunpack.c.l.b16 %v3985
        %v4271 = vunpack.c.h.b16 %v3985
        %v4272 = vunpack.c.l.b16 %v3986
        %v4273 = vunpack.c.h.b16 %v3986
        %v4274 = vunpack.c.l.b16 %v3987
        %v4275 = vunpack.c.h.b16 %v3987
        %v4276 = vunpack.c.l.b16 %v3988
        %v4277 = vunpack.c.h.b16 %v3988
        %v4278 = vunpack.c.l.b16 %v3989
        %v4279 = vunpack.c.h.b16 %v3989
        %v4280 = vunpack.c.l.b16 %v3990
        %v4281 = vunpack.c.h.b16 %v3990
        %v4282 = vunpack.c.l.b16 %v3991
        %v4283 = vunpack.c.h.b16 %v3991
        %v4284 = vunpack.c.l.b16 %v3992
        %v4285 = vunpack.c.h.b16 %v3992
        %v4286 = vunpack.c.l.b16 %v3993
        %v4287 = vunpack.c.h.b16 %v3993
        %v4288 = vunpack.c.l.b16 %v3994
        %v4289 = vunpack.c.h.b16 %v3994
        %v4290 = vunpack.c.l.b16 %v3995
        %v4291 = vunpack.c.h.b16 %v3995
        %v4292 = vunpack.c.l.b16 %v3996
        %v4293 = vunpack.c.h.b16 %v3996
        %v4294 = vunpack.c.l.b16 %v3997
        %v4295 = vunpack.c.h.b16 %v3997
        %v4296 = vunpack.c.l.b16 %v3998
        %v4297 = vunpack.c.h.b16 %v3998
        %v4298 = vunpack.c.l.b16 %v3999
        %v4299 = vunpack.c.h.b16 %v3999
        %v4300 = vunpack.c.l.b16 %v4000
        %v4301 = vunpack.c.h.b16 %v4000
        %v4302 = vunpack.c.l.b16 %v4001
        %v4303 = vunpack.c.h.b16 %v4001
        %v4304 = vunpack.c.l.b16 %v4002
        %v4305 = vunpack.c.h.b16 %v4002
        %v4306 = vunpack.c.l.b16 %v4003
        %v4307 = vunpack.c.h.b16 %v4003
        %v4308 = vunpack.c.l.b16 %v4004
        %v4309 = vunpack.c.h.b16 %v4004
        %v4310 = vunpack.c.l.b16 %v4005
        %v4311 = vunpack.c.h.b16 %v4005
        %v4312 = vunpack.c.l.b16 %v4006
        %v4313 = vunpack.c.h.b16 %v4006
        %v4314 = vunpack.c.l.b16 %v4007
        %v4315 = vunpack.c.h.b16 %v4007
        %v4316 = vunpack.c.l.b16 %v4008
        %v4317 = vunpack.c.h.b16 %v4008
        %v4318 = vunpack.c.l.b16 %v4009
        %v4319 = vunpack.c.h.b16 %v4009
        %v4320 = vunpack.c.l.b16 %v4010
        %v4321 = vunpack.c.h.b16 %v4010
        %v4322 = vunpack.c.l.b16 %v4011
        %v4323 = vunpack.c.h.b16 %v4011
        %v4324 = vunpack.c.l.b16 %v4012
        %v4325 = vunpack.c.h.b16 %v4012
        %v4326 = vunpack.c.l.b16 %v4013
        %v4327 = vunpack.c.h.b16 %v4013
        %v4328 = vunpack.c.l.b16 %v4014
        %v4329 = vunpack.c.h.b16 %v4014
        %v4330 = vunpack.c.l.b16 %v4015
        %v4331 = vunpack.c.h.b16 %v4015
        %v4332 = vunpack.c.l.b16 %v4016
        %v4333 = vunpack.c.h.b16 %v4016
        %v4334 = vunpack.c.l.b16 %v4017
        %v4335 = vunpack.c.h.b16 %v4017
        %v4336 = vunpack.c.l.b16 %v4018
        %v4337 = vunpack.c.h.b16 %v4018
        %v4338 = vunpack.c.l.b16 %v4019
        %v4339 = vunpack.c.h.b16 %v4019
        %v4340 = vunpack.c.l.b16 %v4020
        %v4341 = vunpack.c.h.b16 %v4020
        %v4342 = vunpack.c.l.b16 %v4021
        %v4343 = vunpack.c.h.b16 %v4021
        %v4344 = vunpack.c.l.b16 %v4022
        %v4345 = vunpack.c.h.b16 %v4022
        %v4346 = vunpack.c.l.b16 %v4023
        %v4347 = vunpack.c.h.b16 %v4023
        %v4348 = vunpack.c.l.b16 %v4024
        %v4349 = vunpack.c.h.b16 %v4024
        %v4350 = vunpack.c.l.b16 %v4025
        %v4351 = vunpack.c.h.b16 %v4025
        %v4352 = vunpack.c.l.b16 %v4026
        %v4353 = vunpack.c.h.b16 %v4026
        %v4354 = vunpack.c.l.b16 %v4027
        %v4355 = vunpack.c.h.b16 %v4027
        %v4356 = vunpack.c.l.b16 %v4028
        %v4357 = vunpack.c.h.b16 %v4028
        %v4358 = vunpack.c.l.b16 %v4029
        %v4359 = vunpack.c.h.b16 %v4029
        %v4360 = vunpack.c.l.b16 %v4030
        %v4361 = vunpack.c.h.b16 %v4030
        %v4362 = vunpack.c.l.b16 %v4031
        %v4363 = vunpack.c.h.b16 %v4031
        %v4364 = vunpack.c.l.b16 %v4032
        %v4365 = vunpack.c.h.b16 %v4032
        %v4366 = vunpack.c.l.b16 %v4033
        %v4367 = vunpack.c.h.b16 %v4033
        %v4368 = vunpack.c.l.b16 %v4034
        %v4369 = vunpack.c.h.b16 %v4034
        %v4370 = vunpack.c.l.b16 %v4035
        %v4371 = vunpack.c.h.b16 %v4035
        %v4372 = vunpack.c.l.b16 %v4036
        %v4373 = vunpack.c.h.b16 %v4036
        %v4374 = vunpack.c.l.b16 %v4037
        %v4375 = vunpack.c.h.b16 %v4037
        %v4376 = vunpack.c.l.b16 %v4038
        %v4377 = vunpack.c.h.b16 %v4038
        %v4378 = vunpack.c.l.b16 %v4039
        %v4379 = vunpack.c.h.b16 %v4039
        %v4380 = vunpack.c.l.b16 %v4040
        %v4381 = vunpack.c.h.b16 %v4040
        %v4382 = vunpack.c.l.b16 %v4041
        %v4383 = vunpack.c.h.b16 %v4041
        %v4384 = vunpack.c.l.b16 %v4042
        %v4385 = vunpack.c.h.b16 %v4042
        %v4386 = vunpack.c.l.b16 %v4043
        %v4387 = vunpack.c.h.b16 %v4043
        %v4388 = vunpack.c.l.b16 %v4044
        %v4389 = vunpack.c.h.b16 %v4044
        %v4390 = vunpack.c.l.b16 %v4045
        %v4391 = vunpack.c.h.b16 %v4045
        %v4392 = vunpack.c.l.b16 %v4046
        %v4393 = vunpack.c.h.b16 %v4046
        %v4394 = vunpack.c.l.b16 %v4047
        %v4395 = vunpack.c.h.b16 %v4047
        %v4396 = vunpack.c.l.b16 %v4048
        %v4397 = vunpack.c.h.b16 %v4048
        %v4398 = vunpack.c.l.b16 %v4049
        %v4399 = vunpack.c.h.b16 %v4049
        %v4400 = vunpack.c.l.b16 %v4050
        %v4401 = vunpack.c.h.b16 %v4050
        %v4402 = vunpack.c.l.b16 %v4051
        %v4403 = vunpack.c.h.b16 %v4051
        %v4404 = vunpack.c.l.b16 %v4052
        %v4405 = vunpack.c.h.b16 %v4052
        %v4406 = vunpack.c.l.b16 %v4053
        %v4407 = vunpack.c.h.b16 %v4053
        %v4408 = vunpack.c.l.b16 %v4054
        %v4409 = vunpack.c.h.b16 %v4054
        %v4410 = vunpack.c.l.b16 %v4055
        %v4411 = vunpack.c.h.b16 %v4055
        %v4412 = vunpack.c.l.b16 %v4056
        %v4413 = vunpack.c.h.b16 %v4056
        %v4414 = vunpack.c.l.b16 %v4057
        %v4415 = vunpack.c.h.b16 %v4057
        %v4416 = vunpack.c.l.b16 %v4058
        %v4417 = vunpack.c.h.b16 %v4058
        %v4418 = vunpack.c.l.b16 %v4059
        %v4419 = vunpack.c.h.b16 %v4059
        %v4420 = vunpack.c.l.b16 %v4060
        %v4421 = vunpack.c.h.b16 %v4060
        %v4422 = vunpack.c.l.b16 %v4061
        %v4423 = vunpack.c.h.b16 %v4061
        %v4424 = vunpack.c.l.b16 %v4062
        %v4425 = vunpack.c.h.b16 %v4062
        %v4426 = vunpack.c.l.b16 %v4063
        %v4427 = vunpack.c.h.b16 %v4063
        %v4428 = vunpack.c.l.b16 %v4064
        %v4429 = vunpack.c.h.b16 %v4064
        %v4430 = vunpack.c.l.b16 %v4065
        %v4431 = vunpack.c.h.b16 %v4065
        %v4432 = vunpack.c.l.b16 %v4066
        %v4433 = vunpack.c.h.b16 %v4066
        %v4434 = vunpack.c.l.b16 %v4067
        %v4435 = vunpack.c.h.b16 %v4067
        %v4436 = vunpack.c.l.b16 %v4068
        %v4437 = vunpack.c.h.b16 %v4068
        %v4438 = vunpack.c.l.b16 %v4069
        %v4439 = vunpack.c.h.b16 %v4069
        %v4440 = vunpack.c.l.b16 %v4070
        %v4441 = vunpack.c.h.b16 %v4070
        %v4442 = vunpack.c.l.b16 %v4071
        %v4443 = vunpack.c.h.b16 %v4071
        %v4444 = vunpack.c.l.b16 %v4072
        %v4445 = vunpack.c.h.b16 %v4072
        %v4446 = vunpack.c.l.b16 %v4073
        %v4447 = vunpack.c.h.b16 %v4073
        %v4448 = vunpack.c.l.b16 %v4074
        %v4449 = vunpack.c.h.b16 %v4074
        %v4450 = vunpack.c.l.b16 %v4075
        %v4451 = vunpack.c.h.b16 %v4075
        %v4452 = vunpack.c.l.b16 %v4076
        %v4453 = vunpack.c.h.b16 %v4076
        %v4454 = vunpack.c.l.b16 %v4077
        %v4455 = vunpack.c.h.b16 %v4077
        %v4456 = vunpack.c.l.b16 %v4078
        %v4457 = vunpack.c.h.b16 %v4078
        %v4458 = vunpack.c.l.b16 %v4079
        %v4459 = vunpack.c.h.b16 %v4079
        %v4460 = vunpack.c.l.b16 %v4080
        %v4461 = vunpack.c.h.b16 %v4080
        %v4462 = vunpack.c.l.b16 %v4081
        %v4463 = vunpack.c.h.b16 %v4081
        %v4464 = vunpack.c.l.b16 %v4082
        %v4465 = vunpack.c.h.b16 %v4082
        %v4466 = vunpack.c.l.b16 %v4083
        %v4467 = vunpack.c.h.b16 %v4083
        %v4468 = vunpack.c.l.b16 %v4084
        %v4469 = vunpack.c.h.b16 %v4084
        %v4470 = vunpack.c.l.b16 %v4085
        %v4471 = vunpack.c.h.b16 %v4085
        %v4472 = vunpack.c.l.b16 %v4086
        %v4473 = vunpack.c.h.b16 %v4086
        %v4474 = vunpack.c.l.b16 %v4087
        %v4475 = vunpack.c.h.b16 %v4087
        %v4476 = vunpack.c.l.b16 %v4088
        %v4477 = vunpack.c.h.b16 %v4088
        %v4478 = vunpack.c.l.b16 %v4089
        %v4479 = vunpack.c.h.b16 %v4089
        %v4480 = vunpack.c.l.b16 %v4090
        %v4481 = vunpack.c.h.b16 %v4090
        %v4482 = vunpack.c.l.b16 %v4091
        %v4483 = vunpack.c.h.b16 %v4091
        %v4484 = vunpack.c.l.b16 %v4092
        %v4485 = vunpack.c.h.b16 %v4092
        %v4486 = vunpack.c.l.b16 %v4093
        %v4487 = vunpack.c.h.b16 %v4093
        %v4488 = vunpack.c.l.b16 %v4094
        %v4489 = vunpack.c.h.b16 %v4094
        %v4490 = vunpack.c.l.b16 %v4095
        %v4491 = vunpack.c.h.b16 %v4095
        %v4492 = vunpack.c.l.b16 %v4096
        %v4493 = vunpack.c.h.b16 %v4096
        %v4494 = vpack.c.b16 %v4240, %v4238
        %v4495 = vpack.c.b16 %v4241, %v4239
        %v4496 = vpack.c.b16 %v4244, %v4242
        %v4497 = vpack.c.b16 %v4245, %v4243
        %v4498 = vpack.c.b16 %v4248, %v4246
        %v4499 = vpack.c.b16 %v4249, %v4247
        %v4500 = vpack.c.b16 %v4252, %v4250
        %v4501 = vpack.c.b16 %v4253, %v4251
        %v4502 = vpack.c.b16 %v4256, %v4254
        %v4503 = vpack.c.b16 %v4257, %v4255
        %v4504 = vpack.c.b16 %v4260, %v4258
        %v4505 = vpack.c.b16 %v4261, %v4259
        %v4506 = vpack.c.b16 %v4264, %v4262
        %v4507 = vpack.c.b16 %v4265, %v4263
        %v4508 = vpack.c.b16 %v4268, %v4266
        %v4509 = vpack.c.b16 %v4269, %v4267
        %v4510 = vpack.c.b16 %v4272, %v4270
        %v4511 = vpack.c.b16 %v4273, %v4271
        %v4512 = vpack.c.b16 %v4276, %v4274
        %v4513 = vpack.c.b16 %v4277, %v4275
        %v4514 = vpack.c.b16 %v4280, %v4278
        %v4515 = vpack.c.b16 %v4281, %v4279
        %v4516 = vpack.c.b16 %v4284, %v4282
        %v4517 = vpack.c.b16 %v4285, %v4283
        %v4518 = vpack.c.b16 %v4288, %v4286
        %v4519 = vpack.c.b16 %v4289, %v4287
        %v4520 = vpack.c.b16 %v4292, %v4290
        %v4521 = vpack.c.b16 %v4293, %v4291
        %v4522 = vpack.c.b16 %v4296, %v4294
        %v4523 = vpack.c.b16 %v4297, %v4295
        %v4524 = vpack.c.b16 %v4300, %v4298
        %v4525 = vpack.c.b16 %v4301, %v4299
        %v4526 = vpack.c.b16 %v4304, %v4302
        %v4527 = vpack.c.b16 %v4305, %v4303
        %v4528 = vpack.c.b16 %v4308, %v4306
        %v4529 = vpack.c.b16 %v4309, %v4307
        %v4530 = vpack.c.b16 %v4312, %v4310
        %v4531 = vpack.c.b16 %v4313, %v4311
        %v4532 = vpack.c.b16 %v4316, %v4314
        %v4533 = vpack.c.b16 %v4317, %v4315
        %v4534 = vpack.c.b16 %v4320, %v4318
        %v4535 = vpack.c.b16 %v4321, %v4319
        %v4536 = vpack.c.b16 %v4324, %v4322
        %v4537 = vpack.c.b16 %v4325, %v4323
        %v4538 = vpack.c.b16 %v4328, %v4326
        %v4539 = vpack.c.b16 %v4329, %v4327
        %v4540 = vpack.c.b16 %v4332, %v4330
        %v4541 = vpack.c.b16 %v4333, %v4331
        %v4542 = vpack.c.b16 %v4336, %v4334
        %v4543 = vpack.c.b16 %v4337, %v4335
        %v4544 = vpack.c.b16 %v4340, %v4338
        %v4545 = vpack.c.b16 %v4341, %v4339
        %v4546 = vpack.c.b16 %v4344, %v4342
        %v4547 = vpack.c.b16 %v4345, %v4343
        %v4548 = vpack.c.b16 %v4348, %v4346
        %v4549 = vpack.c.b16 %v4349, %v4347
        %v4550 = vpack.c.b16 %v4352, %v4350
        %v4551 = vpack.c.b16 %v4353, %v4351
        %v4552 = vpack.c.b16 %v4356, %v4354
        %v4553 = vpack.c.b16 %v4357, %v4355
        %v4554 = vpack.c.b16 %v4360, %v4358
        %v4555 = vpack.c.b16 %v4361, %v4359
        %v4556 = vpack.c.b16 %v4364, %v4362
        %v4557 = vpack.c.b16 %v4365, %v4363
        %v4558 = vpack.c.b16 %v4368, %v4366
        %v4559 = vpack.c.b16 %v4369, %v4367
        %v4560 = vpack.c.b16 %v4372, %v4370
        %v4561 = vpack.c.b16 %v4373, %v4371
        %v4562 = vpack.c.b16 %v4376, %v4374
        %v4563 = vpack.c.b16 %v4377, %v4375
        %v4564 = vpack.c.b16 %v4380, %v4378
        %v4565 = vpack.c.b16 %v4381, %v4379
        %v4566 = vpack.c.b16 %v4384, %v4382
        %v4567 = vpack.c.b16 %v4385, %v4383
        %v4568 = vpack.c.b16 %v4388, %v4386
        %v4569 = vpack.c.b16 %v4389, %v4387
        %v4570 = vpack.c.b16 %v4392, %v4390
        %v4571 = vpack.c.b16 %v4393, %v4391
        %v4572 = vpack.c.b16 %v4396, %v4394
        %v4573 = vpack.c.b16 %v4397, %v4395
        %v4574 = vpack.c.b16 %v4400, %v4398
        %v4575 = vpack.c.b16 %v4401, %v4399
        %v4576 = vpack.c.b16 %v4404, %v4402
        %v4577 = vpack.c.b16 %v4405, %v4403
        %v4578 = vpack.c.b16 %v4408, %v4406
        %v4579 = vpack.c.b16 %v4409, %v4407
        %v4580 = vpack.c.b16 %v4412, %v4410
        %v4581 = vpack.c.b16 %v4413, %v4411
        %v4582 = vpack.c.b16 %v4416, %v4414
        %v4583 = vpack.c.b16 %v4417, %v4415
        %v4584 = vpack.c.b16 %v4420, %v4418
        %v4585 = vpack.c.b16 %v4421, %v4419
        %v4586 = vpack.c.b16 %v4424, %v4422
        %v4587 = vpack.c.b16 %v4425, %v4423
        %v4588 = vpack.c.b16 %v4428, %v4426
        %v4589 = vpack.c.b16 %v4429, %v4427
        %v4590 = vpack.c.b16 %v4432, %v4430
        %v4591 = vpack.c.b16 %v4433, %v4431
        %v4592 = vpack.c.b16 %v4436, %v4434
        %v4593 = vpack.c.b16 %v4437, %v4435
        %v4594 = vpack.c.b16 %v4440, %v4438
        %v4595 = vpack.c.b16 %v4441, %v4439
        %v4596 = vpack.c.b16 %v4444, %v4442
        %v4597 = vpack.c.b16 %v4445, %v4443
        %v4598 = vpack.c.b16 %v4448, %v4446
        %v4599 = vpack.c.b16 %v4449, %v4447
        %v4600 = vpack.c.b16 %v4452, %v4450
        %v4601 = vpack.c.b16 %v4453, %v4451
        %v4602 = vpack.c.b16 %v4456, %v4454
        %v4603 = vpack.c.b16 %v4457, %v4455
        %v4604 = vpack.c.b16 %v4460, %v4458
        %v4605 = vpack.c.b16 %v4461, %v4459
        %v4606 = vpack.c.b16 %v4464, %v4462
        %v4607 = vpack.c.b16 %v4465, %v4463
        %v4608 = vpack.c.b16 %v4468, %v4466
        %v4609 = vpack.c.b16 %v4469, %v4467
        %v4610 = vpack.c.b16 %v4472, %v4470
        %v4611 = vpack.c.b16 %v4473, %v4471
        %v4612 = vpack.c.b16 %v4476, %v4474
        %v4613 = vpack.c.b16 %v4477, %v4475
        %v4614 = vpack.c.b16 %v4480, %v4478
        %v4615 = vpack.c.b16 %v4481, %v4479
        %v4616 = vpack.c.b16 %v4484, %v4482
        %v4617 = vpack.c.b16 %v4485, %v4483
        %v4618 = vpack.c.b16 %v4488, %v4486
        %v4619 = vpack.c.b16 %v4489, %v4487
        %v4620 = vpack.c.b16 %v4492, %v4490
        %v4621 = vpack.c.b16 %v4493, %v4491
        %4750 = vmatprep.subr.bf16.mxu0 %v4509
        %4751 = vmatpush1.bf16.msra.mxu0 %v4508
        %4752 = vmatprep.subr.bf16.mxu0 %v4507
        %4753 = vmatpush1.bf16.msra.mxu0 %v4506
        %4754 = vmatprep.subr.bf16.mxu0 %v4505
        %4755 = vmatpush1.bf16.msra.mxu0 %v4504
        %4756 = vmatprep.subr.bf16.mxu0 %v4503
        %4757 = vmatpush1.bf16.msra.mxu0 %v4502
        %4758 = vmatprep.subr.bf16.mxu0 %v4501
        %4759 = vmatpush1.bf16.msra.mxu0 %v4500
        %4760 = vmatprep.subr.bf16.mxu0 %v4499
        %4761 = vmatpush1.bf16.msra.mxu0 %v4498
        %4762 = vmatprep.subr.bf16.mxu0 %v4497
        %4763 = vmatpush1.bf16.msra.mxu0 %v4496
        %4764 = vmatprep.subr.bf16.mxu0 %v4495
        %4765 = vmatpush1.bf16.msra.mxu0 %v4494
        %4766 = vmatprep.subr.bf16.mxu0 %v4525
        %4767 = vmatpush2.bf16.msra.mxu0 %v4524
        %4768 = vmatprep.subr.bf16.mxu0 %v4523
        %4769 = vmatpush2.bf16.msra.mxu0 %v4522
        %4770 = vmatprep.subr.bf16.mxu0 %v4521
        %4771 = vmatpush2.bf16.msra.mxu0 %v4520
        %4772 = vmatprep.subr.bf16.mxu0 %v4519
        %4773 = vmatpush2.bf16.msra.mxu0 %v4518
        %4774 = vmatprep.subr.bf16.mxu0 %v4517
        %4775 = vmatpush2.bf16.msra.mxu0 %v4516
        %4776 = vmatprep.subr.bf16.mxu0 %v4515
        %4777 = vmatpush2.bf16.msra.mxu0 %v4514
        %4778 = vmatprep.subr.bf16.mxu0 %v4513
        %4779 = vmatpush2.bf16.msra.mxu0 %v4512
        %4780 = vmatprep.subr.bf16.mxu0 %v4511
        %4781 = vmatpush2.bf16.msra.mxu0 %v4510
        %4782 = vmatprep.mubr.bf16.mxu0 %v3961
        %4783 = vmatmul.mubr.bf16.gmra.mxu0 %v3960
        %v4784 = vpop.f32.mrf.mxu0
        %v4785 = vadd.f32 %v4103, %v4784
        %v4786 = vpop.f32.mrf.mxu0
        %v4787 = vadd.f32 %v4107, %v4786
        %v4788 = vpop.f32.mrf.mxu0
        %v4789 = vpop.f32.mrf.mxu0
        %4790 = vdwg.mxu0
        %4791 = vmatprep.subr.bf16.mxu0 %v4541
        %4792 = vmatpush1.bf16.msra.mxu0 %v4540
        %4793 = vmatprep.subr.bf16.mxu0 %v4539
        %4794 = vmatpush1.bf16.msra.mxu0 %v4538
        %4795 = vmatprep.subr.bf16.mxu0 %v4537
        %4796 = vmatpush1.bf16.msra.mxu0 %v4536
        %4797 = vmatprep.subr.bf16.mxu0 %v4535
        %4798 = vmatpush1.bf16.msra.mxu0 %v4534
        %4799 = vmatprep.subr.bf16.mxu0 %v4533
        %4800 = vmatpush1.bf16.msra.mxu0 %v4532
        %4801 = vmatprep.subr.bf16.mxu0 %v4531
        %4802 = vmatpush1.bf16.msra.mxu0 %v4530
        %4803 = vmatprep.subr.bf16.mxu0 %v4529
        %4804 = vmatpush1.bf16.msra.mxu0 %v4528
        %4805 = vmatprep.subr.bf16.mxu0 %v4527
        %4806 = vmatpush1.bf16.msra.mxu0 %v4526
        %4807 = vmatprep.subr.bf16.mxu0 %v4557
        %4808 = vmatpush2.bf16.msra.mxu0 %v4556
        %4809 = vmatprep.subr.bf16.mxu0 %v4555
        %4810 = vmatpush2.bf16.msra.mxu0 %v4554
        %4811 = vmatprep.subr.bf16.mxu0 %v4553
        %4812 = vmatpush2.bf16.msra.mxu0 %v4552
        %4813 = vmatprep.subr.bf16.mxu0 %v4551
        %4814 = vmatpush2.bf16.msra.mxu0 %v4550
        %4815 = vmatprep.subr.bf16.mxu0 %v4549
        %4816 = vmatpush2.bf16.msra.mxu0 %v4548
        %4817 = vmatprep.subr.bf16.mxu0 %v4547
        %4818 = vmatpush2.bf16.msra.mxu0 %v4546
        %4819 = vmatprep.subr.bf16.mxu0 %v4545
        %4820 = vmatpush2.bf16.msra.mxu0 %v4544
        %4821 = vmatprep.subr.bf16.mxu0 %v4543
        %4822 = vmatpush2.bf16.msra.mxu0 %v4542
        %4823 = vmatprep.mubr.bf16.mxu0 %v3963
        %4824 = vmatmul.mubr.bf16.gmra.mxu0 %v3962
        %v4825 = vpop.f32.mrf.mxu0
        %v4826 = vadd.f32 %v4785, %v4825
        %v4827 = vpop.f32.mrf.mxu0
        %v4828 = vadd.f32 %v4787, %v4827
        %v4829 = vpop.f32.mrf.mxu0
        %v4830 = vpop.f32.mrf.mxu0
        %4831 = vdwg.mxu0
        %4832 = vmatprep.subr.bf16.mxu0 %v4573
        %4833 = vmatpush1.bf16.msra.mxu0 %v4572
        %4834 = vmatprep.subr.bf16.mxu0 %v4571
        %4835 = vmatpush1.bf16.msra.mxu0 %v4570
        %4836 = vmatprep.subr.bf16.mxu0 %v4569
        %4837 = vmatpush1.bf16.msra.mxu0 %v4568
        %4838 = vmatprep.subr.bf16.mxu0 %v4567
        %4839 = vmatpush1.bf16.msra.mxu0 %v4566
        %4840 = vmatprep.subr.bf16.mxu0 %v4565
        %4841 = vmatpush1.bf16.msra.mxu0 %v4564
        %4842 = vmatprep.subr.bf16.mxu0 %v4563
        %4843 = vmatpush1.bf16.msra.mxu0 %v4562
        %4844 = vmatprep.subr.bf16.mxu0 %v4561
        %4845 = vmatpush1.bf16.msra.mxu0 %v4560
        %4846 = vmatprep.subr.bf16.mxu0 %v4559
        %4847 = vmatpush1.bf16.msra.mxu0 %v4558
        %4848 = vmatprep.subr.bf16.mxu0 %v4589
        %4849 = vmatpush2.bf16.msra.mxu0 %v4588
        %4850 = vmatprep.subr.bf16.mxu0 %v4587
        %4851 = vmatpush2.bf16.msra.mxu0 %v4586
        %4852 = vmatprep.subr.bf16.mxu0 %v4585
        %4853 = vmatpush2.bf16.msra.mxu0 %v4584
        %4854 = vmatprep.subr.bf16.mxu0 %v4583
        %4855 = vmatpush2.bf16.msra.mxu0 %v4582
        %4856 = vmatprep.subr.bf16.mxu0 %v4581
        %4857 = vmatpush2.bf16.msra.mxu0 %v4580
        %4858 = vmatprep.subr.bf16.mxu0 %v4579
        %4859 = vmatpush2.bf16.msra.mxu0 %v4578
        %4860 = vmatprep.subr.bf16.mxu0 %v4577
        %4861 = vmatpush2.bf16.msra.mxu0 %v4576
        %4862 = vmatprep.subr.bf16.mxu0 %v4575
        %4863 = vmatpush2.bf16.msra.mxu0 %v4574
        %4864 = vmatprep.mubr.bf16.mxu0 %v3965
        %4865 = vmatmul.mubr.bf16.gmra.mxu0 %v3964
        %v4866 = vpop.f32.mrf.mxu0
        %v4867 = vadd.f32 %v4826, %v4866
        %v4868 = vpop.f32.mrf.mxu0
        %v4869 = vadd.f32 %v4828, %v4868
        %v4870 = vpop.f32.mrf.mxu0
        %v4871 = vpop.f32.mrf.mxu0
        %4872 = vdwg.mxu0
        %4873 = vmatprep.subr.bf16.mxu0 %v4605
        %4874 = vmatpush1.bf16.msra.mxu0 %v4604
        %4875 = vmatprep.subr.bf16.mxu0 %v4603
        %4876 = vmatpush1.bf16.msra.mxu0 %v4602
        %4877 = vmatprep.subr.bf16.mxu0 %v4601
        %4878 = vmatpush1.bf16.msra.mxu0 %v4600
        %4879 = vmatprep.subr.bf16.mxu0 %v4599
        %4880 = vmatpush1.bf16.msra.mxu0 %v4598
        %4881 = vmatprep.subr.bf16.mxu0 %v4597
        %4882 = vmatpush1.bf16.msra.mxu0 %v4596
        %4883 = vmatprep.subr.bf16.mxu0 %v4595
        %4884 = vmatpush1.bf16.msra.mxu0 %v4594
        %4885 = vmatprep.subr.bf16.mxu0 %v4593
        %4886 = vmatpush1.bf16.msra.mxu0 %v4592
        %4887 = vmatprep.subr.bf16.mxu0 %v4591
        %4888 = vmatpush1.bf16.msra.mxu0 %v4590
        %4889 = vmatprep.subr.bf16.mxu0 %v4621
        %4890 = vmatpush2.bf16.msra.mxu0 %v4620
        %4891 = vmatprep.subr.bf16.mxu0 %v4619
        %4892 = vmatpush2.bf16.msra.mxu0 %v4618
        %4893 = vmatprep.subr.bf16.mxu0 %v4617
        %4894 = vmatpush2.bf16.msra.mxu0 %v4616
        %4895 = vmatprep.subr.bf16.mxu0 %v4615
        %4896 = vmatpush2.bf16.msra.mxu0 %v4614
        %4897 = vmatprep.subr.bf16.mxu0 %v4613
        %4898 = vmatpush2.bf16.msra.mxu0 %v4612
        %4899 = vmatprep.subr.bf16.mxu0 %v4611
        %4900 = vmatpush2.bf16.msra.mxu0 %v4610
        %4901 = vmatprep.subr.bf16.mxu0 %v4609
        %4902 = vmatpush2.bf16.msra.mxu0 %v4608
        %4903 = vmatprep.subr.bf16.mxu0 %v4607
        %4904 = vmatpush2.bf16.msra.mxu0 %v4606
        %4905 = vmatprep.mubr.bf16.mxu0 %v3967
        %4906 = vmatmul.mubr.bf16.gmra.mxu0 %v3966
        %v4907 = vpop.f32.mrf.mxu0
        %v4908 = vadd.f32 %v4867, %v4907
        %v4909 = vpop.f32.mrf.mxu0
        %v4910 = vadd.f32 %v4869, %v4909
        %v4911 = vpop.f32.mrf.mxu0
        %v4912 = vpop.f32.mrf.mxu0
        %4913 = vdwg.mxu0
        %v4914 = vadd.f32 %v2902, %v4908
        %v4915 = vadd.f32 %v2903, %v4910
        %v4916 = vadd.f32 %v4914, %v4915
        %4917 = vadd.xlane.f32.xlu0 %v4916
        %v4918 = vpop.xlane.xlu0 %4917
        %v4919 = vmul.f32 %v4918, %v2862
        %v4920 = vsub.f32 %v4914, %v4919
        %v4921 = vsub.f32 %v4915, %v4919
        %v4922 = vmul.f32 %v4920, %v4920
        %v4923 = vmul.f32 %v4921, %v4921
        %v4924 = vadd.f32 %v4922, %v4923
        %4925 = vadd.xlane.f32.xlu0 %v4924
        %v4926 = vpop.xlane.xlu0 %4925
        %v4927 = vmul.f32 %v4926, %v2862
        %v4928 = vadd.f32 %v4927, 1e-05
        %v4929 = vrsqrt.pop %v4928
        %v4930 = vmul.f32 %v4920, %v4929
        %v4931 = vmul.f32 %v4921, %v4929
        %s4932 = scalar_lea.vmem [#allocation16], 2
        %v4933 = vld [vmem:[%s4932] sm:$0x3]
        %v4935 = vlaneseq
        %v4936 = vshrl.u32 %v4935, 7
        %v4937 = vsub.s32 0, %v4936
        %v4938 = vrot.slane %v4933, %v4937
        %v4939 = vlaneseq
        %v4940 = vshrl.u32 %v4939, 7
        %v4941 = vsub.s32 1, %v4940
        %v4942 = vrot.slane %v4933, %v4941
        %v4945 = vmul.f32 %v4930, %v4938
        %v4946 = vmul.f32 %v4931, %v4942
        %s4947 = scalar_lea.vmem [#allocation18], 2
        %v4948 = vld [vmem:[%s4947] sm:$0x3]
        %v4950 = vlaneseq
        %v4951 = vshrl.u32 %v4950, 7
        %v4952 = vsub.s32 0, %v4951
        %v4953 = vrot.slane %v4948, %v4952
        %v4954 = vlaneseq
        %v4955 = vshrl.u32 %v4954, 7
        %v4956 = vsub.s32 1, %v4955
        %v4957 = vrot.slane %v4948, %v4956
        %v4960 = vadd.f32 %v4945, %v4953
        %v4961 = vadd.f32 %v4946, %v4957
        %s4962 = sld [smem:[#allocation2 + $0x2]]
        %v4963 = vstv %s4962
        %v4964 = vmul.f32 %v4963, %v4960
        %v4965 = vmul.f32 %v4963, %v4961
        %v4966 = vadd.f32 %v2908, %v4964
        %v4967 = vadd.f32 %v2909, %v4965
        %v4968 = vpack.c.bf16 %v4960, %v4960
        %v4969 = vpack.c.bf16 %v4961, %v4961
        %s4970 = scalar_lea.vmem [#allocation10], 2048
        %v4971 = vld [vmem:[%s4970] sm:$0xff]
        %v4972 = vld [vmem:[%s4970 + $0x8] sm:$0xff]
        %v4973 = vld [vmem:[%s4970 + $0x10] sm:$0xff]
        %v4974 = vld [vmem:[%s4970 + $0x18] sm:$0xff]
        %v4975 = vld [vmem:[%s4970 + $0x20] sm:$0xff]
        %v4976 = vld [vmem:[%s4970 + $0x28] sm:$0xff]
        %v4977 = vld [vmem:[%s4970 + $0x30] sm:$0xff]
        %v4978 = vld [vmem:[%s4970 + $0x38] sm:$0xff]
        %v4979 = vld [vmem:[%s4970 + $0x40] sm:$0xff]
        %v4980 = vld [vmem:[%s4970 + $0x48] sm:$0xff]
        %v4981 = vld [vmem:[%s4970 + $0x50] sm:$0xff]
        %v4982 = vld [vmem:[%s4970 + $0x58] sm:$0xff]
        %v4983 = vld [vmem:[%s4970 + $0x60] sm:$0xff]
        %v4984 = vld [vmem:[%s4970 + $0x68] sm:$0xff]
        %v4985 = vld [vmem:[%s4970 + $0x70] sm:$0xff]
        %v4986 = vld [vmem:[%s4970 + $0x78] sm:$0xff]
        %v4987 = vld [vmem:[%s4970 + $0x80] sm:$0xff]
        %v4988 = vld [vmem:[%s4970 + $0x88] sm:$0xff]
        %v4989 = vld [vmem:[%s4970 + $0x90] sm:$0xff]
        %v4990 = vld [vmem:[%s4970 + $0x98] sm:$0xff]
        %v4991 = vld [vmem:[%s4970 + $0xa0] sm:$0xff]
        %v4992 = vld [vmem:[%s4970 + $0xa8] sm:$0xff]
        %v4993 = vld [vmem:[%s4970 + $0xb0] sm:$0xff]
        %v4994 = vld [vmem:[%s4970 + $0xb8] sm:$0xff]
        %v4995 = vld [vmem:[%s4970 + $0xc0] sm:$0xff]
        %v4996 = vld [vmem:[%s4970 + $0xc8] sm:$0xff]
        %v4997 = vld [vmem:[%s4970 + $0xd0] sm:$0xff]
        %v4998 = vld [vmem:[%s4970 + $0xd8] sm:$0xff]
        %v4999 = vld [vmem:[%s4970 + $0xe0] sm:$0xff]
        %v5000 = vld [vmem:[%s4970 + $0xe8] sm:$0xff]
        %v5001 = vld [vmem:[%s4970 + $0xf0] sm:$0xff]
        %v5002 = vld [vmem:[%s4970 + $0xf8] sm:$0xff]
        %v5003 = vld [vmem:[%s4970 + $0x100] sm:$0xff]
        %v5004 = vld [vmem:[%s4970 + $0x108] sm:$0xff]
        %v5005 = vld [vmem:[%s4970 + $0x110] sm:$0xff]
        %v5006 = vld [vmem:[%s4970 + $0x118] sm:$0xff]
        %v5007 = vld [vmem:[%s4970 + $0x120] sm:$0xff]
        %v5008 = vld [vmem:[%s4970 + $0x128] sm:$0xff]
        %v5009 = vld [vmem:[%s4970 + $0x130] sm:$0xff]
        %v5010 = vld [vmem:[%s4970 + $0x138] sm:$0xff]
        %v5011 = vld [vmem:[%s4970 + $0x140] sm:$0xff]
        %v5012 = vld [vmem:[%s4970 + $0x148] sm:$0xff]
        %v5013 = vld [vmem:[%s4970 + $0x150] sm:$0xff]
        %v5014 = vld [vmem:[%s4970 + $0x158] sm:$0xff]
        %v5015 = vld [vmem:[%s4970 + $0x160] sm:$0xff]
        %v5016 = vld [vmem:[%s4970 + $0x168] sm:$0xff]
        %v5017 = vld [vmem:[%s4970 + $0x170] sm:$0xff]
        %v5018 = vld [vmem:[%s4970 + $0x178] sm:$0xff]
        %v5019 = vld [vmem:[%s4970 + $0x180] sm:$0xff]
        %v5020 = vld [vmem:[%s4970 + $0x188] sm:$0xff]
        %v5021 = vld [vmem:[%s4970 + $0x190] sm:$0xff]
        %v5022 = vld [vmem:[%s4970 + $0x198] sm:$0xff]
        %v5023 = vld [vmem:[%s4970 + $0x1a0] sm:$0xff]
        %v5024 = vld [vmem:[%s4970 + $0x1a8] sm:$0xff]
        %v5025 = vld [vmem:[%s4970 + $0x1b0] sm:$0xff]
        %v5026 = vld [vmem:[%s4970 + $0x1b8] sm:$0xff]
        %v5027 = vld [vmem:[%s4970 + $0x1c0] sm:$0xff]
        %v5028 = vld [vmem:[%s4970 + $0x1c8] sm:$0xff]
        %v5029 = vld [vmem:[%s4970 + $0x1d0] sm:$0xff]
        %v5030 = vld [vmem:[%s4970 + $0x1d8] sm:$0xff]
        %v5031 = vld [vmem:[%s4970 + $0x1e0] sm:$0xff]
        %v5032 = vld [vmem:[%s4970 + $0x1e8] sm:$0xff]
        %v5033 = vld [vmem:[%s4970 + $0x1f0] sm:$0xff]
        %v5034 = vld [vmem:[%s4970 + $0x1f8] sm:$0xff]
        %v5035 = vld [vmem:[%s4970 + $0x200] sm:$0xff]
        %v5036 = vld [vmem:[%s4970 + $0x208] sm:$0xff]
        %v5037 = vld [vmem:[%s4970 + $0x210] sm:$0xff]
        %v5038 = vld [vmem:[%s4970 + $0x218] sm:$0xff]
        %v5039 = vld [vmem:[%s4970 + $0x220] sm:$0xff]
        %v5040 = vld [vmem:[%s4970 + $0x228] sm:$0xff]
        %v5041 = vld [vmem:[%s4970 + $0x230] sm:$0xff]
        %v5042 = vld [vmem:[%s4970 + $0x238] sm:$0xff]
        %v5043 = vld [vmem:[%s4970 + $0x240] sm:$0xff]
        %v5044 = vld [vmem:[%s4970 + $0x248] sm:$0xff]
        %v5045 = vld [vmem:[%s4970 + $0x250] sm:$0xff]
        %v5046 = vld [vmem:[%s4970 + $0x258] sm:$0xff]
        %v5047 = vld [vmem:[%s4970 + $0x260] sm:$0xff]
        %v5048 = vld [vmem:[%s4970 + $0x268] sm:$0xff]
        %v5049 = vld [vmem:[%s4970 + $0x270] sm:$0xff]
        %v5050 = vld [vmem:[%s4970 + $0x278] sm:$0xff]
        %v5051 = vld [vmem:[%s4970 + $0x280] sm:$0xff]
        %v5052 = vld [vmem:[%s4970 + $0x288] sm:$0xff]
        %v5053 = vld [vmem:[%s4970 + $0x290] sm:$0xff]
        %v5054 = vld [vmem:[%s4970 + $0x298] sm:$0xff]
        %v5055 = vld [vmem:[%s4970 + $0x2a0] sm:$0xff]
        %v5056 = vld [vmem:[%s4970 + $0x2a8] sm:$0xff]
        %v5057 = vld [vmem:[%s4970 + $0x2b0] sm:$0xff]
        %v5058 = vld [vmem:[%s4970 + $0x2b8] sm:$0xff]
        %v5059 = vld [vmem:[%s4970 + $0x2c0] sm:$0xff]
        %v5060 = vld [vmem:[%s4970 + $0x2c8] sm:$0xff]
        %v5061 = vld [vmem:[%s4970 + $0x2d0] sm:$0xff]
        %v5062 = vld [vmem:[%s4970 + $0x2d8] sm:$0xff]
        %v5063 = vld [vmem:[%s4970 + $0x2e0] sm:$0xff]
        %v5064 = vld [vmem:[%s4970 + $0x2e8] sm:$0xff]
        %v5065 = vld [vmem:[%s4970 + $0x2f0] sm:$0xff]
        %v5066 = vld [vmem:[%s4970 + $0x2f8] sm:$0xff]
        %v5067 = vld [vmem:[%s4970 + $0x300] sm:$0xff]
        %v5068 = vld [vmem:[%s4970 + $0x308] sm:$0xff]
        %v5069 = vld [vmem:[%s4970 + $0x310] sm:$0xff]
        %v5070 = vld [vmem:[%s4970 + $0x318] sm:$0xff]
        %v5071 = vld [vmem:[%s4970 + $0x320] sm:$0xff]
        %v5072 = vld [vmem:[%s4970 + $0x328] sm:$0xff]
        %v5073 = vld [vmem:[%s4970 + $0x330] sm:$0xff]
        %v5074 = vld [vmem:[%s4970 + $0x338] sm:$0xff]
        %v5075 = vld [vmem:[%s4970 + $0x340] sm:$0xff]
        %v5076 = vld [vmem:[%s4970 + $0x348] sm:$0xff]
        %v5077 = vld [vmem:[%s4970 + $0x350] sm:$0xff]
        %v5078 = vld [vmem:[%s4970 + $0x358] sm:$0xff]
        %v5079 = vld [vmem:[%s4970 + $0x360] sm:$0xff]
        %v5080 = vld [vmem:[%s4970 + $0x368] sm:$0xff]
        %v5081 = vld [vmem:[%s4970 + $0x370] sm:$0xff]
        %v5082 = vld [vmem:[%s4970 + $0x378] sm:$0xff]
        %v5083 = vld [vmem:[%s4970 + $0x380] sm:$0xff]
        %v5084 = vld [vmem:[%s4970 + $0x388] sm:$0xff]
        %v5085 = vld [vmem:[%s4970 + $0x390] sm:$0xff]
        %v5086 = vld [vmem:[%s4970 + $0x398] sm:$0xff]
        %v5087 = vld [vmem:[%s4970 + $0x3a0] sm:$0xff]
        %v5088 = vld [vmem:[%s4970 + $0x3a8] sm:$0xff]
        %v5089 = vld [vmem:[%s4970 + $0x3b0] sm:$0xff]
        %v5090 = vld [vmem:[%s4970 + $0x3b8] sm:$0xff]
        %v5091 = vld [vmem:[%s4970 + $0x3c0] sm:$0xff]
        %v5092 = vld [vmem:[%s4970 + $0x3c8] sm:$0xff]
        %v5093 = vld [vmem:[%s4970 + $0x3d0] sm:$0xff]
        %v5094 = vld [vmem:[%s4970 + $0x3d8] sm:$0xff]
        %v5095 = vld [vmem:[%s4970 + $0x3e0] sm:$0xff]
        %v5096 = vld [vmem:[%s4970 + $0x3e8] sm:$0xff]
        %v5097 = vld [vmem:[%s4970 + $0x3f0] sm:$0xff]
        %v5098 = vld [vmem:[%s4970 + $0x3f8] sm:$0xff]
        %s5099 = scalar_lea.vmem [#allocation12], 16
        %v5100 = vld [vmem:[%s5099] sm:$0xff]
        %v5102 = vlaneseq
        %v5103 = vshrl.u32 %v5102, 7
        %v5104 = vsub.s32 0, %v5103
        %v5105 = vrot.slane %v5100, %v5104
        %v5106 = vlaneseq
        %v5107 = vshrl.u32 %v5106, 7
        %v5108 = vsub.s32 1, %v5107
        %v5109 = vrot.slane %v5100, %v5108
        %v5110 = vlaneseq
        %v5111 = vshrl.u32 %v5110, 7
        %v5112 = vsub.s32 2, %v5111
        %v5113 = vrot.slane %v5100, %v5112
        %v5114 = vlaneseq
        %v5115 = vshrl.u32 %v5114, 7
        %v5116 = vsub.s32 3, %v5115
        %v5117 = vrot.slane %v5100, %v5116
        %v5118 = vlaneseq
        %v5119 = vshrl.u32 %v5118, 7
        %v5120 = vsub.s32 4, %v5119
        %v5121 = vrot.slane %v5100, %v5120
        %v5122 = vlaneseq
        %v5123 = vshrl.u32 %v5122, 7
        %v5124 = vsub.s32 5, %v5123
        %v5125 = vrot.slane %v5100, %v5124
        %v5126 = vlaneseq
        %v5127 = vshrl.u32 %v5126, 7
        %v5128 = vsub.s32 6, %v5127
        %v5129 = vrot.slane %v5100, %v5128
        %v5130 = vlaneseq
        %v5131 = vshrl.u32 %v5130, 7
        %v5132 = vsub.s32 7, %v5131
        %v5133 = vrot.slane %v5100, %v5132
        %v5270 = vunpack.c.l.b16 %v4971
        %v5271 = vunpack.c.h.b16 %v4971
        %v5272 = vunpack.c.l.b16 %v4972
        %v5273 = vunpack.c.h.b16 %v4972
        %v5274 = vunpack.c.l.b16 %v4973
        %v5275 = vunpack.c.h.b16 %v4973
        %v5276 = vunpack.c.l.b16 %v4974
        %v5277 = vunpack.c.h.b16 %v4974
        %v5278 = vunpack.c.l.b16 %v4975
        %v5279 = vunpack.c.h.b16 %v4975
        %v5280 = vunpack.c.l.b16 %v4976
        %v5281 = vunpack.c.h.b16 %v4976
        %v5282 = vunpack.c.l.b16 %v4977
        %v5283 = vunpack.c.h.b16 %v4977
        %v5284 = vunpack.c.l.b16 %v4978
        %v5285 = vunpack.c.h.b16 %v4978
        %v5286 = vunpack.c.l.b16 %v4979
        %v5287 = vunpack.c.h.b16 %v4979
        %v5288 = vunpack.c.l.b16 %v4980
        %v5289 = vunpack.c.h.b16 %v4980
        %v5290 = vunpack.c.l.b16 %v4981
        %v5291 = vunpack.c.h.b16 %v4981
        %v5292 = vunpack.c.l.b16 %v4982
        %v5293 = vunpack.c.h.b16 %v4982
        %v5294 = vunpack.c.l.b16 %v4983
        %v5295 = vunpack.c.h.b16 %v4983
        %v5296 = vunpack.c.l.b16 %v4984
        %v5297 = vunpack.c.h.b16 %v4984
        %v5298 = vunpack.c.l.b16 %v4985
        %v5299 = vunpack.c.h.b16 %v4985
        %v5300 = vunpack.c.l.b16 %v4986
        %v5301 = vunpack.c.h.b16 %v4986
        %v5302 = vunpack.c.l.b16 %v4987
        %v5303 = vunpack.c.h.b16 %v4987
        %v5304 = vunpack.c.l.b16 %v4988
        %v5305 = vunpack.c.h.b16 %v4988
        %v5306 = vunpack.c.l.b16 %v4989
        %v5307 = vunpack.c.h.b16 %v4989
        %v5308 = vunpack.c.l.b16 %v4990
        %v5309 = vunpack.c.h.b16 %v4990
        %v5310 = vunpack.c.l.b16 %v4991
        %v5311 = vunpack.c.h.b16 %v4991
        %v5312 = vunpack.c.l.b16 %v4992
        %v5313 = vunpack.c.h.b16 %v4992
        %v5314 = vunpack.c.l.b16 %v4993
        %v5315 = vunpack.c.h.b16 %v4993
        %v5316 = vunpack.c.l.b16 %v4994
        %v5317 = vunpack.c.h.b16 %v4994
        %v5318 = vunpack.c.l.b16 %v4995
        %v5319 = vunpack.c.h.b16 %v4995
        %v5320 = vunpack.c.l.b16 %v4996
        %v5321 = vunpack.c.h.b16 %v4996
        %v5322 = vunpack.c.l.b16 %v4997
        %v5323 = vunpack.c.h.b16 %v4997
        %v5324 = vunpack.c.l.b16 %v4998
        %v5325 = vunpack.c.h.b16 %v4998
        %v5326 = vunpack.c.l.b16 %v4999
        %v5327 = vunpack.c.h.b16 %v4999
        %v5328 = vunpack.c.l.b16 %v5000
        %v5329 = vunpack.c.h.b16 %v5000
        %v5330 = vunpack.c.l.b16 %v5001
        %v5331 = vunpack.c.h.b16 %v5001
        %v5332 = vunpack.c.l.b16 %v5002
        %v5333 = vunpack.c.h.b16 %v5002
        %v5334 = vunpack.c.l.b16 %v5003
        %v5335 = vunpack.c.h.b16 %v5003
        %v5336 = vunpack.c.l.b16 %v5004
        %v5337 = vunpack.c.h.b16 %v5004
        %v5338 = vunpack.c.l.b16 %v5005
        %v5339 = vunpack.c.h.b16 %v5005
        %v5340 = vunpack.c.l.b16 %v5006
        %v5341 = vunpack.c.h.b16 %v5006
        %v5342 = vunpack.c.l.b16 %v5007
        %v5343 = vunpack.c.h.b16 %v5007
        %v5344 = vunpack.c.l.b16 %v5008
        %v5345 = vunpack.c.h.b16 %v5008
        %v5346 = vunpack.c.l.b16 %v5009
        %v5347 = vunpack.c.h.b16 %v5009
        %v5348 = vunpack.c.l.b16 %v5010
        %v5349 = vunpack.c.h.b16 %v5010
        %v5350 = vunpack.c.l.b16 %v5011
        %v5351 = vunpack.c.h.b16 %v5011
        %v5352 = vunpack.c.l.b16 %v5012
        %v5353 = vunpack.c.h.b16 %v5012
        %v5354 = vunpack.c.l.b16 %v5013
        %v5355 = vunpack.c.h.b16 %v5013
        %v5356 = vunpack.c.l.b16 %v5014
        %v5357 = vunpack.c.h.b16 %v5014
        %v5358 = vunpack.c.l.b16 %v5015
        %v5359 = vunpack.c.h.b16 %v5015
        %v5360 = vunpack.c.l.b16 %v5016
        %v5361 = vunpack.c.h.b16 %v5016
        %v5362 = vunpack.c.l.b16 %v5017
        %v5363 = vunpack.c.h.b16 %v5017
        %v5364 = vunpack.c.l.b16 %v5018
        %v5365 = vunpack.c.h.b16 %v5018
        %v5366 = vunpack.c.l.b16 %v5019
        %v5367 = vunpack.c.h.b16 %v5019
        %v5368 = vunpack.c.l.b16 %v5020
        %v5369 = vunpack.c.h.b16 %v5020
        %v5370 = vunpack.c.l.b16 %v5021
        %v5371 = vunpack.c.h.b16 %v5021
        %v5372 = vunpack.c.l.b16 %v5022
        %v5373 = vunpack.c.h.b16 %v5022
        %v5374 = vunpack.c.l.b16 %v5023
        %v5375 = vunpack.c.h.b16 %v5023
        %v5376 = vunpack.c.l.b16 %v5024
        %v5377 = vunpack.c.h.b16 %v5024
        %v5378 = vunpack.c.l.b16 %v5025
        %v5379 = vunpack.c.h.b16 %v5025
        %v5380 = vunpack.c.l.b16 %v5026
        %v5381 = vunpack.c.h.b16 %v5026
        %v5382 = vunpack.c.l.b16 %v5027
        %v5383 = vunpack.c.h.b16 %v5027
        %v5384 = vunpack.c.l.b16 %v5028
        %v5385 = vunpack.c.h.b16 %v5028
        %v5386 = vunpack.c.l.b16 %v5029
        %v5387 = vunpack.c.h.b16 %v5029
        %v5388 = vunpack.c.l.b16 %v5030
        %v5389 = vunpack.c.h.b16 %v5030
        %v5390 = vunpack.c.l.b16 %v5031
        %v5391 = vunpack.c.h.b16 %v5031
        %v5392 = vunpack.c.l.b16 %v5032
        %v5393 = vunpack.c.h.b16 %v5032
        %v5394 = vunpack.c.l.b16 %v5033
        %v5395 = vunpack.c.h.b16 %v5033
        %v5396 = vunpack.c.l.b16 %v5034
        %v5397 = vunpack.c.h.b16 %v5034
        %v5398 = vunpack.c.l.b16 %v5035
        %v5399 = vunpack.c.h.b16 %v5035
        %v5400 = vunpack.c.l.b16 %v5036
        %v5401 = vunpack.c.h.b16 %v5036
        %v5402 = vunpack.c.l.b16 %v5037
        %v5403 = vunpack.c.h.b16 %v5037
        %v5404 = vunpack.c.l.b16 %v5038
        %v5405 = vunpack.c.h.b16 %v5038
        %v5406 = vunpack.c.l.b16 %v5039
        %v5407 = vunpack.c.h.b16 %v5039
        %v5408 = vunpack.c.l.b16 %v5040
        %v5409 = vunpack.c.h.b16 %v5040
        %v5410 = vunpack.c.l.b16 %v5041
        %v5411 = vunpack.c.h.b16 %v5041
        %v5412 = vunpack.c.l.b16 %v5042
        %v5413 = vunpack.c.h.b16 %v5042
        %v5414 = vunpack.c.l.b16 %v5043
        %v5415 = vunpack.c.h.b16 %v5043
        %v5416 = vunpack.c.l.b16 %v5044
        %v5417 = vunpack.c.h.b16 %v5044
        %v5418 = vunpack.c.l.b16 %v5045
        %v5419 = vunpack.c.h.b16 %v5045
        %v5420 = vunpack.c.l.b16 %v5046
        %v5421 = vunpack.c.h.b16 %v5046
        %v5422 = vunpack.c.l.b16 %v5047
        %v5423 = vunpack.c.h.b16 %v5047
        %v5424 = vunpack.c.l.b16 %v5048
        %v5425 = vunpack.c.h.b16 %v5048
        %v5426 = vunpack.c.l.b16 %v5049
        %v5427 = vunpack.c.h.b16 %v5049
        %v5428 = vunpack.c.l.b16 %v5050
        %v5429 = vunpack.c.h.b16 %v5050
        %v5430 = vunpack.c.l.b16 %v5051
        %v5431 = vunpack.c.h.b16 %v5051
        %v5432 = vunpack.c.l.b16 %v5052
        %v5433 = vunpack.c.h.b16 %v5052
        %v5434 = vunpack.c.l.b16 %v5053
        %v5435 = vunpack.c.h.b16 %v5053
        %v5436 = vunpack.c.l.b16 %v5054
        %v5437 = vunpack.c.h.b16 %v5054
        %v5438 = vunpack.c.l.b16 %v5055
        %v5439 = vunpack.c.h.b16 %v5055
        %v5440 = vunpack.c.l.b16 %v5056
        %v5441 = vunpack.c.h.b16 %v5056
        %v5442 = vunpack.c.l.b16 %v5057
        %v5443 = vunpack.c.h.b16 %v5057
        %v5444 = vunpack.c.l.b16 %v5058
        %v5445 = vunpack.c.h.b16 %v5058
        %v5446 = vunpack.c.l.b16 %v5059
        %v5447 = vunpack.c.h.b16 %v5059
        %v5448 = vunpack.c.l.b16 %v5060
        %v5449 = vunpack.c.h.b16 %v5060
        %v5450 = vunpack.c.l.b16 %v5061
        %v5451 = vunpack.c.h.b16 %v5061
        %v5452 = vunpack.c.l.b16 %v5062
        %v5453 = vunpack.c.h.b16 %v5062
        %v5454 = vunpack.c.l.b16 %v5063
        %v5455 = vunpack.c.h.b16 %v5063
        %v5456 = vunpack.c.l.b16 %v5064
        %v5457 = vunpack.c.h.b16 %v5064
        %v5458 = vunpack.c.l.b16 %v5065
        %v5459 = vunpack.c.h.b16 %v5065
        %v5460 = vunpack.c.l.b16 %v5066
        %v5461 = vunpack.c.h.b16 %v5066
        %v5462 = vunpack.c.l.b16 %v5067
        %v5463 = vunpack.c.h.b16 %v5067
        %v5464 = vunpack.c.l.b16 %v5068
        %v5465 = vunpack.c.h.b16 %v5068
        %v5466 = vunpack.c.l.b16 %v5069
        %v5467 = vunpack.c.h.b16 %v5069
        %v5468 = vunpack.c.l.b16 %v5070
        %v5469 = vunpack.c.h.b16 %v5070
        %v5470 = vunpack.c.l.b16 %v5071
        %v5471 = vunpack.c.h.b16 %v5071
        %v5472 = vunpack.c.l.b16 %v5072
        %v5473 = vunpack.c.h.b16 %v5072
        %v5474 = vunpack.c.l.b16 %v5073
        %v5475 = vunpack.c.h.b16 %v5073
        %v5476 = vunpack.c.l.b16 %v5074
        %v5477 = vunpack.c.h.b16 %v5074
        %v5478 = vunpack.c.l.b16 %v5075
        %v5479 = vunpack.c.h.b16 %v5075
        %v5480 = vunpack.c.l.b16 %v5076
        %v5481 = vunpack.c.h.b16 %v5076
        %v5482 = vunpack.c.l.b16 %v5077
        %v5483 = vunpack.c.h.b16 %v5077
        %v5484 = vunpack.c.l.b16 %v5078
        %v5485 = vunpack.c.h.b16 %v5078
        %v5486 = vunpack.c.l.b16 %v5079
        %v5487 = vunpack.c.h.b16 %v5079
        %v5488 = vunpack.c.l.b16 %v5080
        %v5489 = vunpack.c.h.b16 %v5080
        %v5490 = vunpack.c.l.b16 %v5081
        %v5491 = vunpack.c.h.b16 %v5081
        %v5492 = vunpack.c.l.b16 %v5082
        %v5493 = vunpack.c.h.b16 %v5082
        %v5494 = vunpack.c.l.b16 %v5083
        %v5495 = vunpack.c.h.b16 %v5083
        %v5496 = vunpack.c.l.b16 %v5084
        %v5497 = vunpack.c.h.b16 %v5084
        %v5498 = vunpack.c.l.b16 %v5085
        %v5499 = vunpack.c.h.b16 %v5085
        %v5500 = vunpack.c.l.b16 %v5086
        %v5501 = vunpack.c.h.b16 %v5086
        %v5502 = vunpack.c.l.b16 %v5087
        %v5503 = vunpack.c.h.b16 %v5087
        %v5504 = vunpack.c.l.b16 %v5088
        %v5505 = vunpack.c.h.b16 %v5088
        %v5506 = vunpack.c.l.b16 %v5089
        %v5507 = vunpack.c.h.b16 %v5089
        %v5508 = vunpack.c.l.b16 %v5090
        %v5509 = vunpack.c.h.b16 %v5090
        %v5510 = vunpack.c.l.b16 %v5091
        %v5511 = vunpack.c.h.b16 %v5091
        %v5512 = vunpack.c.l.b16 %v5092
        %v5513 = vunpack.c.h.b16 %v5092
        %v5514 = vunpack.c.l.b16 %v5093
        %v5515 = vunpack.c.h.b16 %v5093
        %v5516 = vunpack.c.l.b16 %v5094
        %v5517 = vunpack.c.h.b16 %v5094
        %v5518 = vunpack.c.l.b16 %v5095
        %v5519 = vunpack.c.h.b16 %v5095
        %v5520 = vunpack.c.l.b16 %v5096
        %v5521 = vunpack.c.h.b16 %v5096
        %v5522 = vunpack.c.l.b16 %v5097
        %v5523 = vunpack.c.h.b16 %v5097
        %v5524 = vunpack.c.l.b16 %v5098
        %v5525 = vunpack.c.h.b16 %v5098
        %v5526 = vpack.c.b16 %v5278, %v5270
        %v5527 = vpack.c.b16 %v5279, %v5271
        %v5528 = vpack.c.b16 %v5280, %v5272
        %v5529 = vpack.c.b16 %v5281, %v5273
        %v5530 = vpack.c.b16 %v5282, %v5274
        %v5531 = vpack.c.b16 %v5283, %v5275
        %v5532 = vpack.c.b16 %v5284, %v5276
        %v5533 = vpack.c.b16 %v5285, %v5277
        %v5534 = vpack.c.b16 %v5294, %v5286
        %v5535 = vpack.c.b16 %v5295, %v5287
        %v5536 = vpack.c.b16 %v5296, %v5288
        %v5537 = vpack.c.b16 %v5297, %v5289
        %v5538 = vpack.c.b16 %v5298, %v5290
        %v5539 = vpack.c.b16 %v5299, %v5291
        %v5540 = vpack.c.b16 %v5300, %v5292
        %v5541 = vpack.c.b16 %v5301, %v5293
        %v5542 = vpack.c.b16 %v5310, %v5302
        %v5543 = vpack.c.b16 %v5311, %v5303
        %v5544 = vpack.c.b16 %v5312, %v5304
        %v5545 = vpack.c.b16 %v5313, %v5305
        %v5546 = vpack.c.b16 %v5314, %v5306
        %v5547 = vpack.c.b16 %v5315, %v5307
        %v5548 = vpack.c.b16 %v5316, %v5308
        %v5549 = vpack.c.b16 %v5317, %v5309
        %v5550 = vpack.c.b16 %v5326, %v5318
        %v5551 = vpack.c.b16 %v5327, %v5319
        %v5552 = vpack.c.b16 %v5328, %v5320
        %v5553 = vpack.c.b16 %v5329, %v5321
        %v5554 = vpack.c.b16 %v5330, %v5322
        %v5555 = vpack.c.b16 %v5331, %v5323
        %v5556 = vpack.c.b16 %v5332, %v5324
        %v5557 = vpack.c.b16 %v5333, %v5325
        %v5558 = vpack.c.b16 %v5342, %v5334
        %v5559 = vpack.c.b16 %v5343, %v5335
        %v5560 = vpack.c.b16 %v5344, %v5336
        %v5561 = vpack.c.b16 %v5345, %v5337
        %v5562 = vpack.c.b16 %v5346, %v5338
        %v5563 = vpack.c.b16 %v5347, %v5339
        %v5564 = vpack.c.b16 %v5348, %v5340
        %v5565 = vpack.c.b16 %v5349, %v5341
        %v5566 = vpack.c.b16 %v5358, %v5350
        %v5567 = vpack.c.b16 %v5359, %v5351
        %v5568 = vpack.c.b16 %v5360, %v5352
        %v5569 = vpack.c.b16 %v5361, %v5353
        %v5570 = vpack.c.b16 %v5362, %v5354
        %v5571 = vpack.c.b16 %v5363, %v5355
        %v5572 = vpack.c.b16 %v5364, %v5356
        %v5573 = vpack.c.b16 %v5365, %v5357
        %v5574 = vpack.c.b16 %v5374, %v5366
        %v5575 = vpack.c.b16 %v5375, %v5367
        %v5576 = vpack.c.b16 %v5376, %v5368
        %v5577 = vpack.c.b16 %v5377, %v5369
        %v5578 = vpack.c.b16 %v5378, %v5370
        %v5579 = vpack.c.b16 %v5379, %v5371
        %v5580 = vpack.c.b16 %v5380, %v5372
        %v5581 = vpack.c.b16 %v5381, %v5373
        %v5582 = vpack.c.b16 %v5390, %v5382
        %v5583 = vpack.c.b16 %v5391, %v5383
        %v5584 = vpack.c.b16 %v5392, %v5384
        %v5585 = vpack.c.b16 %v5393, %v5385
        %v5586 = vpack.c.b16 %v5394, %v5386
        %v5587 = vpack.c.b16 %v5395, %v5387
        %v5588 = vpack.c.b16 %v5396, %v5388
        %v5589 = vpack.c.b16 %v5397, %v5389
        %v5590 = vpack.c.b16 %v5406, %v5398
        %v5591 = vpack.c.b16 %v5407, %v5399
        %v5592 = vpack.c.b16 %v5408, %v5400
        %v5593 = vpack.c.b16 %v5409, %v5401
        %v5594 = vpack.c.b16 %v5410, %v5402
        %v5595 = vpack.c.b16 %v5411, %v5403
        %v5596 = vpack.c.b16 %v5412, %v5404
        %v5597 = vpack.c.b16 %v5413, %v5405
        %v5598 = vpack.c.b16 %v5422, %v5414
        %v5599 = vpack.c.b16 %v5423, %v5415
        %v5600 = vpack.c.b16 %v5424, %v5416
        %v5601 = vpack.c.b16 %v5425, %v5417
        %v5602 = vpack.c.b16 %v5426, %v5418
        %v5603 = vpack.c.b16 %v5427, %v5419
        %v5604 = vpack.c.b16 %v5428, %v5420
        %v5605 = vpack.c.b16 %v5429, %v5421
        %v5606 = vpack.c.b16 %v5438, %v5430
        %v5607 = vpack.c.b16 %v5439, %v5431
        %v5608 = vpack.c.b16 %v5440, %v5432
        %v5609 = vpack.c.b16 %v5441, %v5433
        %v5610 = vpack.c.b16 %v5442, %v5434
        %v5611 = vpack.c.b16 %v5443, %v5435
        %v5612 = vpack.c.b16 %v5444, %v5436
        %v5613 = vpack.c.b16 %v5445, %v5437
        %v5614 = vpack.c.b16 %v5454, %v5446
        %v5615 = vpack.c.b16 %v5455, %v5447
        %v5616 = vpack.c.b16 %v5456, %v5448
        %v5617 = vpack.c.b16 %v5457, %v5449
        %v5618 = vpack.c.b16 %v5458, %v5450
        %v5619 = vpack.c.b16 %v5459, %v5451
        %v5620 = vpack.c.b16 %v5460, %v5452
        %v5621 = vpack.c.b16 %v5461, %v5453
        %v5622 = vpack.c.b16 %v5470, %v5462
        %v5623 = vpack.c.b16 %v5471, %v5463
        %v5624 = vpack.c.b16 %v5472, %v5464
        %v5625 = vpack.c.b16 %v5473, %v5465
        %v5626 = vpack.c.b16 %v5474, %v5466
        %v5627 = vpack.c.b16 %v5475, %v5467
        %v5628 = vpack.c.b16 %v5476, %v5468
        %v5629 = vpack.c.b16 %v5477, %v5469
        %v5630 = vpack.c.b16 %v5486, %v5478
        %v5631 = vpack.c.b16 %v5487, %v5479
        %v5632 = vpack.c.b16 %v5488, %v5480
        %v5633 = vpack.c.b16 %v5489, %v5481
        %v5634 = vpack.c.b16 %v5490, %v5482
        %v5635 = vpack.c.b16 %v5491, %v5483
        %v5636 = vpack.c.b16 %v5492, %v5484
        %v5637 = vpack.c.b16 %v5493, %v5485
        %v5638 = vpack.c.b16 %v5502, %v5494
        %v5639 = vpack.c.b16 %v5503, %v5495
        %v5640 = vpack.c.b16 %v5504, %v5496
        %v5641 = vpack.c.b16 %v5505, %v5497
        %v5642 = vpack.c.b16 %v5506, %v5498
        %v5643 = vpack.c.b16 %v5507, %v5499
        %v5644 = vpack.c.b16 %v5508, %v5500
        %v5645 = vpack.c.b16 %v5509, %v5501
        %v5646 = vpack.c.b16 %v5518, %v5510
        %v5647 = vpack.c.b16 %v5519, %v5511
        %v5648 = vpack.c.b16 %v5520, %v5512
        %v5649 = vpack.c.b16 %v5521, %v5513
        %v5650 = vpack.c.b16 %v5522, %v5514
        %v5651 = vpack.c.b16 %v5523, %v5515
        %v5652 = vpack.c.b16 %v5524, %v5516
        %v5653 = vpack.c.b16 %v5525, %v5517
        %5782 = vmatprep.subr.bf16.mxu0 %v5583
        %5783 = vmatpush1.bf16.msra.mxu0 %v5582
        %5784 = vmatprep.subr.bf16.mxu0 %v5575
        %5785 = vmatpush1.bf16.msra.mxu0 %v5574
        %5786 = vmatprep.subr.bf16.mxu0 %v5567
        %5787 = vmatpush1.bf16.msra.mxu0 %v5566
        %5788 = vmatprep.subr.bf16.mxu0 %v5559
        %5789 = vmatpush1.bf16.msra.mxu0 %v5558
        %5790 = vmatprep.subr.bf16.mxu0 %v5551
        %5791 = vmatpush1.bf16.msra.mxu0 %v5550
        %5792 = vmatprep.subr.bf16.mxu0 %v5543
        %5793 = vmatpush1.bf16.msra.mxu0 %v5542
        %5794 = vmatprep.subr.bf16.mxu0 %v5535
        %5795 = vmatpush1.bf16.msra.mxu0 %v5534
        %5796 = vmatprep.subr.bf16.mxu0 %v5527
        %5797 = vmatpush1.bf16.msra.mxu0 %v5526
        %5798 = vmatprep.subr.bf16.mxu0 %v5647
        %5799 = vmatpush2.bf16.msra.mxu0 %v5646
        %5800 = vmatprep.subr.bf16.mxu0 %v5639
        %5801 = vmatpush2.bf16.msra.mxu0 %v5638
        %5802 = vmatprep.subr.bf16.mxu0 %v5631
        %5803 = vmatpush2.bf16.msra.mxu0 %v5630
        %5804 = vmatprep.subr.bf16.mxu0 %v5623
        %5805 = vmatpush2.bf16.msra.mxu0 %v5622
        %5806 = vmatprep.subr.bf16.mxu0 %v5615
        %5807 = vmatpush2.bf16.msra.mxu0 %v5614
        %5808 = vmatprep.subr.bf16.mxu0 %v5607
        %5809 = vmatpush2.bf16.msra.mxu0 %v5606
        %5810 = vmatprep.subr.bf16.mxu0 %v5599
        %5811 = vmatpush2.bf16.msra.mxu0 %v5598
        %5812 = vmatprep.subr.bf16.mxu0 %v5591
        %5813 = vmatpush2.bf16.msra.mxu0 %v5590
        %5814 = vmatprep.mubr.bf16.mxu0 %v4969
        %5815 = vmatmul.mubr.bf16.gmra.mxu0 %v4968
        %v5816 = vpop.f32.mrf.mxu0
        %v5817 = vadd.f32 %v5105, %v5816
        %v5818 = vpop.f32.mrf.mxu0
        %v5819 = vadd.f32 %v5109, %v5818
        %v5820 = vpop.f32.mrf.mxu0
        %v5821 = vpop.f32.mrf.mxu0
        %5822 = vdwg.mxu0
        %5823 = vmatprep.subr.bf16.mxu0 %v5585
        %5824 = vmatpush1.bf16.msra.mxu0 %v5584
        %5825 = vmatprep.subr.bf16.mxu0 %v5577
        %5826 = vmatpush1.bf16.msra.mxu0 %v5576
        %5827 = vmatprep.subr.bf16.mxu0 %v5569
        %5828 = vmatpush1.bf16.msra.mxu0 %v5568
        %5829 = vmatprep.subr.bf16.mxu0 %v5561
        %5830 = vmatpush1.bf16.msra.mxu0 %v5560
        %5831 = vmatprep.subr.bf16.mxu0 %v5553
        %5832 = vmatpush1.bf16.msra.mxu0 %v5552
        %5833 = vmatprep.subr.bf16.mxu0 %v5545
        %5834 = vmatpush1.bf16.msra.mxu0 %v5544
        %5835 = vmatprep.subr.bf16.mxu0 %v5537
        %5836 = vmatpush1.bf16.msra.mxu0 %v5536
        %5837 = vmatprep.subr.bf16.mxu0 %v5529
        %5838 = vmatpush1.bf16.msra.mxu0 %v5528
        %5839 = vmatprep.subr.bf16.mxu0 %v5649
        %5840 = vmatpush2.bf16.msra.mxu0 %v5648
        %5841 = vmatprep.subr.bf16.mxu0 %v5641
        %5842 = vmatpush2.bf16.msra.mxu0 %v5640
        %5843 = vmatprep.subr.bf16.mxu0 %v5633
        %5844 = vmatpush2.bf16.msra.mxu0 %v5632
        %5845 = vmatprep.subr.bf16.mxu0 %v5625
        %5846 = vmatpush2.bf16.msra.mxu0 %v5624
        %5847 = vmatprep.subr.bf16.mxu0 %v5617
        %5848 = vmatpush2.bf16.msra.mxu0 %v5616
        %5849 = vmatprep.subr.bf16.mxu0 %v5609
        %5850 = vmatpush2.bf16.msra.mxu0 %v5608
        %5851 = vmatprep.subr.bf16.mxu0 %v5601
        %5852 = vmatpush2.bf16.msra.mxu0 %v5600
        %5853 = vmatprep.subr.bf16.mxu0 %v5593
        %5854 = vmatpush2.bf16.msra.mxu0 %v5592
        %5855 = vmatprep.mubr.bf16.mxu0 %v4969
        %5856 = vmatmul.mubr.bf16.gmra.mxu0 %v4968
        %v5857 = vpop.f32.mrf.mxu0
        %v5858 = vadd.f32 %v5113, %v5857
        %v5859 = vpop.f32.mrf.mxu0
        %v5860 = vadd.f32 %v5117, %v5859
        %v5861 = vpop.f32.mrf.mxu0
        %v5862 = vpop.f32.mrf.mxu0
        %5863 = vdwg.mxu0
        %5864 = vmatprep.subr.bf16.mxu0 %v5587
        %5865 = vmatpush1.bf16.msra.mxu0 %v5586
        %5866 = vmatprep.subr.bf16.mxu0 %v5579
        %5867 = vmatpush1.bf16.msra.mxu0 %v5578
        %5868 = vmatprep.subr.bf16.mxu0 %v5571
        %5869 = vmatpush1.bf16.msra.mxu0 %v5570
        %5870 = vmatprep.subr.bf16.mxu0 %v5563
        %5871 = vmatpush1.bf16.msra.mxu0 %v5562
        %5872 = vmatprep.subr.bf16.mxu0 %v5555
        %5873 = vmatpush1.bf16.msra.mxu0 %v5554
        %5874 = vmatprep.subr.bf16.mxu0 %v5547
        %5875 = vmatpush1.bf16.msra.mxu0 %v5546
        %5876 = vmatprep.subr.bf16.mxu0 %v5539
        %5877 = vmatpush1.bf16.msra.mxu0 %v5538
        %5878 = vmatprep.subr.bf16.mxu0 %v5531
        %5879 = vmatpush1.bf16.msra.mxu0 %v5530
        %5880 = vmatprep.subr.bf16.mxu0 %v5651
        %5881 = vmatpush2.bf16.msra.mxu0 %v5650
        %5882 = vmatprep.subr.bf16.mxu0 %v5643
        %5883 = vmatpush2.bf16.msra.mxu0 %v5642
        %5884 = vmatprep.subr.bf16.mxu0 %v5635
        %5885 = vmatpush2.bf16.msra.mxu0 %v5634
        %5886 = vmatprep.subr.bf16.mxu0 %v5627
        %5887 = vmatpush2.bf16.msra.mxu0 %v5626
        %5888 = vmatprep.subr.bf16.mxu0 %v5619
        %5889 = vmatpush2.bf16.msra.mxu0 %v5618
        %5890 = vmatprep.subr.bf16.mxu0 %v5611
        %5891 = vmatpush2.bf16.msra.mxu0 %v5610
        %5892 = vmatprep.subr.bf16.mxu0 %v5603
        %5893 = vmatpush2.bf16.msra.mxu0 %v5602
        %5894 = vmatprep.subr.bf16.mxu0 %v5595
        %5895 = vmatpush2.bf16.msra.mxu0 %v5594
        %5896 = vmatprep.mubr.bf16.mxu0 %v4969
        %5897 = vmatmul.mubr.bf16.gmra.mxu0 %v4968
        %v5898 = vpop.f32.mrf.mxu0
        %v5899 = vadd.f32 %v5121, %v5898
        %v5900 = vpop.f32.mrf.mxu0
        %v5901 = vadd.f32 %v5125, %v5900
        %v5902 = vpop.f32.mrf.mxu0
        %v5903 = vpop.f32.mrf.mxu0
        %5904 = vdwg.mxu0
        %5905 = vmatprep.subr.bf16.mxu0 %v5589
        %5906 = vmatpush1.bf16.msra.mxu0 %v5588
        %5907 = vmatprep.subr.bf16.mxu0 %v5581
        %5908 = vmatpush1.bf16.msra.mxu0 %v5580
        %5909 = vmatprep.subr.bf16.mxu0 %v5573
        %5910 = vmatpush1.bf16.msra.mxu0 %v5572
        %5911 = vmatprep.subr.bf16.mxu0 %v5565
        %5912 = vmatpush1.bf16.msra.mxu0 %v5564
        %5913 = vmatprep.subr.bf16.mxu0 %v5557
        %5914 = vmatpush1.bf16.msra.mxu0 %v5556
        %5915 = vmatprep.subr.bf16.mxu0 %v5549
        %5916 = vmatpush1.bf16.msra.mxu0 %v5548
        %5917 = vmatprep.subr.bf16.mxu0 %v5541
        %5918 = vmatpush1.bf16.msra.mxu0 %v5540
        %5919 = vmatprep.subr.bf16.mxu0 %v5533
        %5920 = vmatpush1.bf16.msra.mxu0 %v5532
        %5921 = vmatprep.subr.bf16.mxu0 %v5653
        %5922 = vmatpush2.bf16.msra.mxu0 %v5652
        %5923 = vmatprep.subr.bf16.mxu0 %v5645
        %5924 = vmatpush2.bf16.msra.mxu0 %v5644
        %5925 = vmatprep.subr.bf16.mxu0 %v5637
        %5926 = vmatpush2.bf16.msra.mxu0 %v5636
        %5927 = vmatprep.subr.bf16.mxu0 %v5629
        %5928 = vmatpush2.bf16.msra.mxu0 %v5628
        %5929 = vmatprep.subr.bf16.mxu0 %v5621
        %5930 = vmatpush2.bf16.msra.mxu0 %v5620
        %5931 = vmatprep.subr.bf16.mxu0 %v5613
        %5932 = vmatpush2.bf16.msra.mxu0 %v5612
        %5933 = vmatprep.subr.bf16.mxu0 %v5605
        %5934 = vmatpush2.bf16.msra.mxu0 %v5604
        %5935 = vmatprep.subr.bf16.mxu0 %v5597
        %5936 = vmatpush2.bf16.msra.mxu0 %v5596
        %5937 = vmatprep.mubr.bf16.mxu0 %v4969
        %5938 = vmatmul.mubr.bf16.gmra.mxu0 %v4968
        %v5939 = vpop.f32.mrf.mxu0
        %v5940 = vadd.f32 %v5129, %v5939
        %v5941 = vpop.f32.mrf.mxu0
        %v5942 = vadd.f32 %v5133, %v5941
        %v5943 = vpop.f32.mrf.mxu0
        %v5944 = vpop.f32.mrf.mxu0
        %5945 = vdwg.mxu0
        %v5946 = vmul.f32 %v5817, %v5817
        %v5947 = vmul.f32 %v5819, %v5819
        %v5948 = vmul.f32 %v5858, %v5858
        %v5949 = vmul.f32 %v5860, %v5860
        %v5950 = vmul.f32 %v5899, %v5899
        %v5951 = vmul.f32 %v5901, %v5901
        %v5952 = vmul.f32 %v5940, %v5940
        %v5953 = vmul.f32 %v5942, %v5942
        %v5954 = vmul.f32 %v5817, %v5946
        %v5955 = vmul.f32 %v5819, %v5947
        %v5956 = vmul.f32 %v5858, %v5948
        %v5957 = vmul.f32 %v5860, %v5949
        %v5958 = vmul.f32 %v5899, %v5950
        %v5959 = vmul.f32 %v5901, %v5951
        %v5960 = vmul.f32 %v5940, %v5952
        %v5961 = vmul.f32 %v5942, %v5953
        %v5962 = vmul.f32 %v5954, 0.044715
        %v5963 = vmul.f32 %v5955, 0.044715
        %v5964 = vmul.f32 %v5956, 0.044715
        %v5965 = vmul.f32 %v5957, 0.044715
        %v5966 = vmul.f32 %v5958, 0.044715
        %v5967 = vmul.f32 %v5959, 0.044715
        %v5968 = vmul.f32 %v5960, 0.044715
        %v5969 = vmul.f32 %v5961, 0.044715
        %v5970 = vadd.f32 %v5817, %v5962
        %v5971 = vadd.f32 %v5819, %v5963
        %v5972 = vadd.f32 %v5858, %v5964
        %v5973 = vadd.f32 %v5860, %v5965
        %v5974 = vadd.f32 %v5899, %v5966
        %v5975 = vadd.f32 %v5901, %v5967
        %v5976 = vadd.f32 %v5940, %v5968
        %v5977 = vadd.f32 %v5942, %v5969
        %v5978 = vmul.f32 %v5970, 0.7978846
        %v5979 = vmul.f32 %v5971, 0.7978846
        %v5980 = vmul.f32 %v5972, 0.7978846
        %v5981 = vmul.f32 %v5973, 0.7978846
        %v5982 = vmul.f32 %v5974, 0.7978846
        %v5983 = vmul.f32 %v5975, 0.7978846
        %v5984 = vmul.f32 %v5976, 0.7978846
        %v5985 = vmul.f32 %v5977, 0.7978846
        %v5986 = vtanh.pop %v5978
        %v5987 = vtanh.pop %v5979
        %v5988 = vtanh.pop %v5980
        %v5989 = vtanh.pop %v5981
        %v5990 = vtanh.pop %v5982
        %v5991 = vtanh.pop %v5983
        %v5992 = vtanh.pop %v5984
        %v5993 = vtanh.pop %v5985
        %v5994 = vadd.f32 %v5986, 1.0
        %v5995 = vadd.f32 %v5987, 1.0
        %v5996 = vadd.f32 %v5988, 1.0
        %v5997 = vadd.f32 %v5989, 1.0
        %v5998 = vadd.f32 %v5990, 1.0
        %v5999 = vadd.f32 %v5991, 1.0
        %v6000 = vadd.f32 %v5992, 1.0
        %v6001 = vadd.f32 %v5993, 1.0
        %v6002 = vmul.f32 %v5994, 0.5
        %v6003 = vmul.f32 %v5995, 0.5
        %v6004 = vmul.f32 %v5996, 0.5
        %v6005 = vmul.f32 %v5997, 0.5
        %v6006 = vmul.f32 %v5998, 0.5
        %v6007 = vmul.f32 %v5999, 0.5
        %v6008 = vmul.f32 %v6000, 0.5
        %v6009 = vmul.f32 %v6001, 0.5
        %v6010 = vmul.f32 %v5817, %v6002
        %v6011 = vmul.f32 %v5819, %v6003
        %v6012 = vmul.f32 %v5858, %v6004
        %v6013 = vmul.f32 %v5860, %v6005
        %v6014 = vmul.f32 %v5899, %v6006
        %v6015 = vmul.f32 %v5901, %v6007
        %v6016 = vmul.f32 %v5940, %v6008
        %v6017 = vmul.f32 %v5942, %v6009
        %v6018 = vpack.c.bf16 %v6010, %v6010
        %v6019 = vpack.c.bf16 %v6011, %v6011
        %v6020 = vpack.c.bf16 %v6012, %v6012
        %v6021 = vpack.c.bf16 %v6013, %v6013
        %v6022 = vpack.c.bf16 %v6014, %v6014
        %v6023 = vpack.c.bf16 %v6015, %v6015
        %v6024 = vpack.c.bf16 %v6016, %v6016
        %v6025 = vpack.c.bf16 %v6017, %v6017
        %s6026 = scalar_lea.vmem [#allocation13], 2048
        %v6027 = vld [vmem:[%s6026] sm:$0xff]
        %v6028 = vld [vmem:[%s6026 + $0x8] sm:$0xff]
        %v6029 = vld [vmem:[%s6026 + $0x10] sm:$0xff]
        %v6030 = vld [vmem:[%s6026 + $0x18] sm:$0xff]
        %v6031 = vld [vmem:[%s6026 + $0x20] sm:$0xff]
        %v6032 = vld [vmem:[%s6026 + $0x28] sm:$0xff]
        %v6033 = vld [vmem:[%s6026 + $0x30] sm:$0xff]
        %v6034 = vld [vmem:[%s6026 + $0x38] sm:$0xff]
        %v6035 = vld [vmem:[%s6026 + $0x40] sm:$0xff]
        %v6036 = vld [vmem:[%s6026 + $0x48] sm:$0xff]
        %v6037 = vld [vmem:[%s6026 + $0x50] sm:$0xff]
        %v6038 = vld [vmem:[%s6026 + $0x58] sm:$0xff]
        %v6039 = vld [vmem:[%s6026 + $0x60] sm:$0xff]
        %v6040 = vld [vmem:[%s6026 + $0x68] sm:$0xff]
        %v6041 = vld [vmem:[%s6026 + $0x70] sm:$0xff]
        %v6042 = vld [vmem:[%s6026 + $0x78] sm:$0xff]
        %v6043 = vld [vmem:[%s6026 + $0x80] sm:$0xff]
        %v6044 = vld [vmem:[%s6026 + $0x88] sm:$0xff]
        %v6045 = vld [vmem:[%s6026 + $0x90] sm:$0xff]
        %v6046 = vld [vmem:[%s6026 + $0x98] sm:$0xff]
        %v6047 = vld [vmem:[%s6026 + $0xa0] sm:$0xff]
        %v6048 = vld [vmem:[%s6026 + $0xa8] sm:$0xff]
        %v6049 = vld [vmem:[%s6026 + $0xb0] sm:$0xff]
        %v6050 = vld [vmem:[%s6026 + $0xb8] sm:$0xff]
        %v6051 = vld [vmem:[%s6026 + $0xc0] sm:$0xff]
        %v6052 = vld [vmem:[%s6026 + $0xc8] sm:$0xff]
        %v6053 = vld [vmem:[%s6026 + $0xd0] sm:$0xff]
        %v6054 = vld [vmem:[%s6026 + $0xd8] sm:$0xff]
        %v6055 = vld [vmem:[%s6026 + $0xe0] sm:$0xff]
        %v6056 = vld [vmem:[%s6026 + $0xe8] sm:$0xff]
        %v6057 = vld [vmem:[%s6026 + $0xf0] sm:$0xff]
        %v6058 = vld [vmem:[%s6026 + $0xf8] sm:$0xff]
        %v6059 = vld [vmem:[%s6026 + $0x100] sm:$0xff]
        %v6060 = vld [vmem:[%s6026 + $0x108] sm:$0xff]
        %v6061 = vld [vmem:[%s6026 + $0x110] sm:$0xff]
        %v6062 = vld [vmem:[%s6026 + $0x118] sm:$0xff]
        %v6063 = vld [vmem:[%s6026 + $0x120] sm:$0xff]
        %v6064 = vld [vmem:[%s6026 + $0x128] sm:$0xff]
        %v6065 = vld [vmem:[%s6026 + $0x130] sm:$0xff]
        %v6066 = vld [vmem:[%s6026 + $0x138] sm:$0xff]
        %v6067 = vld [vmem:[%s6026 + $0x140] sm:$0xff]
        %v6068 = vld [vmem:[%s6026 + $0x148] sm:$0xff]
        %v6069 = vld [vmem:[%s6026 + $0x150] sm:$0xff]
        %v6070 = vld [vmem:[%s6026 + $0x158] sm:$0xff]
        %v6071 = vld [vmem:[%s6026 + $0x160] sm:$0xff]
        %v6072 = vld [vmem:[%s6026 + $0x168] sm:$0xff]
        %v6073 = vld [vmem:[%s6026 + $0x170] sm:$0xff]
        %v6074 = vld [vmem:[%s6026 + $0x178] sm:$0xff]
        %v6075 = vld [vmem:[%s6026 + $0x180] sm:$0xff]
        %v6076 = vld [vmem:[%s6026 + $0x188] sm:$0xff]
        %v6077 = vld [vmem:[%s6026 + $0x190] sm:$0xff]
        %v6078 = vld [vmem:[%s6026 + $0x198] sm:$0xff]
        %v6079 = vld [vmem:[%s6026 + $0x1a0] sm:$0xff]
        %v6080 = vld [vmem:[%s6026 + $0x1a8] sm:$0xff]
        %v6081 = vld [vmem:[%s6026 + $0x1b0] sm:$0xff]
        %v6082 = vld [vmem:[%s6026 + $0x1b8] sm:$0xff]
        %v6083 = vld [vmem:[%s6026 + $0x1c0] sm:$0xff]
        %v6084 = vld [vmem:[%s6026 + $0x1c8] sm:$0xff]
        %v6085 = vld [vmem:[%s6026 + $0x1d0] sm:$0xff]
        %v6086 = vld [vmem:[%s6026 + $0x1d8] sm:$0xff]
        %v6087 = vld [vmem:[%s6026 + $0x1e0] sm:$0xff]
        %v6088 = vld [vmem:[%s6026 + $0x1e8] sm:$0xff]
        %v6089 = vld [vmem:[%s6026 + $0x1f0] sm:$0xff]
        %v6090 = vld [vmem:[%s6026 + $0x1f8] sm:$0xff]
        %v6091 = vld [vmem:[%s6026 + $0x200] sm:$0xff]
        %v6092 = vld [vmem:[%s6026 + $0x208] sm:$0xff]
        %v6093 = vld [vmem:[%s6026 + $0x210] sm:$0xff]
        %v6094 = vld [vmem:[%s6026 + $0x218] sm:$0xff]
        %v6095 = vld [vmem:[%s6026 + $0x220] sm:$0xff]
        %v6096 = vld [vmem:[%s6026 + $0x228] sm:$0xff]
        %v6097 = vld [vmem:[%s6026 + $0x230] sm:$0xff]
        %v6098 = vld [vmem:[%s6026 + $0x238] sm:$0xff]
        %v6099 = vld [vmem:[%s6026 + $0x240] sm:$0xff]
        %v6100 = vld [vmem:[%s6026 + $0x248] sm:$0xff]
        %v6101 = vld [vmem:[%s6026 + $0x250] sm:$0xff]
        %v6102 = vld [vmem:[%s6026 + $0x258] sm:$0xff]
        %v6103 = vld [vmem:[%s6026 + $0x260] sm:$0xff]
        %v6104 = vld [vmem:[%s6026 + $0x268] sm:$0xff]
        %v6105 = vld [vmem:[%s6026 + $0x270] sm:$0xff]
        %v6106 = vld [vmem:[%s6026 + $0x278] sm:$0xff]
        %v6107 = vld [vmem:[%s6026 + $0x280] sm:$0xff]
        %v6108 = vld [vmem:[%s6026 + $0x288] sm:$0xff]
        %v6109 = vld [vmem:[%s6026 + $0x290] sm:$0xff]
        %v6110 = vld [vmem:[%s6026 + $0x298] sm:$0xff]
        %v6111 = vld [vmem:[%s6026 + $0x2a0] sm:$0xff]
        %v6112 = vld [vmem:[%s6026 + $0x2a8] sm:$0xff]
        %v6113 = vld [vmem:[%s6026 + $0x2b0] sm:$0xff]
        %v6114 = vld [vmem:[%s6026 + $0x2b8] sm:$0xff]
        %v6115 = vld [vmem:[%s6026 + $0x2c0] sm:$0xff]
        %v6116 = vld [vmem:[%s6026 + $0x2c8] sm:$0xff]
        %v6117 = vld [vmem:[%s6026 + $0x2d0] sm:$0xff]
        %v6118 = vld [vmem:[%s6026 + $0x2d8] sm:$0xff]
        %v6119 = vld [vmem:[%s6026 + $0x2e0] sm:$0xff]
        %v6120 = vld [vmem:[%s6026 + $0x2e8] sm:$0xff]
        %v6121 = vld [vmem:[%s6026 + $0x2f0] sm:$0xff]
        %v6122 = vld [vmem:[%s6026 + $0x2f8] sm:$0xff]
        %v6123 = vld [vmem:[%s6026 + $0x300] sm:$0xff]
        %v6124 = vld [vmem:[%s6026 + $0x308] sm:$0xff]
        %v6125 = vld [vmem:[%s6026 + $0x310] sm:$0xff]
        %v6126 = vld [vmem:[%s6026 + $0x318] sm:$0xff]
        %v6127 = vld [vmem:[%s6026 + $0x320] sm:$0xff]
        %v6128 = vld [vmem:[%s6026 + $0x328] sm:$0xff]
        %v6129 = vld [vmem:[%s6026 + $0x330] sm:$0xff]
        %v6130 = vld [vmem:[%s6026 + $0x338] sm:$0xff]
        %v6131 = vld [vmem:[%s6026 + $0x340] sm:$0xff]
        %v6132 = vld [vmem:[%s6026 + $0x348] sm:$0xff]
        %v6133 = vld [vmem:[%s6026 + $0x350] sm:$0xff]
        %v6134 = vld [vmem:[%s6026 + $0x358] sm:$0xff]
        %v6135 = vld [vmem:[%s6026 + $0x360] sm:$0xff]
        %v6136 = vld [vmem:[%s6026 + $0x368] sm:$0xff]
        %v6137 = vld [vmem:[%s6026 + $0x370] sm:$0xff]
        %v6138 = vld [vmem:[%s6026 + $0x378] sm:$0xff]
        %v6139 = vld [vmem:[%s6026 + $0x380] sm:$0xff]
        %v6140 = vld [vmem:[%s6026 + $0x388] sm:$0xff]
        %v6141 = vld [vmem:[%s6026 + $0x390] sm:$0xff]
        %v6142 = vld [vmem:[%s6026 + $0x398] sm:$0xff]
        %v6143 = vld [vmem:[%s6026 + $0x3a0] sm:$0xff]
        %v6144 = vld [vmem:[%s6026 + $0x3a8] sm:$0xff]
        %v6145 = vld [vmem:[%s6026 + $0x3b0] sm:$0xff]
        %v6146 = vld [vmem:[%s6026 + $0x3b8] sm:$0xff]
        %v6147 = vld [vmem:[%s6026 + $0x3c0] sm:$0xff]
        %v6148 = vld [vmem:[%s6026 + $0x3c8] sm:$0xff]
        %v6149 = vld [vmem:[%s6026 + $0x3d0] sm:$0xff]
        %v6150 = vld [vmem:[%s6026 + $0x3d8] sm:$0xff]
        %v6151 = vld [vmem:[%s6026 + $0x3e0] sm:$0xff]
        %v6152 = vld [vmem:[%s6026 + $0x3e8] sm:$0xff]
        %v6153 = vld [vmem:[%s6026 + $0x3f0] sm:$0xff]
        %v6154 = vld [vmem:[%s6026 + $0x3f8] sm:$0xff]
        %s6155 = scalar_lea.vmem [#allocation15], 4
        %v6156 = vld [vmem:[%s6155] sm:$0x3]
        %v6158 = vlaneseq
        %v6159 = vshrl.u32 %v6158, 7
        %v6160 = vsub.s32 0, %v6159
        %v6161 = vrot.slane %v6156, %v6160
        %v6162 = vlaneseq
        %v6163 = vshrl.u32 %v6162, 7
        %v6164 = vsub.s32 1, %v6163
        %v6165 = vrot.slane %v6156, %v6164
        %v6296 = vunpack.c.l.b16 %v6027
        %v6297 = vunpack.c.h.b16 %v6027
        %v6298 = vunpack.c.l.b16 %v6028
        %v6299 = vunpack.c.h.b16 %v6028
        %v6300 = vunpack.c.l.b16 %v6029
        %v6301 = vunpack.c.h.b16 %v6029
        %v6302 = vunpack.c.l.b16 %v6030
        %v6303 = vunpack.c.h.b16 %v6030
        %v6304 = vunpack.c.l.b16 %v6031
        %v6305 = vunpack.c.h.b16 %v6031
        %v6306 = vunpack.c.l.b16 %v6032
        %v6307 = vunpack.c.h.b16 %v6032
        %v6308 = vunpack.c.l.b16 %v6033
        %v6309 = vunpack.c.h.b16 %v6033
        %v6310 = vunpack.c.l.b16 %v6034
        %v6311 = vunpack.c.h.b16 %v6034
        %v6312 = vunpack.c.l.b16 %v6035
        %v6313 = vunpack.c.h.b16 %v6035
        %v6314 = vunpack.c.l.b16 %v6036
        %v6315 = vunpack.c.h.b16 %v6036
        %v6316 = vunpack.c.l.b16 %v6037
        %v6317 = vunpack.c.h.b16 %v6037
        %v6318 = vunpack.c.l.b16 %v6038
        %v6319 = vunpack.c.h.b16 %v6038
        %v6320 = vunpack.c.l.b16 %v6039
        %v6321 = vunpack.c.h.b16 %v6039
        %v6322 = vunpack.c.l.b16 %v6040
        %v6323 = vunpack.c.h.b16 %v6040
        %v6324 = vunpack.c.l.b16 %v6041
        %v6325 = vunpack.c.h.b16 %v6041
        %v6326 = vunpack.c.l.b16 %v6042
        %v6327 = vunpack.c.h.b16 %v6042
        %v6328 = vunpack.c.l.b16 %v6043
        %v6329 = vunpack.c.h.b16 %v6043
        %v6330 = vunpack.c.l.b16 %v6044
        %v6331 = vunpack.c.h.b16 %v6044
        %v6332 = vunpack.c.l.b16 %v6045
        %v6333 = vunpack.c.h.b16 %v6045
        %v6334 = vunpack.c.l.b16 %v6046
        %v6335 = vunpack.c.h.b16 %v6046
        %v6336 = vunpack.c.l.b16 %v6047
        %v6337 = vunpack.c.h.b16 %v6047
        %v6338 = vunpack.c.l.b16 %v6048
        %v6339 = vunpack.c.h.b16 %v6048
        %v6340 = vunpack.c.l.b16 %v6049
        %v6341 = vunpack.c.h.b16 %v6049
        %v6342 = vunpack.c.l.b16 %v6050
        %v6343 = vunpack.c.h.b16 %v6050
        %v6344 = vunpack.c.l.b16 %v6051
        %v6345 = vunpack.c.h.b16 %v6051
        %v6346 = vunpack.c.l.b16 %v6052
        %v6347 = vunpack.c.h.b16 %v6052
        %v6348 = vunpack.c.l.b16 %v6053
        %v6349 = vunpack.c.h.b16 %v6053
        %v6350 = vunpack.c.l.b16 %v6054
        %v6351 = vunpack.c.h.b16 %v6054
        %v6352 = vunpack.c.l.b16 %v6055
        %v6353 = vunpack.c.h.b16 %v6055
        %v6354 = vunpack.c.l.b16 %v6056
        %v6355 = vunpack.c.h.b16 %v6056
        %v6356 = vunpack.c.l.b16 %v6057
        %v6357 = vunpack.c.h.b16 %v6057
        %v6358 = vunpack.c.l.b16 %v6058
        %v6359 = vunpack.c.h.b16 %v6058
        %v6360 = vunpack.c.l.b16 %v6059
        %v6361 = vunpack.c.h.b16 %v6059
        %v6362 = vunpack.c.l.b16 %v6060
        %v6363 = vunpack.c.h.b16 %v6060
        %v6364 = vunpack.c.l.b16 %v6061
        %v6365 = vunpack.c.h.b16 %v6061
        %v6366 = vunpack.c.l.b16 %v6062
        %v6367 = vunpack.c.h.b16 %v6062
        %v6368 = vunpack.c.l.b16 %v6063
        %v6369 = vunpack.c.h.b16 %v6063
        %v6370 = vunpack.c.l.b16 %v6064
        %v6371 = vunpack.c.h.b16 %v6064
        %v6372 = vunpack.c.l.b16 %v6065
        %v6373 = vunpack.c.h.b16 %v6065
        %v6374 = vunpack.c.l.b16 %v6066
        %v6375 = vunpack.c.h.b16 %v6066
        %v6376 = vunpack.c.l.b16 %v6067
        %v6377 = vunpack.c.h.b16 %v6067
        %v6378 = vunpack.c.l.b16 %v6068
        %v6379 = vunpack.c.h.b16 %v6068
        %v6380 = vunpack.c.l.b16 %v6069
        %v6381 = vunpack.c.h.b16 %v6069
        %v6382 = vunpack.c.l.b16 %v6070
        %v6383 = vunpack.c.h.b16 %v6070
        %v6384 = vunpack.c.l.b16 %v6071
        %v6385 = vunpack.c.h.b16 %v6071
        %v6386 = vunpack.c.l.b16 %v6072
        %v6387 = vunpack.c.h.b16 %v6072
        %v6388 = vunpack.c.l.b16 %v6073
        %v6389 = vunpack.c.h.b16 %v6073
        %v6390 = vunpack.c.l.b16 %v6074
        %v6391 = vunpack.c.h.b16 %v6074
        %v6392 = vunpack.c.l.b16 %v6075
        %v6393 = vunpack.c.h.b16 %v6075
        %v6394 = vunpack.c.l.b16 %v6076
        %v6395 = vunpack.c.h.b16 %v6076
        %v6396 = vunpack.c.l.b16 %v6077
        %v6397 = vunpack.c.h.b16 %v6077
        %v6398 = vunpack.c.l.b16 %v6078
        %v6399 = vunpack.c.h.b16 %v6078
        %v6400 = vunpack.c.l.b16 %v6079
        %v6401 = vunpack.c.h.b16 %v6079
        %v6402 = vunpack.c.l.b16 %v6080
        %v6403 = vunpack.c.h.b16 %v6080
        %v6404 = vunpack.c.l.b16 %v6081
        %v6405 = vunpack.c.h.b16 %v6081
        %v6406 = vunpack.c.l.b16 %v6082
        %v6407 = vunpack.c.h.b16 %v6082
        %v6408 = vunpack.c.l.b16 %v6083
        %v6409 = vunpack.c.h.b16 %v6083
        %v6410 = vunpack.c.l.b16 %v6084
        %v6411 = vunpack.c.h.b16 %v6084
        %v6412 = vunpack.c.l.b16 %v6085
        %v6413 = vunpack.c.h.b16 %v6085
        %v6414 = vunpack.c.l.b16 %v6086
        %v6415 = vunpack.c.h.b16 %v6086
        %v6416 = vunpack.c.l.b16 %v6087
        %v6417 = vunpack.c.h.b16 %v6087
        %v6418 = vunpack.c.l.b16 %v6088
        %v6419 = vunpack.c.h.b16 %v6088
        %v6420 = vunpack.c.l.b16 %v6089
        %v6421 = vunpack.c.h.b16 %v6089
        %v6422 = vunpack.c.l.b16 %v6090
        %v6423 = vunpack.c.h.b16 %v6090
        %v6424 = vunpack.c.l.b16 %v6091
        %v6425 = vunpack.c.h.b16 %v6091
        %v6426 = vunpack.c.l.b16 %v6092
        %v6427 = vunpack.c.h.b16 %v6092
        %v6428 = vunpack.c.l.b16 %v6093
        %v6429 = vunpack.c.h.b16 %v6093
        %v6430 = vunpack.c.l.b16 %v6094
        %v6431 = vunpack.c.h.b16 %v6094
        %v6432 = vunpack.c.l.b16 %v6095
        %v6433 = vunpack.c.h.b16 %v6095
        %v6434 = vunpack.c.l.b16 %v6096
        %v6435 = vunpack.c.h.b16 %v6096
        %v6436 = vunpack.c.l.b16 %v6097
        %v6437 = vunpack.c.h.b16 %v6097
        %v6438 = vunpack.c.l.b16 %v6098
        %v6439 = vunpack.c.h.b16 %v6098
        %v6440 = vunpack.c.l.b16 %v6099
        %v6441 = vunpack.c.h.b16 %v6099
        %v6442 = vunpack.c.l.b16 %v6100
        %v6443 = vunpack.c.h.b16 %v6100
        %v6444 = vunpack.c.l.b16 %v6101
        %v6445 = vunpack.c.h.b16 %v6101
        %v6446 = vunpack.c.l.b16 %v6102
        %v6447 = vunpack.c.h.b16 %v6102
        %v6448 = vunpack.c.l.b16 %v6103
        %v6449 = vunpack.c.h.b16 %v6103
        %v6450 = vunpack.c.l.b16 %v6104
        %v6451 = vunpack.c.h.b16 %v6104
        %v6452 = vunpack.c.l.b16 %v6105
        %v6453 = vunpack.c.h.b16 %v6105
        %v6454 = vunpack.c.l.b16 %v6106
        %v6455 = vunpack.c.h.b16 %v6106
        %v6456 = vunpack.c.l.b16 %v6107
        %v6457 = vunpack.c.h.b16 %v6107
        %v6458 = vunpack.c.l.b16 %v6108
        %v6459 = vunpack.c.h.b16 %v6108
        %v6460 = vunpack.c.l.b16 %v6109
        %v6461 = vunpack.c.h.b16 %v6109
        %v6462 = vunpack.c.l.b16 %v6110
        %v6463 = vunpack.c.h.b16 %v6110
        %v6464 = vunpack.c.l.b16 %v6111
        %v6465 = vunpack.c.h.b16 %v6111
        %v6466 = vunpack.c.l.b16 %v6112
        %v6467 = vunpack.c.h.b16 %v6112
        %v6468 = vunpack.c.l.b16 %v6113
        %v6469 = vunpack.c.h.b16 %v6113
        %v6470 = vunpack.c.l.b16 %v6114
        %v6471 = vunpack.c.h.b16 %v6114
        %v6472 = vunpack.c.l.b16 %v6115
        %v6473 = vunpack.c.h.b16 %v6115
        %v6474 = vunpack.c.l.b16 %v6116
        %v6475 = vunpack.c.h.b16 %v6116
        %v6476 = vunpack.c.l.b16 %v6117
        %v6477 = vunpack.c.h.b16 %v6117
        %v6478 = vunpack.c.l.b16 %v6118
        %v6479 = vunpack.c.h.b16 %v6118
        %v6480 = vunpack.c.l.b16 %v6119
        %v6481 = vunpack.c.h.b16 %v6119
        %v6482 = vunpack.c.l.b16 %v6120
        %v6483 = vunpack.c.h.b16 %v6120
        %v6484 = vunpack.c.l.b16 %v6121
        %v6485 = vunpack.c.h.b16 %v6121
        %v6486 = vunpack.c.l.b16 %v6122
        %v6487 = vunpack.c.h.b16 %v6122
        %v6488 = vunpack.c.l.b16 %v6123
        %v6489 = vunpack.c.h.b16 %v6123
        %v6490 = vunpack.c.l.b16 %v6124
        %v6491 = vunpack.c.h.b16 %v6124
        %v6492 = vunpack.c.l.b16 %v6125
        %v6493 = vunpack.c.h.b16 %v6125
        %v6494 = vunpack.c.l.b16 %v6126
        %v6495 = vunpack.c.h.b16 %v6126
        %v6496 = vunpack.c.l.b16 %v6127
        %v6497 = vunpack.c.h.b16 %v6127
        %v6498 = vunpack.c.l.b16 %v6128
        %v6499 = vunpack.c.h.b16 %v6128
        %v6500 = vunpack.c.l.b16 %v6129
        %v6501 = vunpack.c.h.b16 %v6129
        %v6502 = vunpack.c.l.b16 %v6130
        %v6503 = vunpack.c.h.b16 %v6130
        %v6504 = vunpack.c.l.b16 %v6131
        %v6505 = vunpack.c.h.b16 %v6131
        %v6506 = vunpack.c.l.b16 %v6132
        %v6507 = vunpack.c.h.b16 %v6132
        %v6508 = vunpack.c.l.b16 %v6133
        %v6509 = vunpack.c.h.b16 %v6133
        %v6510 = vunpack.c.l.b16 %v6134
        %v6511 = vunpack.c.h.b16 %v6134
        %v6512 = vunpack.c.l.b16 %v6135
        %v6513 = vunpack.c.h.b16 %v6135
        %v6514 = vunpack.c.l.b16 %v6136
        %v6515 = vunpack.c.h.b16 %v6136
        %v6516 = vunpack.c.l.b16 %v6137
        %v6517 = vunpack.c.h.b16 %v6137
        %v6518 = vunpack.c.l.b16 %v6138
        %v6519 = vunpack.c.h.b16 %v6138
        %v6520 = vunpack.c.l.b16 %v6139
        %v6521 = vunpack.c.h.b16 %v6139
        %v6522 = vunpack.c.l.b16 %v6140
        %v6523 = vunpack.c.h.b16 %v6140
        %v6524 = vunpack.c.l.b16 %v6141
        %v6525 = vunpack.c.h.b16 %v6141
        %v6526 = vunpack.c.l.b16 %v6142
        %v6527 = vunpack.c.h.b16 %v6142
        %v6528 = vunpack.c.l.b16 %v6143
        %v6529 = vunpack.c.h.b16 %v6143
        %v6530 = vunpack.c.l.b16 %v6144
        %v6531 = vunpack.c.h.b16 %v6144
        %v6532 = vunpack.c.l.b16 %v6145
        %v6533 = vunpack.c.h.b16 %v6145
        %v6534 = vunpack.c.l.b16 %v6146
        %v6535 = vunpack.c.h.b16 %v6146
        %v6536 = vunpack.c.l.b16 %v6147
        %v6537 = vunpack.c.h.b16 %v6147
        %v6538 = vunpack.c.l.b16 %v6148
        %v6539 = vunpack.c.h.b16 %v6148
        %v6540 = vunpack.c.l.b16 %v6149
        %v6541 = vunpack.c.h.b16 %v6149
        %v6542 = vunpack.c.l.b16 %v6150
        %v6543 = vunpack.c.h.b16 %v6150
        %v6544 = vunpack.c.l.b16 %v6151
        %v6545 = vunpack.c.h.b16 %v6151
        %v6546 = vunpack.c.l.b16 %v6152
        %v6547 = vunpack.c.h.b16 %v6152
        %v6548 = vunpack.c.l.b16 %v6153
        %v6549 = vunpack.c.h.b16 %v6153
        %v6550 = vunpack.c.l.b16 %v6154
        %v6551 = vunpack.c.h.b16 %v6154
        %v6552 = vpack.c.b16 %v6298, %v6296
        %v6553 = vpack.c.b16 %v6299, %v6297
        %v6554 = vpack.c.b16 %v6302, %v6300
        %v6555 = vpack.c.b16 %v6303, %v6301
        %v6556 = vpack.c.b16 %v6306, %v6304
        %v6557 = vpack.c.b16 %v6307, %v6305
        %v6558 = vpack.c.b16 %v6310, %v6308
        %v6559 = vpack.c.b16 %v6311, %v6309
        %v6560 = vpack.c.b16 %v6314, %v6312
        %v6561 = vpack.c.b16 %v6315, %v6313
        %v6562 = vpack.c.b16 %v6318, %v6316
        %v6563 = vpack.c.b16 %v6319, %v6317
        %v6564 = vpack.c.b16 %v6322, %v6320
        %v6565 = vpack.c.b16 %v6323, %v6321
        %v6566 = vpack.c.b16 %v6326, %v6324
        %v6567 = vpack.c.b16 %v6327, %v6325
        %v6568 = vpack.c.b16 %v6330, %v6328
        %v6569 = vpack.c.b16 %v6331, %v6329
        %v6570 = vpack.c.b16 %v6334, %v6332
        %v6571 = vpack.c.b16 %v6335, %v6333
        %v6572 = vpack.c.b16 %v6338, %v6336
        %v6573 = vpack.c.b16 %v6339, %v6337
        %v6574 = vpack.c.b16 %v6342, %v6340
        %v6575 = vpack.c.b16 %v6343, %v6341
        %v6576 = vpack.c.b16 %v6346, %v6344
        %v6577 = vpack.c.b16 %v6347, %v6345
        %v6578 = vpack.c.b16 %v6350, %v6348
        %v6579 = vpack.c.b16 %v6351, %v6349
        %v6580 = vpack.c.b16 %v6354, %v6352
        %v6581 = vpack.c.b16 %v6355, %v6353
        %v6582 = vpack.c.b16 %v6358, %v6356
        %v6583 = vpack.c.b16 %v6359, %v6357
        %v6584 = vpack.c.b16 %v6362, %v6360
        %v6585 = vpack.c.b16 %v6363, %v6361
        %v6586 = vpack.c.b16 %v6366, %v6364
        %v6587 = vpack.c.b16 %v6367, %v6365
        %v6588 = vpack.c.b16 %v6370, %v6368
        %v6589 = vpack.c.b16 %v6371, %v6369
        %v6590 = vpack.c.b16 %v6374, %v6372
        %v6591 = vpack.c.b16 %v6375, %v6373
        %v6592 = vpack.c.b16 %v6378, %v6376
        %v6593 = vpack.c.b16 %v6379, %v6377
        %v6594 = vpack.c.b16 %v6382, %v6380
        %v6595 = vpack.c.b16 %v6383, %v6381
        %v6596 = vpack.c.b16 %v6386, %v6384
        %v6597 = vpack.c.b16 %v6387, %v6385
        %v6598 = vpack.c.b16 %v6390, %v6388
        %v6599 = vpack.c.b16 %v6391, %v6389
        %v6600 = vpack.c.b16 %v6394, %v6392
        %v6601 = vpack.c.b16 %v6395, %v6393
        %v6602 = vpack.c.b16 %v6398, %v6396
        %v6603 = vpack.c.b16 %v6399, %v6397
        %v6604 = vpack.c.b16 %v6402, %v6400
        %v6605 = vpack.c.b16 %v6403, %v6401
        %v6606 = vpack.c.b16 %v6406, %v6404
        %v6607 = vpack.c.b16 %v6407, %v6405
        %v6608 = vpack.c.b16 %v6410, %v6408
        %v6609 = vpack.c.b16 %v6411, %v6409
        %v6610 = vpack.c.b16 %v6414, %v6412
        %v6611 = vpack.c.b16 %v6415, %v6413
        %v6612 = vpack.c.b16 %v6418, %v6416
        %v6613 = vpack.c.b16 %v6419, %v6417
        %v6614 = vpack.c.b16 %v6422, %v6420
        %v6615 = vpack.c.b16 %v6423, %v6421
        %v6616 = vpack.c.b16 %v6426, %v6424
        %v6617 = vpack.c.b16 %v6427, %v6425
        %v6618 = vpack.c.b16 %v6430, %v6428
        %v6619 = vpack.c.b16 %v6431, %v6429
        %v6620 = vpack.c.b16 %v6434, %v6432
        %v6621 = vpack.c.b16 %v6435, %v6433
        %v6622 = vpack.c.b16 %v6438, %v6436
        %v6623 = vpack.c.b16 %v6439, %v6437
        %v6624 = vpack.c.b16 %v6442, %v6440
        %v6625 = vpack.c.b16 %v6443, %v6441
        %v6626 = vpack.c.b16 %v6446, %v6444
        %v6627 = vpack.c.b16 %v6447, %v6445
        %v6628 = vpack.c.b16 %v6450, %v6448
        %v6629 = vpack.c.b16 %v6451, %v6449
        %v6630 = vpack.c.b16 %v6454, %v6452
        %v6631 = vpack.c.b16 %v6455, %v6453
        %v6632 = vpack.c.b16 %v6458, %v6456
        %v6633 = vpack.c.b16 %v6459, %v6457
        %v6634 = vpack.c.b16 %v6462, %v6460
        %v6635 = vpack.c.b16 %v6463, %v6461
        %v6636 = vpack.c.b16 %v6466, %v6464
        %v6637 = vpack.c.b16 %v6467, %v6465
        %v6638 = vpack.c.b16 %v6470, %v6468
        %v6639 = vpack.c.b16 %v6471, %v6469
        %v6640 = vpack.c.b16 %v6474, %v6472
        %v6641 = vpack.c.b16 %v6475, %v6473
        %v6642 = vpack.c.b16 %v6478, %v6476
        %v6643 = vpack.c.b16 %v6479, %v6477
        %v6644 = vpack.c.b16 %v6482, %v6480
        %v6645 = vpack.c.b16 %v6483, %v6481
        %v6646 = vpack.c.b16 %v6486, %v6484
        %v6647 = vpack.c.b16 %v6487, %v6485
        %v6648 = vpack.c.b16 %v6490, %v6488
        %v6649 = vpack.c.b16 %v6491, %v6489
        %v6650 = vpack.c.b16 %v6494, %v6492
        %v6651 = vpack.c.b16 %v6495, %v6493
        %v6652 = vpack.c.b16 %v6498, %v6496
        %v6653 = vpack.c.b16 %v6499, %v6497
        %v6654 = vpack.c.b16 %v6502, %v6500
        %v6655 = vpack.c.b16 %v6503, %v6501
        %v6656 = vpack.c.b16 %v6506, %v6504
        %v6657 = vpack.c.b16 %v6507, %v6505
        %v6658 = vpack.c.b16 %v6510, %v6508
        %v6659 = vpack.c.b16 %v6511, %v6509
        %v6660 = vpack.c.b16 %v6514, %v6512
        %v6661 = vpack.c.b16 %v6515, %v6513
        %v6662 = vpack.c.b16 %v6518, %v6516
        %v6663 = vpack.c.b16 %v6519, %v6517
        %v6664 = vpack.c.b16 %v6522, %v6520
        %v6665 = vpack.c.b16 %v6523, %v6521
        %v6666 = vpack.c.b16 %v6526, %v6524
        %v6667 = vpack.c.b16 %v6527, %v6525
        %v6668 = vpack.c.b16 %v6530, %v6528
        %v6669 = vpack.c.b16 %v6531, %v6529
        %v6670 = vpack.c.b16 %v6534, %v6532
        %v6671 = vpack.c.b16 %v6535, %v6533
        %v6672 = vpack.c.b16 %v6538, %v6536
        %v6673 = vpack.c.b16 %v6539, %v6537
        %v6674 = vpack.c.b16 %v6542, %v6540
        %v6675 = vpack.c.b16 %v6543, %v6541
        %v6676 = vpack.c.b16 %v6546, %v6544
        %v6677 = vpack.c.b16 %v6547, %v6545
        %v6678 = vpack.c.b16 %v6550, %v6548
        %v6679 = vpack.c.b16 %v6551, %v6549
        %6808 = vmatprep.subr.bf16.mxu0 %v6567
        %6809 = vmatpush1.bf16.msra.mxu0 %v6566
        %6810 = vmatprep.subr.bf16.mxu0 %v6565
        %6811 = vmatpush1.bf16.msra.mxu0 %v6564
        %6812 = vmatprep.subr.bf16.mxu0 %v6563
        %6813 = vmatpush1.bf16.msra.mxu0 %v6562
        %6814 = vmatprep.subr.bf16.mxu0 %v6561
        %6815 = vmatpush1.bf16.msra.mxu0 %v6560
        %6816 = vmatprep.subr.bf16.mxu0 %v6559
        %6817 = vmatpush1.bf16.msra.mxu0 %v6558
        %6818 = vmatprep.subr.bf16.mxu0 %v6557
        %6819 = vmatpush1.bf16.msra.mxu0 %v6556
        %6820 = vmatprep.subr.bf16.mxu0 %v6555
        %6821 = vmatpush1.bf16.msra.mxu0 %v6554
        %6822 = vmatprep.subr.bf16.mxu0 %v6553
        %6823 = vmatpush1.bf16.msra.mxu0 %v6552
        %6824 = vmatprep.subr.bf16.mxu0 %v6583
        %6825 = vmatpush2.bf16.msra.mxu0 %v6582
        %6826 = vmatprep.subr.bf16.mxu0 %v6581
        %6827 = vmatpush2.bf16.msra.mxu0 %v6580
        %6828 = vmatprep.subr.bf16.mxu0 %v6579
        %6829 = vmatpush2.bf16.msra.mxu0 %v6578
        %6830 = vmatprep.subr.bf16.mxu0 %v6577
        %6831 = vmatpush2.bf16.msra.mxu0 %v6576
        %6832 = vmatprep.subr.bf16.mxu0 %v6575
        %6833 = vmatpush2.bf16.msra.mxu0 %v6574
        %6834 = vmatprep.subr.bf16.mxu0 %v6573
        %6835 = vmatpush2.bf16.msra.mxu0 %v6572
        %6836 = vmatprep.subr.bf16.mxu0 %v6571
        %6837 = vmatpush2.bf16.msra.mxu0 %v6570
        %6838 = vmatprep.subr.bf16.mxu0 %v6569
        %6839 = vmatpush2.bf16.msra.mxu0 %v6568
        %6840 = vmatprep.mubr.bf16.mxu0 %v6019
        %6841 = vmatmul.mubr.bf16.gmra.mxu0 %v6018
        %v6842 = vpop.f32.mrf.mxu0
        %v6843 = vadd.f32 %v6161, %v6842
        %v6844 = vpop.f32.mrf.mxu0
        %v6845 = vadd.f32 %v6165, %v6844
        %v6846 = vpop.f32.mrf.mxu0
        %v6847 = vpop.f32.mrf.mxu0
        %6848 = vdwg.mxu0
        %6849 = vmatprep.subr.bf16.mxu0 %v6599
        %6850 = vmatpush1.bf16.msra.mxu0 %v6598
        %6851 = vmatprep.subr.bf16.mxu0 %v6597
        %6852 = vmatpush1.bf16.msra.mxu0 %v6596
        %6853 = vmatprep.subr.bf16.mxu0 %v6595
        %6854 = vmatpush1.bf16.msra.mxu0 %v6594
        %6855 = vmatprep.subr.bf16.mxu0 %v6593
        %6856 = vmatpush1.bf16.msra.mxu0 %v6592
        %6857 = vmatprep.subr.bf16.mxu0 %v6591
        %6858 = vmatpush1.bf16.msra.mxu0 %v6590
        %6859 = vmatprep.subr.bf16.mxu0 %v6589
        %6860 = vmatpush1.bf16.msra.mxu0 %v6588
        %6861 = vmatprep.subr.bf16.mxu0 %v6587
        %6862 = vmatpush1.bf16.msra.mxu0 %v6586
        %6863 = vmatprep.subr.bf16.mxu0 %v6585
        %6864 = vmatpush1.bf16.msra.mxu0 %v6584
        %6865 = vmatprep.subr.bf16.mxu0 %v6615
        %6866 = vmatpush2.bf16.msra.mxu0 %v6614
        %6867 = vmatprep.subr.bf16.mxu0 %v6613
        %6868 = vmatpush2.bf16.msra.mxu0 %v6612
        %6869 = vmatprep.subr.bf16.mxu0 %v6611
        %6870 = vmatpush2.bf16.msra.mxu0 %v6610
        %6871 = vmatprep.subr.bf16.mxu0 %v6609
        %6872 = vmatpush2.bf16.msra.mxu0 %v6608
        %6873 = vmatprep.subr.bf16.mxu0 %v6607
        %6874 = vmatpush2.bf16.msra.mxu0 %v6606
        %6875 = vmatprep.subr.bf16.mxu0 %v6605
        %6876 = vmatpush2.bf16.msra.mxu0 %v6604
        %6877 = vmatprep.subr.bf16.mxu0 %v6603
        %6878 = vmatpush2.bf16.msra.mxu0 %v6602
        %6879 = vmatprep.subr.bf16.mxu0 %v6601
        %6880 = vmatpush2.bf16.msra.mxu0 %v6600
        %6881 = vmatprep.mubr.bf16.mxu0 %v6021
        %6882 = vmatmul.mubr.bf16.gmra.mxu0 %v6020
        %v6883 = vpop.f32.mrf.mxu0
        %v6884 = vadd.f32 %v6843, %v6883
        %v6885 = vpop.f32.mrf.mxu0
        %v6886 = vadd.f32 %v6845, %v6885
        %v6887 = vpop.f32.mrf.mxu0
        %v6888 = vpop.f32.mrf.mxu0
        %6889 = vdwg.mxu0
        %6890 = vmatprep.subr.bf16.mxu0 %v6631
        %6891 = vmatpush1.bf16.msra.mxu0 %v6630
        %6892 = vmatprep.subr.bf16.mxu0 %v6629
        %6893 = vmatpush1.bf16.msra.mxu0 %v6628
        %6894 = vmatprep.subr.bf16.mxu0 %v6627
        %6895 = vmatpush1.bf16.msra.mxu0 %v6626
        %6896 = vmatprep.subr.bf16.mxu0 %v6625
        %6897 = vmatpush1.bf16.msra.mxu0 %v6624
        %6898 = vmatprep.subr.bf16.mxu0 %v6623
        %6899 = vmatpush1.bf16.msra.mxu0 %v6622
        %6900 = vmatprep.subr.bf16.mxu0 %v6621
        %6901 = vmatpush1.bf16.msra.mxu0 %v6620
        %6902 = vmatprep.subr.bf16.mxu0 %v6619
        %6903 = vmatpush1.bf16.msra.mxu0 %v6618
        %6904 = vmatprep.subr.bf16.mxu0 %v6617
        %6905 = vmatpush1.bf16.msra.mxu0 %v6616
        %6906 = vmatprep.subr.bf16.mxu0 %v6647
        %6907 = vmatpush2.bf16.msra.mxu0 %v6646
        %6908 = vmatprep.subr.bf16.mxu0 %v6645
        %6909 = vmatpush2.bf16.msra.mxu0 %v6644
        %6910 = vmatprep.subr.bf16.mxu0 %v6643
        %6911 = vmatpush2.bf16.msra.mxu0 %v6642
        %6912 = vmatprep.subr.bf16.mxu0 %v6641
        %6913 = vmatpush2.bf16.msra.mxu0 %v6640
        %6914 = vmatprep.subr.bf16.mxu0 %v6639
        %6915 = vmatpush2.bf16.msra.mxu0 %v6638
        %6916 = vmatprep.subr.bf16.mxu0 %v6637
        %6917 = vmatpush2.bf16.msra.mxu0 %v6636
        %6918 = vmatprep.subr.bf16.mxu0 %v6635
        %6919 = vmatpush2.bf16.msra.mxu0 %v6634
        %6920 = vmatprep.subr.bf16.mxu0 %v6633
        %6921 = vmatpush2.bf16.msra.mxu0 %v6632
        %6922 = vmatprep.mubr.bf16.mxu0 %v6023
        %6923 = vmatmul.mubr.bf16.gmra.mxu0 %v6022
        %v6924 = vpop.f32.mrf.mxu0
        %v6925 = vadd.f32 %v6884, %v6924
        %v6926 = vpop.f32.mrf.mxu0
        %v6927 = vadd.f32 %v6886, %v6926
        %v6928 = vpop.f32.mrf.mxu0
        %v6929 = vpop.f32.mrf.mxu0
        %6930 = vdwg.mxu0
        %6931 = vmatprep.subr.bf16.mxu0 %v6663
        %6932 = vmatpush1.bf16.msra.mxu0 %v6662
        %6933 = vmatprep.subr.bf16.mxu0 %v6661
        %6934 = vmatpush1.bf16.msra.mxu0 %v6660
        %6935 = vmatprep.subr.bf16.mxu0 %v6659
        %6936 = vmatpush1.bf16.msra.mxu0 %v6658
        %6937 = vmatprep.subr.bf16.mxu0 %v6657
        %6938 = vmatpush1.bf16.msra.mxu0 %v6656
        %6939 = vmatprep.subr.bf16.mxu0 %v6655
        %6940 = vmatpush1.bf16.msra.mxu0 %v6654
        %6941 = vmatprep.subr.bf16.mxu0 %v6653
        %6942 = vmatpush1.bf16.msra.mxu0 %v6652
        %6943 = vmatprep.subr.bf16.mxu0 %v6651
        %6944 = vmatpush1.bf16.msra.mxu0 %v6650
        %6945 = vmatprep.subr.bf16.mxu0 %v6649
        %6946 = vmatpush1.bf16.msra.mxu0 %v6648
        %6947 = vmatprep.subr.bf16.mxu0 %v6679
        %6948 = vmatpush2.bf16.msra.mxu0 %v6678
        %6949 = vmatprep.subr.bf16.mxu0 %v6677
        %6950 = vmatpush2.bf16.msra.mxu0 %v6676
        %6951 = vmatprep.subr.bf16.mxu0 %v6675
        %6952 = vmatpush2.bf16.msra.mxu0 %v6674
        %6953 = vmatprep.subr.bf16.mxu0 %v6673
        %6954 = vmatpush2.bf16.msra.mxu0 %v6672
        %6955 = vmatprep.subr.bf16.mxu0 %v6671
        %6956 = vmatpush2.bf16.msra.mxu0 %v6670
        %6957 = vmatprep.subr.bf16.mxu0 %v6669
        %6958 = vmatpush2.bf16.msra.mxu0 %v6668
        %6959 = vmatprep.subr.bf16.mxu0 %v6667
        %6960 = vmatpush2.bf16.msra.mxu0 %v6666
        %6961 = vmatprep.subr.bf16.mxu0 %v6665
        %6962 = vmatpush2.bf16.msra.mxu0 %v6664
        %6963 = vmatprep.mubr.bf16.mxu0 %v6025
        %6964 = vmatmul.mubr.bf16.gmra.mxu0 %v6024
        %v6965 = vpop.f32.mrf.mxu0
        %v6966 = vadd.f32 %v6925, %v6965
        %v6967 = vpop.f32.mrf.mxu0
        %v6968 = vadd.f32 %v6927, %v6967
        %v6969 = vpop.f32.mrf.mxu0
        %v6970 = vpop.f32.mrf.mxu0
        %6971 = vdwg.mxu0
        %v6972 = vadd.f32 %v4960, %v6966
        %v6973 = vadd.f32 %v4961, %v6968
        %v6974 = vadd.f32 %v6972, %v6973
        %6975 = vadd.xlane.f32.xlu0 %v6974
        %v6976 = vpop.xlane.xlu0 %6975
        %v6977 = vmul.f32 %v6976, %v2862
        %v6978 = vsub.f32 %v6972, %v6977
        %v6979 = vsub.f32 %v6973, %v6977
        %v6980 = vmul.f32 %v6978, %v6978
        %v6981 = vmul.f32 %v6979, %v6979
        %v6982 = vadd.f32 %v6980, %v6981
        %6983 = vadd.xlane.f32.xlu0 %v6982
        %v6984 = vpop.xlane.xlu0 %6983
        %v6985 = vmul.f32 %v6984, %v2862
        %v6986 = vadd.f32 %v6985, 1e-05
        %v6987 = vrsqrt.pop %v6986
        %v6988 = vmul.f32 %v6978, %v6987
        %v6989 = vmul.f32 %v6979, %v6987
        %s6990 = scalar_lea.vmem [#allocation16], 4
        %v6991 = vld [vmem:[%s6990] sm:$0x3]
        %v6993 = vlaneseq
        %v6994 = vshrl.u32 %v6993, 7
        %v6995 = vsub.s32 0, %v6994
        %v6996 = vrot.slane %v6991, %v6995
        %v6997 = vlaneseq
        %v6998 = vshrl.u32 %v6997, 7
        %v6999 = vsub.s32 1, %v6998
        %v7000 = vrot.slane %v6991, %v6999
        %v7003 = vmul.f32 %v6988, %v6996
        %v7004 = vmul.f32 %v6989, %v7000
        %s7005 = scalar_lea.vmem [#allocation18], 4
        %v7006 = vld [vmem:[%s7005] sm:$0x3]
        %v7008 = vlaneseq
        %v7009 = vshrl.u32 %v7008, 7
        %v7010 = vsub.s32 0, %v7009
        %v7011 = vrot.slane %v7006, %v7010
        %v7012 = vlaneseq
        %v7013 = vshrl.u32 %v7012, 7
        %v7014 = vsub.s32 1, %v7013
        %v7015 = vrot.slane %v7006, %v7014
        %v7018 = vadd.f32 %v7003, %v7011
        %v7019 = vadd.f32 %v7004, %v7015
        %s7020 = sld [smem:[#allocation2 + $0x3]]
        %v7021 = vstv %s7020
        %v7022 = vmul.f32 %v7021, %v7018
        %v7023 = vmul.f32 %v7021, %v7019
        %v7024 = vadd.f32 %v4966, %v7022
        %v7025 = vadd.f32 %v4967, %v7023
        %v7026 = vpack.c.bf16 %v7024, %v7024
        %v7027 = vpack.c.bf16 %v7025, %v7025
        %v7030 = vunpack.c.l.b16 %v7026
        %v7031 = vunpack.c.l.b16 %v7027
        %v7032 = vpack.c.b16 %v7031, %v7030
        %7034 = vst [vmem:[%s501] sm:$0xff] %v7032
        %s7035 = sand.u32 %s255, 1
        %s7036 = scalar_lea.sflag [#allocation4], %s7035
        %s7037 = sand.u32 %s255, 1
        %s7038 = smul.addr %s7037, 8
        %s7039 = scalar_lea.vmem [#allocation19], %s7038
        // Predicated region
        $region101: #{tpu_custom_call.1} parent=59 // pred_check
          %p7040 = pneg %p265
        $region102: #{tpu_custom_call.1} parent=59 // pred_check_branch
          %7042 = sbr.rel (%p7040) target = $region104
        $region103: #{tpu_custom_call.1} parent=59 // pred_region
          %s7044 = ssub.s32 128, 128
          %7045 = vsyncadd %s7036, %s7044
          %s7046 = smul.addr %s32, 2
          %s7047 = smul.addr %s7046, 64
          %s7048 = scalar_lea.hbm %s10, %s7047
          %s7050 = sshll.u32 %s7039, 4
          %s7051 = int_to_ptr.vmem [resolvable:$true] %s7050
          %7053 = dma.vmem_to_hbm [thread:$0]  %s7051, 128, %s7048, %s7036
        $region104: #{tpu_custom_call.1} parent=59 // pred_fallthru
          _
      $region60: #{tpu_custom_call.1} parent=5 // pred_fallthru
        _
      %p7054 = scmp.le.s32.totalorder 2, %s27
      // Predicated region
      $region105: #{tpu_custom_call.1} parent=5 // pred_check
        %p7055 = pneg %p7054
      $region106: #{tpu_custom_call.1} parent=5 // pred_check_branch
        %7057 = sbr.rel (%p7055) target = $region108
      $region107: #{tpu_custom_call.1} parent=5 // pred_region
        %s7058 = ssub.s32 %s27, 2
        // Predicated region
        $region109: #{tpu_custom_call.1} parent=107 // pred_check
          %p7059 = pneg %p271
        $region110: #{tpu_custom_call.1} parent=107 // pred_check_branch
          %7061 = sbr.rel (%p7059) target = $region112
        $region111: #{tpu_custom_call.1} parent=107 // pred_region
          %s7062 = sand.u32 %s256, 1
          %s7063 = scalar_lea.sflag [#allocation4], %s7062
          %s7064 = sand.u32 %s256, 1
          %s7065 = smul.addr %s7064, 8
          %s7066 = scalar_lea.vmem [#allocation19], %s7065
          %7067 = dma.done %s7063, 128
        $region112: #{tpu_custom_call.1} parent=107 // pred_fallthru
          _
      $region108: #{tpu_custom_call.1} parent=5 // pred_fallthru
        _
    $region6: #{tpu_custom_call.1} parent=1 // loop_footer
      %s31 = sadd.s32 1, %s27
    $region7: #{tpu_custom_call.1} parent=1 // loop_footer_branch
      %26 = sbr.rel target = $region3
    $region8: #{tpu_custom_call.1} parent=1 // loop_exit
      _
    %7068 = vsyncpa [#allocation3], 1
    %s7069 = scalar_lea.sflag [#allocation3], 1
    %7070 = vsyncpa %s7069, 1
    %7071 = vsyncpa [#allocation8], 1
    %7072 = vsyncpa [#allocation11], 1
    %7073 = vsyncpa [#allocation14], 1
    %7074 = vsyncpa [#allocation17], 1
    %7075 = vsyncpa [#allocation4], 1
    %s7076 = scalar_lea.sflag [#allocation4], 1
    %7077 = vsyncpa %s7076, 1
    %7078 = vsyncpa [#allocation5], 1
    %s7079 = scalar_lea.sflag [#allocation5], 1
    %7080 = vsyncpa %s7079, 1

</llo_original>
